<compile_context>
chip_gen: v6e
topology: v6e:2x2x1
jax: 0.10.0
libtpu: 0.0.40
codegen_flags: <defaults>
</compile_context>

<pallas_src>
import functools
import math

import jax
import jax.numpy as jnp
from jax.experimental import pallas as pl
from jax.experimental.pallas import tpu as pltpu


# ------------------------------ shared math -----------------------------------

def _layernorm(x, gamma, beta, eps=1e-5):
    mu = jnp.mean(x, axis=-1, keepdims=True)
    xc = x - mu
    var = jnp.mean(xc * xc, axis=-1, keepdims=True)
    return xc * jax.lax.rsqrt(var + eps) * gamma + beta


def _mha_compute(xq2, x_kv, mask, wq, bq, wk, bk, wv, bv, wo, bo, g, be, *, n_head):
    """Multi-head attention + residual + LayerNorm on in-VMEM arrays.

    xq2:  (B*Lq, D) row-folded queries (also the residual input)
    x_kv: (B, Lk, D) keys/values source
    mask: (B, Lq, Lk) with 1 = attend, 0 = masked; or None (no masking)
    Returns (B*Lq, D) float32.
    """
    B, Lk, D = x_kv.shape
    lq = xq2.shape[0] // B
    dk = D // n_head
    scale = 1.0 / math.sqrt(dk)

    # One MXU push for all B*Lq query rows.
    q = jnp.dot(xq2, wq, preferred_element_type=jnp.float32) + bq          # (B*Lq, D)

    blocks = []
    for b in range(B):                       # static unroll over batch (tiny B)
        x_b = x_kv[b]                                                       # (Lk, D)
        k = jnp.dot(x_b, wk, preferred_element_type=jnp.float32) + bk      # (Lk, D)
        v = jnp.dot(x_b, wv, preferred_element_type=jnp.float32) + bv      # (Lk, D)
        qb = q[b * lq:(b + 1) * lq, :]                                      # (Lq, D)
        mb = mask[b] if mask is not None else None                          # (Lq, Lk)

        ob = jnp.zeros((lq, D), jnp.float32)
        for h in range(n_head):              # static unroll over heads
            lo = h * dk
            # Contract on the last dims (MXU consumes the transposed contraction directly).
            s = jax.lax.dot_general(qb[:, lo:lo + dk], k[:, lo:lo + dk],
                                    dimension_numbers=(((1,), (1,)), ((), ())),
                                    preferred_element_type=jnp.float32) * scale   # (Lq, Lk)
            if mb is not None:
                s = jnp.where(mb > 0, s, -1e9)
            s = s - jnp.max(s, axis=-1, keepdims=True)
            p = jnp.exp(s)
            p = p * pl.reciprocal(jnp.sum(p, axis=-1, keepdims=True), approx=True)
            ctx = jnp.dot(p, v[:, lo:lo + dk], preferred_element_type=jnp.float32)  # (Lq, dk)
            # Fold the head back through its slice of W_o; accumulation keeps the output at
            # full lane width (no lane-axis concatenate).
            ob = ob + jnp.dot(ctx, wo[lo:lo + dk, :], preferred_element_type=jnp.float32)
        blocks.append(ob)

    out = jnp.concatenate(blocks, axis=0) if B > 1 else blocks[0]           # (B*Lq, D)
    out = out + bo + xq2                                                    # bias + residual
    return _layernorm(out, g, be)


# ------------------------------ Pallas kernels ---------------------------------

def decoder_layer_kernel(*refs, n_head, use_mask):
    # refs: dec2 (B*Lq,D), enc (B,Lk,D), [src_mask (B,Lq,Lk)],
    #       10 cross-MHA params, 6 FFN params, out (B*Lq,D)
    dec2_ref, enc_ref = refs[0], refs[1]
    i = 2
    if use_mask:
        mask = refs[i][...]
        i += 1
    else:
        mask = None
    (wq, bq, wk, bk, wv, bv, wo, bo, g1, be1,
     w1, b1, w2, b2, g2, be2) = [r[...] for r in refs[i:-1]]
    o_ref = refs[-1]

    xq2 = dec2_ref[...].astype(jnp.float32)
    x_kv = enc_ref[...].astype(jnp.float32)

    # Cross-attention + residual + LayerNorm.
    attn = _mha_compute(xq2, x_kv, mask, wq, bq, wk, bk, wv, bv, wo, bo, g1, be1,
                        n_head=n_head)                                      # (B*Lq, D)

    # Position-wise FFN + residual + LayerNorm, fused in the same kernel.
    h = jnp.maximum(jnp.dot(attn, w1, preferred_element_type=jnp.float32) + b1, 0.0)
    y = jnp.dot(h, w2, preferred_element_type=jnp.float32) + b2
    y = _layernorm(y + attn, g2, be2)
    o_ref[...] = y.astype(o_ref.dtype)


def mha_kernel(*refs, n_head, use_mask):
    # Standalone MHA (only used for the optional "dead" self-attention parity path).
    q2_ref, kv_ref = refs[0], refs[1]
    i = 2
    if use_mask:
        mask = refs[i][...]
        i += 1
    else:
        mask = None
    (wq, bq, wk, bk, wv, bv, wo, bo, g, be) = [r[...] for r in refs[i:-1]]
    o_ref = refs[-1]
    out = _mha_compute(q2_ref[...].astype(jnp.float32), kv_ref[...].astype(jnp.float32),
                       mask, wq, bq, wk, bk, wv, bv, wo, bo, g, be, n_head=n_head)
    o_ref[...] = out.astype(o_ref.dtype)


# ------------------------------ JAX wrappers ------------------------------------

_MHA_KEYS = ("wq", "bq", "wk", "bk", "wv", "bv", "wo", "bo", "ln_g", "ln_b")
_FFN_KEYS = ("w1", "b1", "w2", "b2", "ln_g", "ln_b")


def _vmem_specs(n):
    return [pl.BlockSpec(memory_space=pltpu.MemorySpace.VMEM) for _ in range(n)]


def decoder_layer_pallas(dec_input, enc_output, src_mask, p_cross, p_ffn, n_head):
    B, Lq, D = dec_input.shape
    Lk = enc_output.shape[1]
    use_mask = src_mask is not None
    dec2 = dec_input.reshape(B * Lq, D)          # row-fold outside the kernel (free in XLA)
    args = [dec2, enc_output]
    if use_mask:
        args.append(jnp.broadcast_to(src_mask, (B, Lq, Lk)).astype(jnp.float32))
    args += [p_cross[k] for k in _MHA_KEYS]
    args += [p_ffn[k] for k in _FFN_KEYS]
    out2 = pl.pallas_call(
        functools.partial(decoder_layer_kernel, n_head=n_head, use_mask=use_mask),
        out_shape=jax.ShapeDtypeStruct((B * Lq, D), dec_input.dtype),
        in_specs=_vmem_specs(len(args)),
        out_specs=pl.BlockSpec(memory_space=pltpu.MemorySpace.VMEM),
    )(*args)
    return out2.reshape(B, Lq, D)


def mha_pallas(x_q, x_kv, mask, p, n_head):
    B, Lq, D = x_q.shape
    Lk = x_kv.shape[1]
    use_mask = mask is not None
    args = [x_q.reshape(B * Lq, D), x_kv]
    if use_mask:
        args.append(jnp.broadcast_to(mask, (B, Lq, Lk)).astype(jnp.float32))
    args += [p[k] for k in _MHA_KEYS]
    out2 = pl.pallas_call(
        functools.partial(mha_kernel, n_head=n_head, use_mask=use_mask),
        out_shape=jax.ShapeDtypeStruct((B * Lq, D), x_q.dtype),
        in_specs=_vmem_specs(len(args)),
        out_specs=pl.BlockSpec(memory_space=pltpu.MemorySpace.VMEM),
    )(*args)
    return out2.reshape(B, Lq, D)


def decoder_layer_forward(dec_input, enc_output, tgt_mask, src_mask,
                          p_self, p_cross, p_ffn, n_head,
                          compute_dead_self_attn=False):
    """Matches DecoderLayer.forward. The self-attention output is computed and then discarded
    by the original PyTorch code, so by default we skip it entirely; set
    compute_dead_self_attn=True to also materialize that intermediate (returned as 2nd value)."""
    dec_output = decoder_layer_pallas(dec_input, enc_output, src_mask, p_cross, p_ffn, n_head)
    if compute_dead_self_attn:
        self_out = mha_pallas(dec_input, dec_input, tgt_mask, p_self, n_head)
        return dec_output, self_out
    return dec_output


# ------------------------------ pure-JAX reference -------------------------------

def _mha_ref(x_q, x_kv, mask, p, n_head):
    B, Lq, D = x_q.shape
    Lk = x_kv.shape[1]
    dk = D // n_head
    q = (x_q @ p["wq"] + p["bq"]).reshape(B, Lq, n_head, dk).transpose(0, 2, 1, 3)
    k = (x_kv @ p["wk"] + p["bk"]).reshape(B, Lk, n_head, dk).transpose(0, 2, 1, 3)
    v = (x_kv @ p["wv"] + p["bv"]).reshape(B, Lk, n_head, dk).transpose(0, 2, 1, 3)
    s = jnp.einsum("bhqd,bhkd->bhqk", q, k) / math.sqrt(dk)
    if mask is not None:
        s = jnp.where(mask[:, None] > 0, s, -1e9)
    a = jax.nn.softmax(s, axis=-1)
    ctx = jnp.einsum("bhqk,bhkd->bhqd", a, v).transpose(0, 2, 1, 3).reshape(B, Lq, D)
    out = ctx @ p["wo"] + p["bo"] + x_q
    return _layernorm(out, p["ln_g"], p["ln_b"])


def _ffn_ref(x, p):
    h = jnp.maximum(x @ p["w1"] + p["b1"], 0.0)
    y = h @ p["w2"] + p["b2"] + x
    return _layernorm(y, p["ln_g"], p["ln_b"])


def decoder_layer_ref(dec_input, enc_output, tgt_mask, src_mask, p_self, p_cross, p_ffn, n_head):
    _ = _mha_ref(dec_input, dec_input, tgt_mask, p_self, n_head)   # discarded (PyTorch quirk)
    out = _mha_ref(dec_input, enc_output, src_mask, p_cross, n_head)
    return _ffn_ref(out, p_ffn)


# ------------------------------ param init ---------------------------------------

def init_mha_params(key, d_model):
    ks = jax.random.split(key, 8)
    s = 0.02
    return {
        "wq": s * jax.random.normal(ks[0], (d_model, d_model), jnp.float32),
        "bq": s * jax.random.normal(ks[1], (1, d_model), jnp.float32),
        "wk": s * jax.random.normal(ks[2], (d_model, d_model), jnp.float32),
        "bk": s * jax.random.normal(ks[3], (1, d_model), jnp.float32),
        "wv": s * jax.random.normal(ks[4], (d_model, d_model), jnp.float32),
        "bv": s * jax.random.normal(ks[5], (1, d_model), jnp.float32),
        "wo": s * jax.random.normal(ks[6], (d_model, d_model), jnp.float32),
        "bo": s * jax.random.normal(ks[7], (1, d_model), jnp.float32),
        "ln_g": jnp.ones((1, d_model), jnp.float32),   # PyTorch LayerNorm default init
        "ln_b": jnp.zeros((1, d_model), jnp.float32),
    }


def init_ffn_params(key, d_model, d_hidden):
    ks = jax.random.split(key, 4)
    s = 0.02
    return {
        "w1": s * jax.random.normal(ks[0], (d_model, d_hidden), jnp.float32),
        "b1": s * jax.random.normal(ks[1], (1, d_hidden), jnp.float32),
        "w2": s * jax.random.normal(ks[2], (d_hidden, d_model), jnp.float32),
        "b2": s * jax.random.normal(ks[3], (1, d_model), jnp.float32),
        "ln_g": jnp.ones((1, d_model), jnp.float32),
        "ln_b": jnp.zeros((1, d_model), jnp.float32),
    }


# --------------------------------- main -------------------------------------------

if __name__ == "__main__":
    B, Lq, Lk = 2, 8, 10
    d_model, d_hidden, n_head = 32, 64, 4

    root = jax.random.PRNGKey(0)
    k_in, k_enc, k_self, k_cross, k_ffn = jax.random.split(root, 5)

    dec_input = jax.random.normal(k_in, (B, Lq, d_model), jnp.float32)
    enc_output = jax.random.normal(k_enc, (B, Lk, d_model), jnp.float32)

    # Causal target mask (only consumed by the dead self-attention branch).
    tgt_mask = jnp.broadcast_to(jnp.tril(jnp.ones((Lq, Lq), jnp.float32)), (B, Lq, Lq))
    # Source padding mask: batch element 1 cannot attend to the last 2 encoder positions.
    src_mask = jnp.ones((B, Lq, Lk), jnp.float32).at[1, :, Lk - 2:].set(0.0)

    p_self = init_mha_params(k_self, d_model)
    p_cross = init_mha_params(k_cross, d_model)
    p_ffn = init_ffn_params(k_ffn, d_model, d_hidden)

    # Default (optimized) path: one fused Pallas kernel, dead self-attention skipped.
    out = decoder_layer_forward(dec_input, enc_output, tgt_mask, src_mask,
                                p_self, p_cross, p_ffn, n_head)
    out = jax.block_until_ready(out)
    assert out.shape == (B, Lq, d_model)
    assert bool(jnp.all(jnp.isfinite(out)))

    # Numerical check against a pure-JAX reference of the PyTorch module.
    ref = decoder_layer_ref(dec_input, enc_output, tgt_mask, src_mask,
                            p_self, p_cross, p_ffn, n_head)
    max_err = float(jnp.max(jnp.abs(out - ref)))
    assert max_err < 2e-2, f"kernel vs reference mismatch: {max_err}"

    # Parity path: also materialize the (discarded) self-attention intermediate.
    out2, self_out = decoder_layer_forward(dec_input, enc_output, tgt_mask, src_mask,
                                           p_self, p_cross, p_ffn, n_head,
                                           compute_dead_self_attn=True)
    jax.block_until_ready((out2, self_out))
    self_ref = _mha_ref(dec_input, dec_input, tgt_mask, p_self, n_head)
    assert float(jnp.max(jnp.abs(self_out - self_ref))) < 2e-2
    assert float(jnp.max(jnp.abs(out2 - ref))) < 2e-2

    print("KERNEL_OK")
</pallas_src>

<mosaic_0001>
module attributes {stable_mosaic.version = 11 : i64} {
  func.func @decoder_layer_kernel(%arg0: memref<16x32xf32, #tpu.memory_space<vmem>>, %arg1: memref<2x10x32xf32, #tpu.memory_space<vmem>>, %arg2: memref<2x8x10xf32, #tpu.memory_space<vmem>>, %arg3: memref<32x32xf32, #tpu.memory_space<vmem>>, %arg4: memref<1x32xf32, #tpu.memory_space<vmem>>, %arg5: memref<32x32xf32, #tpu.memory_space<vmem>>, %arg6: memref<1x32xf32, #tpu.memory_space<vmem>>, %arg7: memref<32x32xf32, #tpu.memory_space<vmem>>, %arg8: memref<1x32xf32, #tpu.memory_space<vmem>>, %arg9: memref<32x32xf32, #tpu.memory_space<vmem>>, %arg10: memref<1x32xf32, #tpu.memory_space<vmem>>, %arg11: memref<1x32xf32, #tpu.memory_space<vmem>>, %arg12: memref<1x32xf32, #tpu.memory_space<vmem>>, %arg13: memref<32x64xf32, #tpu.memory_space<vmem>>, %arg14: memref<1x64xf32, #tpu.memory_space<vmem>>, %arg15: memref<64x32xf32, #tpu.memory_space<vmem>>, %arg16: memref<1x32xf32, #tpu.memory_space<vmem>>, %arg17: memref<1x32xf32, #tpu.memory_space<vmem>>, %arg18: memref<1x32xf32, #tpu.memory_space<vmem>>, %arg19: memref<16x32xf32, #tpu.memory_space<vmem>>) attributes {dimension_semantics = [], scalar_prefetch = 0 : i64, scratch_operands = 0 : i64, tpu.core_type = #tpu.core_type<tc>} {
    %c0 = arith.constant 0 : index
    %c0_0 = arith.constant 0 : index
    %c0_1 = arith.constant 0 : index
    %0 = vector.load %arg2[%c0, %c0_0, %c0_1] : memref<2x8x10xf32, #tpu.memory_space<vmem>>, vector<2x8x10xf32>
    %c0_2 = arith.constant 0 : index
    %c0_3 = arith.constant 0 : index
    %1 = vector.load %arg3[%c0_2, %c0_3] : memref<32x32xf32, #tpu.memory_space<vmem>>, vector<32x32xf32>
    %c0_4 = arith.constant 0 : index
    %c0_5 = arith.constant 0 : index
    %2 = vector.load %arg4[%c0_4, %c0_5] : memref<1x32xf32, #tpu.memory_space<vmem>>, vector<1x32xf32>
    %c0_6 = arith.constant 0 : index
    %c0_7 = arith.constant 0 : index
    %3 = vector.load %arg5[%c0_6, %c0_7] : memref<32x32xf32, #tpu.memory_space<vmem>>, vector<32x32xf32>
    %c0_8 = arith.constant 0 : index
    %c0_9 = arith.constant 0 : index
    %4 = vector.load %arg6[%c0_8, %c0_9] : memref<1x32xf32, #tpu.memory_space<vmem>>, vector<1x32xf32>
    %c0_10 = arith.constant 0 : index
    %c0_11 = arith.constant 0 : index
    %5 = vector.load %arg7[%c0_10, %c0_11] : memref<32x32xf32, #tpu.memory_space<vmem>>, vector<32x32xf32>
    %c0_12 = arith.constant 0 : index
    %c0_13 = arith.constant 0 : index
    %6 = vector.load %arg8[%c0_12, %c0_13] : memref<1x32xf32, #tpu.memory_space<vmem>>, vector<1x32xf32>
    %c0_14 = arith.constant 0 : index
    %c0_15 = arith.constant 0 : index
    %7 = vector.load %arg9[%c0_14, %c0_15] : memref<32x32xf32, #tpu.memory_space<vmem>>, vector<32x32xf32>
    %c0_16 = arith.constant 0 : index
    %c0_17 = arith.constant 0 : index
    %8 = vector.load %arg10[%c0_16, %c0_17] : memref<1x32xf32, #tpu.memory_space<vmem>>, vector<1x32xf32>
    %c0_18 = arith.constant 0 : index
    %c0_19 = arith.constant 0 : index
    %9 = vector.load %arg11[%c0_18, %c0_19] : memref<1x32xf32, #tpu.memory_space<vmem>>, vector<1x32xf32>
    %c0_20 = arith.constant 0 : index
    %c0_21 = arith.constant 0 : index
    %10 = vector.load %arg12[%c0_20, %c0_21] : memref<1x32xf32, #tpu.memory_space<vmem>>, vector<1x32xf32>
    %c0_22 = arith.constant 0 : index
    %c0_23 = arith.constant 0 : index
    %11 = vector.load %arg13[%c0_22, %c0_23] : memref<32x64xf32, #tpu.memory_space<vmem>>, vector<32x64xf32>
    %c0_24 = arith.constant 0 : index
    %c0_25 = arith.constant 0 : index
    %12 = vector.load %arg14[%c0_24, %c0_25] : memref<1x64xf32, #tpu.memory_space<vmem>>, vector<1x64xf32>
    %c0_26 = arith.constant 0 : index
    %c0_27 = arith.constant 0 : index
    %13 = vector.load %arg15[%c0_26, %c0_27] : memref<64x32xf32, #tpu.memory_space<vmem>>, vector<64x32xf32>
    %c0_28 = arith.constant 0 : index
    %c0_29 = arith.constant 0 : index
    %14 = vector.load %arg16[%c0_28, %c0_29] : memref<1x32xf32, #tpu.memory_space<vmem>>, vector<1x32xf32>
    %c0_30 = arith.constant 0 : index
    %c0_31 = arith.constant 0 : index
    %15 = vector.load %arg17[%c0_30, %c0_31] : memref<1x32xf32, #tpu.memory_space<vmem>>, vector<1x32xf32>
    %c0_32 = arith.constant 0 : index
    %c0_33 = arith.constant 0 : index
    %16 = vector.load %arg18[%c0_32, %c0_33] : memref<1x32xf32, #tpu.memory_space<vmem>>, vector<1x32xf32>
    %c0_34 = arith.constant 0 : index
    %c0_35 = arith.constant 0 : index
    %17 = vector.load %arg0[%c0_34, %c0_35] : memref<16x32xf32, #tpu.memory_space<vmem>>, vector<16x32xf32>
    %c0_36 = arith.constant 0 : index
    %c0_37 = arith.constant 0 : index
    %c0_38 = arith.constant 0 : index
    %18 = vector.load %arg1[%c0_36, %c0_37, %c0_38] : memref<2x10x32xf32, #tpu.memory_space<vmem>>, vector<2x10x32xf32>
    %cst = arith.constant dense<0.000000e+00> : vector<16x32xf32>
    %19 = tpu.matmul %17, %1, %cst {dimension_numbers = #tpu.dot_dimension_numbers<[1], [0], [0], [1], [0, 0, 1, 1], [], []>} : vector<16x32xf32>, vector<32x32xf32>, vector<16x32xf32> -> vector<16x32xf32>
    %20 = vector.broadcast %2 : vector<1x32xf32> to vector<16x32xf32>
    %21 = arith.addf %19, %20 : vector<16x32xf32>
    %22 = vector.extract_strided_slice %18 {offsets = [0, 0, 0], sizes = [1, 10, 32], strides = [1, 1, 1]} : vector<2x10x32xf32> to vector<1x10x32xf32>
    %23 = vector.shape_cast %22 : vector<1x10x32xf32> to vector<10x32xf32>
    %cst_39 = arith.constant dense<0.000000e+00> : vector<10x32xf32>
    %24 = tpu.matmul %23, %3, %cst_39 {dimension_numbers = #tpu.dot_dimension_numbers<[1], [0], [0], [1], [0, 0, 1, 1], [], []>} : vector<10x32xf32>, vector<32x32xf32>, vector<10x32xf32> -> vector<10x32xf32>
    %25 = vector.broadcast %4 : vector<1x32xf32> to vector<10x32xf32>
    %26 = arith.addf %24, %25 : vector<10x32xf32>
    %cst_40 = arith.constant dense<0.000000e+00> : vector<10x32xf32>
    %27 = tpu.matmul %23, %5, %cst_40 {dimension_numbers = #tpu.dot_dimension_numbers<[1], [0], [0], [1], [0, 0, 1, 1], [], []>} : vector<10x32xf32>, vector<32x32xf32>, vector<10x32xf32> -> vector<10x32xf32>
    %28 = vector.broadcast %6 : vector<1x32xf32> to vector<10x32xf32>
    %29 = arith.addf %27, %28 : vector<10x32xf32>
    %30 = vector.extract_strided_slice %21 {offsets = [0, 0], sizes = [8, 32], strides = [1, 1]} : vector<16x32xf32> to vector<8x32xf32>
    %31 = vector.extract_strided_slice %0 {offsets = [0, 0, 0], sizes = [1, 8, 10], strides = [1, 1, 1]} : vector<2x8x10xf32> to vector<1x8x10xf32>
    %32 = vector.shape_cast %31 : vector<1x8x10xf32> to vector<8x10xf32>
    %cst_41 = arith.constant 0.000000e+00 : f32
    %33 = vector.broadcast %cst_41 : f32 to vector<8x32xf32>
    %34 = vector.extract_strided_slice %30 {offsets = [0, 0], sizes = [8, 8], strides = [1, 1]} : vector<8x32xf32> to vector<8x8xf32>
    %35 = vector.extract_strided_slice %26 {offsets = [0, 0], sizes = [10, 8], strides = [1, 1]} : vector<10x32xf32> to vector<10x8xf32>
    %cst_42 = arith.constant dense<0.000000e+00> : vector<8x10xf32>
    %36 = tpu.matmul %34, %35, %cst_42 {dimension_numbers = #tpu.dot_dimension_numbers<[1], [1], [0], [0], [0, 0, 1, 0], [], []>} : vector<8x8xf32>, vector<10x8xf32>, vector<8x10xf32> -> vector<8x10xf32>
    %cst_43 = arith.constant 0.353553385 : f32
    %37 = vector.broadcast %cst_43 : f32 to vector<8x10xf32>
    %38 = arith.mulf %36, %37 : vector<8x10xf32>
    %cst_44 = arith.constant 0.000000e+00 : f32
    %39 = vector.broadcast %cst_44 : f32 to vector<8x10xf32>
    %40 = arith.cmpf ogt, %32, %39 : vector<8x10xf32>
    %cst_45 = arith.constant -1.000000e+09 : f32
    %41 = vector.broadcast %cst_45 : f32 to vector<8x10xf32>
    %42 = arith.select %40, %38, %41 : vector<8x10xi1>, vector<8x10xf32>
    %cst_46 = arith.constant dense<0xFF800000> : vector<8xf32>
    %43 = vector.multi_reduction <maximumf>, %42, %cst_46 [1] : vector<8x10xf32> to vector<8xf32>
    %44 = vector.shape_cast %43 : vector<8xf32> to vector<8x1xf32>
    %45 = vector.broadcast %44 : vector<8x1xf32> to vector<8x10xf32>
    %46 = arith.subf %42, %45 : vector<8x10xf32>
    %47 = math.exp %46 : vector<8x10xf32>
    %cst_47 = arith.constant dense<0.000000e+00> : vector<8xf32>
    %48 = vector.multi_reduction <add>, %47, %cst_47 [1] : vector<8x10xf32> to vector<8xf32>
    %49 = vector.shape_cast %48 : vector<8xf32> to vector<8x1xf32>
    %50 = tpu.reciprocal %49 {approx = true} : vector<8x1xf32> -> vector<8x1xf32>
    %51 = vector.broadcast %50 : vector<8x1xf32> to vector<8x10xf32>
    %52 = arith.mulf %47, %51 : vector<8x10xf32>
    %53 = vector.extract_strided_slice %29 {offsets = [0, 0], sizes = [10, 8], strides = [1, 1]} : vector<10x32xf32> to vector<10x8xf32>
    %cst_48 = arith.constant dense<0.000000e+00> : vector<8x8xf32>
    %54 = tpu.matmul %52, %53, %cst_48 {dimension_numbers = #tpu.dot_dimension_numbers<[1], [0], [0], [1], [0, 0, 1, 1], [], []>} : vector<8x10xf32>, vector<10x8xf32>, vector<8x8xf32> -> vector<8x8xf32>
    %55 = vector.extract_strided_slice %7 {offsets = [0, 0], sizes = [8, 32], strides = [1, 1]} : vector<32x32xf32> to vector<8x32xf32>
    %cst_49 = arith.constant dense<0.000000e+00> : vector<8x32xf32>
    %56 = tpu.matmul %54, %55, %cst_49 {dimension_numbers = #tpu.dot_dimension_numbers<[1], [0], [0], [1], [0, 0, 1, 1], [], []>} : vector<8x8xf32>, vector<8x32xf32>, vector<8x32xf32> -> vector<8x32xf32>
    %57 = arith.addf %33, %56 : vector<8x32xf32>
    %58 = vector.extract_strided_slice %30 {offsets = [0, 8], sizes = [8, 8], strides = [1, 1]} : vector<8x32xf32> to vector<8x8xf32>
    %59 = vector.extract_strided_slice %26 {offsets = [0, 8], sizes = [10, 8], strides = [1, 1]} : vector<10x32xf32> to vector<10x8xf32>
    %cst_50 = arith.constant dense<0.000000e+00> : vector<8x10xf32>
    %60 = tpu.matmul %58, %59, %cst_50 {dimension_numbers = #tpu.dot_dimension_numbers<[1], [1], [0], [0], [0, 0, 1, 0], [], []>} : vector<8x8xf32>, vector<10x8xf32>, vector<8x10xf32> -> vector<8x10xf32>
    %cst_51 = arith.constant 0.353553385 : f32
    %61 = vector.broadcast %cst_51 : f32 to vector<8x10xf32>
    %62 = arith.mulf %60, %61 : vector<8x10xf32>
    %cst_52 = arith.constant 0.000000e+00 : f32
    %63 = vector.broadcast %cst_52 : f32 to vector<8x10xf32>
    %64 = arith.cmpf ogt, %32, %63 : vector<8x10xf32>
    %cst_53 = arith.constant -1.000000e+09 : f32
    %65 = vector.broadcast %cst_53 : f32 to vector<8x10xf32>
    %66 = arith.select %64, %62, %65 : vector<8x10xi1>, vector<8x10xf32>
    %cst_54 = arith.constant dense<0xFF800000> : vector<8xf32>
    %67 = vector.multi_reduction <maximumf>, %66, %cst_54 [1] : vector<8x10xf32> to vector<8xf32>
    %68 = vector.shape_cast %67 : vector<8xf32> to vector<8x1xf32>
    %69 = vector.broadcast %68 : vector<8x1xf32> to vector<8x10xf32>
    %70 = arith.subf %66, %69 : vector<8x10xf32>
    %71 = math.exp %70 : vector<8x10xf32>
    %cst_55 = arith.constant dense<0.000000e+00> : vector<8xf32>
    %72 = vector.multi_reduction <add>, %71, %cst_55 [1] : vector<8x10xf32> to vector<8xf32>
    %73 = vector.shape_cast %72 : vector<8xf32> to vector<8x1xf32>
    %74 = tpu.reciprocal %73 {approx = true} : vector<8x1xf32> -> vector<8x1xf32>
    %75 = vector.broadcast %74 : vector<8x1xf32> to vector<8x10xf32>
    %76 = arith.mulf %71, %75 : vector<8x10xf32>
    %77 = vector.extract_strided_slice %29 {offsets = [0, 8], sizes = [10, 8], strides = [1, 1]} : vector<10x32xf32> to vector<10x8xf32>
    %cst_56 = arith.constant dense<0.000000e+00> : vector<8x8xf32>
    %78 = tpu.matmul %76, %77, %cst_56 {dimension_numbers = #tpu.dot_dimension_numbers<[1], [0], [0], [1], [0, 0, 1, 1], [], []>} : vector<8x10xf32>, vector<10x8xf32>, vector<8x8xf32> -> vector<8x8xf32>
    %79 = vector.extract_strided_slice %7 {offsets = [8, 0], sizes = [8, 32], strides = [1, 1]} : vector<32x32xf32> to vector<8x32xf32>
    %cst_57 = arith.constant dense<0.000000e+00> : vector<8x32xf32>
    %80 = tpu.matmul %78, %79, %cst_57 {dimension_numbers = #tpu.dot_dimension_numbers<[1], [0], [0], [1], [0, 0, 1, 1], [], []>} : vector<8x8xf32>, vector<8x32xf32>, vector<8x32xf32> -> vector<8x32xf32>
    %81 = arith.addf %57, %80 : vector<8x32xf32>
    %82 = vector.extract_strided_slice %30 {offsets = [0, 16], sizes = [8, 8], strides = [1, 1]} : vector<8x32xf32> to vector<8x8xf32>
    %83 = vector.extract_strided_slice %26 {offsets = [0, 16], sizes = [10, 8], strides = [1, 1]} : vector<10x32xf32> to vector<10x8xf32>
    %cst_58 = arith.constant dense<0.000000e+00> : vector<8x10xf32>
    %84 = tpu.matmul %82, %83, %cst_58 {dimension_numbers = #tpu.dot_dimension_numbers<[1], [1], [0], [0], [0, 0, 1, 0], [], []>} : vector<8x8xf32>, vector<10x8xf32>, vector<8x10xf32> -> vector<8x10xf32>
    %cst_59 = arith.constant 0.353553385 : f32
    %85 = vector.broadcast %cst_59 : f32 to vector<8x10xf32>
    %86 = arith.mulf %84, %85 : vector<8x10xf32>
    %cst_60 = arith.constant 0.000000e+00 : f32
    %87 = vector.broadcast %cst_60 : f32 to vector<8x10xf32>
    %88 = arith.cmpf ogt, %32, %87 : vector<8x10xf32>
    %cst_61 = arith.constant -1.000000e+09 : f32
    %89 = vector.broadcast %cst_61 : f32 to vector<8x10xf32>
    %90 = arith.select %88, %86, %89 : vector<8x10xi1>, vector<8x10xf32>
    %cst_62 = arith.constant dense<0xFF800000> : vector<8xf32>
    %91 = vector.multi_reduction <maximumf>, %90, %cst_62 [1] : vector<8x10xf32> to vector<8xf32>
    %92 = vector.shape_cast %91 : vector<8xf32> to vector<8x1xf32>
    %93 = vector.broadcast %92 : vector<8x1xf32> to vector<8x10xf32>
    %94 = arith.subf %90, %93 : vector<8x10xf32>
    %95 = math.exp %94 : vector<8x10xf32>
    %cst_63 = arith.constant dense<0.000000e+00> : vector<8xf32>
    %96 = vector.multi_reduction <add>, %95, %cst_63 [1] : vector<8x10xf32> to vector<8xf32>
    %97 = vector.shape_cast %96 : vector<8xf32> to vector<8x1xf32>
    %98 = tpu.reciprocal %97 {approx = true} : vector<8x1xf32> -> vector<8x1xf32>
    %99 = vector.broadcast %98 : vector<8x1xf32> to vector<8x10xf32>
    %100 = arith.mulf %95, %99 : vector<8x10xf32>
    %101 = vector.extract_strided_slice %29 {offsets = [0, 16], sizes = [10, 8], strides = [1, 1]} : vector<10x32xf32> to vector<10x8xf32>
    %cst_64 = arith.constant dense<0.000000e+00> : vector<8x8xf32>
    %102 = tpu.matmul %100, %101, %cst_64 {dimension_numbers = #tpu.dot_dimension_numbers<[1], [0], [0], [1], [0, 0, 1, 1], [], []>} : vector<8x10xf32>, vector<10x8xf32>, vector<8x8xf32> -> vector<8x8xf32>
    %103 = vector.extract_strided_slice %7 {offsets = [16, 0], sizes = [8, 32], strides = [1, 1]} : vector<32x32xf32> to vector<8x32xf32>
    %cst_65 = arith.constant dense<0.000000e+00> : vector<8x32xf32>
    %104 = tpu.matmul %102, %103, %cst_65 {dimension_numbers = #tpu.dot_dimension_numbers<[1], [0], [0], [1], [0, 0, 1, 1], [], []>} : vector<8x8xf32>, vector<8x32xf32>, vector<8x32xf32> -> vector<8x32xf32>
    %105 = arith.addf %81, %104 : vector<8x32xf32>
    %106 = vector.extract_strided_slice %30 {offsets = [0, 24], sizes = [8, 8], strides = [1, 1]} : vector<8x32xf32> to vector<8x8xf32>
    %107 = vector.extract_strided_slice %26 {offsets = [0, 24], sizes = [10, 8], strides = [1, 1]} : vector<10x32xf32> to vector<10x8xf32>
    %cst_66 = arith.constant dense<0.000000e+00> : vector<8x10xf32>
    %108 = tpu.matmul %106, %107, %cst_66 {dimension_numbers = #tpu.dot_dimension_numbers<[1], [1], [0], [0], [0, 0, 1, 0], [], []>} : vector<8x8xf32>, vector<10x8xf32>, vector<8x10xf32> -> vector<8x10xf32>
    %cst_67 = arith.constant 0.353553385 : f32
    %109 = vector.broadcast %cst_67 : f32 to vector<8x10xf32>
    %110 = arith.mulf %108, %109 : vector<8x10xf32>
    %cst_68 = arith.constant 0.000000e+00 : f32
    %111 = vector.broadcast %cst_68 : f32 to vector<8x10xf32>
    %112 = arith.cmpf ogt, %32, %111 : vector<8x10xf32>
    %cst_69 = arith.constant -1.000000e+09 : f32
    %113 = vector.broadcast %cst_69 : f32 to vector<8x10xf32>
    %114 = arith.select %112, %110, %113 : vector<8x10xi1>, vector<8x10xf32>
    %cst_70 = arith.constant dense<0xFF800000> : vector<8xf32>
    %115 = vector.multi_reduction <maximumf>, %114, %cst_70 [1] : vector<8x10xf32> to vector<8xf32>
    %116 = vector.shape_cast %115 : vector<8xf32> to vector<8x1xf32>
    %117 = vector.broadcast %116 : vector<8x1xf32> to vector<8x10xf32>
    %118 = arith.subf %114, %117 : vector<8x10xf32>
    %119 = math.exp %118 : vector<8x10xf32>
    %cst_71 = arith.constant dense<0.000000e+00> : vector<8xf32>
    %120 = vector.multi_reduction <add>, %119, %cst_71 [1] : vector<8x10xf32> to vector<8xf32>
    %121 = vector.shape_cast %120 : vector<8xf32> to vector<8x1xf32>
    %122 = tpu.reciprocal %121 {approx = true} : vector<8x1xf32> -> vector<8x1xf32>
    %123 = vector.broadcast %122 : vector<8x1xf32> to vector<8x10xf32>
    %124 = arith.mulf %119, %123 : vector<8x10xf32>
    %125 = vector.extract_strided_slice %29 {offsets = [0, 24], sizes = [10, 8], strides = [1, 1]} : vector<10x32xf32> to vector<10x8xf32>
    %cst_72 = arith.constant dense<0.000000e+00> : vector<8x8xf32>
    %126 = tpu.matmul %124, %125, %cst_72 {dimension_numbers = #tpu.dot_dimension_numbers<[1], [0], [0], [1], [0, 0, 1, 1], [], []>} : vector<8x10xf32>, vector<10x8xf32>, vector<8x8xf32> -> vector<8x8xf32>
    %127 = vector.extract_strided_slice %7 {offsets = [24, 0], sizes = [8, 32], strides = [1, 1]} : vector<32x32xf32> to vector<8x32xf32>
    %cst_73 = arith.constant dense<0.000000e+00> : vector<8x32xf32>
    %128 = tpu.matmul %126, %127, %cst_73 {dimension_numbers = #tpu.dot_dimension_numbers<[1], [0], [0], [1], [0, 0, 1, 1], [], []>} : vector<8x8xf32>, vector<8x32xf32>, vector<8x32xf32> -> vector<8x32xf32>
    %129 = arith.addf %105, %128 : vector<8x32xf32>
    %130 = vector.extract_strided_slice %18 {offsets = [1, 0, 0], sizes = [1, 10, 32], strides = [1, 1, 1]} : vector<2x10x32xf32> to vector<1x10x32xf32>
    %131 = vector.shape_cast %130 : vector<1x10x32xf32> to vector<10x32xf32>
    %cst_74 = arith.constant dense<0.000000e+00> : vector<10x32xf32>
    %132 = tpu.matmul %131, %3, %cst_74 {dimension_numbers = #tpu.dot_dimension_numbers<[1], [0], [0], [1], [0, 0, 1, 1], [], []>} : vector<10x32xf32>, vector<32x32xf32>, vector<10x32xf32> -> vector<10x32xf32>
    %133 = vector.broadcast %4 : vector<1x32xf32> to vector<10x32xf32>
    %134 = arith.addf %132, %133 : vector<10x32xf32>
    %cst_75 = arith.constant dense<0.000000e+00> : vector<10x32xf32>
    %135 = tpu.matmul %131, %5, %cst_75 {dimension_numbers = #tpu.dot_dimension_numbers<[1], [0], [0], [1], [0, 0, 1, 1], [], []>} : vector<10x32xf32>, vector<32x32xf32>, vector<10x32xf32> -> vector<10x32xf32>
    %136 = vector.broadcast %6 : vector<1x32xf32> to vector<10x32xf32>
    %137 = arith.addf %135, %136 : vector<10x32xf32>
    %138 = vector.extract_strided_slice %21 {offsets = [8, 0], sizes = [8, 32], strides = [1, 1]} : vector<16x32xf32> to vector<8x32xf32>
    %139 = vector.extract_strided_slice %0 {offsets = [1, 0, 0], sizes = [1, 8, 10], strides = [1, 1, 1]} : vector<2x8x10xf32> to vector<1x8x10xf32>
    %140 = vector.shape_cast %139 : vector<1x8x10xf32> to vector<8x10xf32>
    %cst_76 = arith.constant 0.000000e+00 : f32
    %141 = vector.broadcast %cst_76 : f32 to vector<8x32xf32>
    %142 = vector.extract_strided_slice %138 {offsets = [0, 0], sizes = [8, 8], strides = [1, 1]} : vector<8x32xf32> to vector<8x8xf32>
    %143 = vector.extract_strided_slice %134 {offsets = [0, 0], sizes = [10, 8], strides = [1, 1]} : vector<10x32xf32> to vector<10x8xf32>
    %cst_77 = arith.constant dense<0.000000e+00> : vector<8x10xf32>
    %144 = tpu.matmul %142, %143, %cst_77 {dimension_numbers = #tpu.dot_dimension_numbers<[1], [1], [0], [0], [0, 0, 1, 0], [], []>} : vector<8x8xf32>, vector<10x8xf32>, vector<8x10xf32> -> vector<8x10xf32>
    %cst_78 = arith.constant 0.353553385 : f32
    %145 = vector.broadcast %cst_78 : f32 to vector<8x10xf32>
    %146 = arith.mulf %144, %145 : vector<8x10xf32>
    %cst_79 = arith.constant 0.000000e+00 : f32
    %147 = vector.broadcast %cst_79 : f32 to vector<8x10xf32>
    %148 = arith.cmpf ogt, %140, %147 : vector<8x10xf32>
    %cst_80 = arith.constant -1.000000e+09 : f32
    %149 = vector.broadcast %cst_80 : f32 to vector<8x10xf32>
    %150 = arith.select %148, %146, %149 : vector<8x10xi1>, vector<8x10xf32>
    %cst_81 = arith.constant dense<0xFF800000> : vector<8xf32>
    %151 = vector.multi_reduction <maximumf>, %150, %cst_81 [1] : vector<8x10xf32> to vector<8xf32>
    %152 = vector.shape_cast %151 : vector<8xf32> to vector<8x1xf32>
    %153 = vector.broadcast %152 : vector<8x1xf32> to vector<8x10xf32>
    %154 = arith.subf %150, %153 : vector<8x10xf32>
    %155 = math.exp %154 : vector<8x10xf32>
    %cst_82 = arith.constant dense<0.000000e+00> : vector<8xf32>
    %156 = vector.multi_reduction <add>, %155, %cst_82 [1] : vector<8x10xf32> to vector<8xf32>
    %157 = vector.shape_cast %156 : vector<8xf32> to vector<8x1xf32>
    %158 = tpu.reciprocal %157 {approx = true} : vector<8x1xf32> -> vector<8x1xf32>
    %159 = vector.broadcast %158 : vector<8x1xf32> to vector<8x10xf32>
    %160 = arith.mulf %155, %159 : vector<8x10xf32>
    %161 = vector.extract_strided_slice %137 {offsets = [0, 0], sizes = [10, 8], strides = [1, 1]} : vector<10x32xf32> to vector<10x8xf32>
    %cst_83 = arith.constant dense<0.000000e+00> : vector<8x8xf32>
    %162 = tpu.matmul %160, %161, %cst_83 {dimension_numbers = #tpu.dot_dimension_numbers<[1], [0], [0], [1], [0, 0, 1, 1], [], []>} : vector<8x10xf32>, vector<10x8xf32>, vector<8x8xf32> -> vector<8x8xf32>
    %163 = vector.extract_strided_slice %7 {offsets = [0, 0], sizes = [8, 32], strides = [1, 1]} : vector<32x32xf32> to vector<8x32xf32>
    %cst_84 = arith.constant dense<0.000000e+00> : vector<8x32xf32>
    %164 = tpu.matmul %162, %163, %cst_84 {dimension_numbers = #tpu.dot_dimension_numbers<[1], [0], [0], [1], [0, 0, 1, 1], [], []>} : vector<8x8xf32>, vector<8x32xf32>, vector<8x32xf32> -> vector<8x32xf32>
    %165 = arith.addf %141, %164 : vector<8x32xf32>
    %166 = vector.extract_strided_slice %138 {offsets = [0, 8], sizes = [8, 8], strides = [1, 1]} : vector<8x32xf32> to vector<8x8xf32>
    %167 = vector.extract_strided_slice %134 {offsets = [0, 8], sizes = [10, 8], strides = [1, 1]} : vector<10x32xf32> to vector<10x8xf32>
    %cst_85 = arith.constant dense<0.000000e+00> : vector<8x10xf32>
    %168 = tpu.matmul %166, %167, %cst_85 {dimension_numbers = #tpu.dot_dimension_numbers<[1], [1], [0], [0], [0, 0, 1, 0], [], []>} : vector<8x8xf32>, vector<10x8xf32>, vector<8x10xf32> -> vector<8x10xf32>
    %cst_86 = arith.constant 0.353553385 : f32
    %169 = vector.broadcast %cst_86 : f32 to vector<8x10xf32>
    %170 = arith.mulf %168, %169 : vector<8x10xf32>
    %cst_87 = arith.constant 0.000000e+00 : f32
    %171 = vector.broadcast %cst_87 : f32 to vector<8x10xf32>
    %172 = arith.cmpf ogt, %140, %171 : vector<8x10xf32>
    %cst_88 = arith.constant -1.000000e+09 : f32
    %173 = vector.broadcast %cst_88 : f32 to vector<8x10xf32>
    %174 = arith.select %172, %170, %173 : vector<8x10xi1>, vector<8x10xf32>
    %cst_89 = arith.constant dense<0xFF800000> : vector<8xf32>
    %175 = vector.multi_reduction <maximumf>, %174, %cst_89 [1] : vector<8x10xf32> to vector<8xf32>
    %176 = vector.shape_cast %175 : vector<8xf32> to vector<8x1xf32>
    %177 = vector.broadcast %176 : vector<8x1xf32> to vector<8x10xf32>
    %178 = arith.subf %174, %177 : vector<8x10xf32>
    %179 = math.exp %178 : vector<8x10xf32>
    %cst_90 = arith.constant dense<0.000000e+00> : vector<8xf32>
    %180 = vector.multi_reduction <add>, %179, %cst_90 [1] : vector<8x10xf32> to vector<8xf32>
    %181 = vector.shape_cast %180 : vector<8xf32> to vector<8x1xf32>
    %182 = tpu.reciprocal %181 {approx = true} : vector<8x1xf32> -> vector<8x1xf32>
    %183 = vector.broadcast %182 : vector<8x1xf32> to vector<8x10xf32>
    %184 = arith.mulf %179, %183 : vector<8x10xf32>
    %185 = vector.extract_strided_slice %137 {offsets = [0, 8], sizes = [10, 8], strides = [1, 1]} : vector<10x32xf32> to vector<10x8xf32>
    %cst_91 = arith.constant dense<0.000000e+00> : vector<8x8xf32>
    %186 = tpu.matmul %184, %185, %cst_91 {dimension_numbers = #tpu.dot_dimension_numbers<[1], [0], [0], [1], [0, 0, 1, 1], [], []>} : vector<8x10xf32>, vector<10x8xf32>, vector<8x8xf32> -> vector<8x8xf32>
    %187 = vector.extract_strided_slice %7 {offsets = [8, 0], sizes = [8, 32], strides = [1, 1]} : vector<32x32xf32> to vector<8x32xf32>
    %cst_92 = arith.constant dense<0.000000e+00> : vector<8x32xf32>
    %188 = tpu.matmul %186, %187, %cst_92 {dimension_numbers = #tpu.dot_dimension_numbers<[1], [0], [0], [1], [0, 0, 1, 1], [], []>} : vector<8x8xf32>, vector<8x32xf32>, vector<8x32xf32> -> vector<8x32xf32>
    %189 = arith.addf %165, %188 : vector<8x32xf32>
    %190 = vector.extract_strided_slice %138 {offsets = [0, 16], sizes = [8, 8], strides = [1, 1]} : vector<8x32xf32> to vector<8x8xf32>
    %191 = vector.extract_strided_slice %134 {offsets = [0, 16], sizes = [10, 8], strides = [1, 1]} : vector<10x32xf32> to vector<10x8xf32>
    %cst_93 = arith.constant dense<0.000000e+00> : vector<8x10xf32>
    %192 = tpu.matmul %190, %191, %cst_93 {dimension_numbers = #tpu.dot_dimension_numbers<[1], [1], [0], [0], [0, 0, 1, 0], [], []>} : vector<8x8xf32>, vector<10x8xf32>, vector<8x10xf32> -> vector<8x10xf32>
    %cst_94 = arith.constant 0.353553385 : f32
    %193 = vector.broadcast %cst_94 : f32 to vector<8x10xf32>
    %194 = arith.mulf %192, %193 : vector<8x10xf32>
    %cst_95 = arith.constant 0.000000e+00 : f32
    %195 = vector.broadcast %cst_95 : f32 to vector<8x10xf32>
    %196 = arith.cmpf ogt, %140, %195 : vector<8x10xf32>
    %cst_96 = arith.constant -1.000000e+09 : f32
    %197 = vector.broadcast %cst_96 : f32 to vector<8x10xf32>
    %198 = arith.select %196, %194, %197 : vector<8x10xi1>, vector<8x10xf32>
    %cst_97 = arith.constant dense<0xFF800000> : vector<8xf32>
    %199 = vector.multi_reduction <maximumf>, %198, %cst_97 [1] : vector<8x10xf32> to vector<8xf32>
    %200 = vector.shape_cast %199 : vector<8xf32> to vector<8x1xf32>
    %201 = vector.broadcast %200 : vector<8x1xf32> to vector<8x10xf32>
    %202 = arith.subf %198, %201 : vector<8x10xf32>
    %203 = math.exp %202 : vector<8x10xf32>
    %cst_98 = arith.constant dense<0.000000e+00> : vector<8xf32>
    %204 = vector.multi_reduction <add>, %203, %cst_98 [1] : vector<8x10xf32> to vector<8xf32>
    %205 = vector.shape_cast %204 : vector<8xf32> to vector<8x1xf32>
    %206 = tpu.reciprocal %205 {approx = true} : vector<8x1xf32> -> vector<8x1xf32>
    %207 = vector.broadcast %206 : vector<8x1xf32> to vector<8x10xf32>
    %208 = arith.mulf %203, %207 : vector<8x10xf32>
    %209 = vector.extract_strided_slice %137 {offsets = [0, 16], sizes = [10, 8], strides = [1, 1]} : vector<10x32xf32> to vector<10x8xf32>
    %cst_99 = arith.constant dense<0.000000e+00> : vector<8x8xf32>
    %210 = tpu.matmul %208, %209, %cst_99 {dimension_numbers = #tpu.dot_dimension_numbers<[1], [0], [0], [1], [0, 0, 1, 1], [], []>} : vector<8x10xf32>, vector<10x8xf32>, vector<8x8xf32> -> vector<8x8xf32>
    %211 = vector.extract_strided_slice %7 {offsets = [16, 0], sizes = [8, 32], strides = [1, 1]} : vector<32x32xf32> to vector<8x32xf32>
    %cst_100 = arith.constant dense<0.000000e+00> : vector<8x32xf32>
    %212 = tpu.matmul %210, %211, %cst_100 {dimension_numbers = #tpu.dot_dimension_numbers<[1], [0], [0], [1], [0, 0, 1, 1], [], []>} : vector<8x8xf32>, vector<8x32xf32>, vector<8x32xf32> -> vector<8x32xf32>
    %213 = arith.addf %189, %212 : vector<8x32xf32>
    %214 = vector.extract_strided_slice %138 {offsets = [0, 24], sizes = [8, 8], strides = [1, 1]} : vector<8x32xf32> to vector<8x8xf32>
    %215 = vector.extract_strided_slice %134 {offsets = [0, 24], sizes = [10, 8], strides = [1, 1]} : vector<10x32xf32> to vector<10x8xf32>
    %cst_101 = arith.constant dense<0.000000e+00> : vector<8x10xf32>
    %216 = tpu.matmul %214, %215, %cst_101 {dimension_numbers = #tpu.dot_dimension_numbers<[1], [1], [0], [0], [0, 0, 1, 0], [], []>} : vector<8x8xf32>, vector<10x8xf32>, vector<8x10xf32> -> vector<8x10xf32>
    %cst_102 = arith.constant 0.353553385 : f32
    %217 = vector.broadcast %cst_102 : f32 to vector<8x10xf32>
    %218 = arith.mulf %216, %217 : vector<8x10xf32>
    %cst_103 = arith.constant 0.000000e+00 : f32
    %219 = vector.broadcast %cst_103 : f32 to vector<8x10xf32>
    %220 = arith.cmpf ogt, %140, %219 : vector<8x10xf32>
    %cst_104 = arith.constant -1.000000e+09 : f32
    %221 = vector.broadcast %cst_104 : f32 to vector<8x10xf32>
    %222 = arith.select %220, %218, %221 : vector<8x10xi1>, vector<8x10xf32>
    %cst_105 = arith.constant dense<0xFF800000> : vector<8xf32>
    %223 = vector.multi_reduction <maximumf>, %222, %cst_105 [1] : vector<8x10xf32> to vector<8xf32>
    %224 = vector.shape_cast %223 : vector<8xf32> to vector<8x1xf32>
    %225 = vector.broadcast %224 : vector<8x1xf32> to vector<8x10xf32>
    %226 = arith.subf %222, %225 : vector<8x10xf32>
    %227 = math.exp %226 : vector<8x10xf32>
    %cst_106 = arith.constant dense<0.000000e+00> : vector<8xf32>
    %228 = vector.multi_reduction <add>, %227, %cst_106 [1] : vector<8x10xf32> to vector<8xf32>
    %229 = vector.shape_cast %228 : vector<8xf32> to vector<8x1xf32>
    %230 = tpu.reciprocal %229 {approx = true} : vector<8x1xf32> -> vector<8x1xf32>
    %231 = vector.broadcast %230 : vector<8x1xf32> to vector<8x10xf32>
    %232 = arith.mulf %227, %231 : vector<8x10xf32>
    %233 = vector.extract_strided_slice %137 {offsets = [0, 24], sizes = [10, 8], strides = [1, 1]} : vector<10x32xf32> to vector<10x8xf32>
    %cst_107 = arith.constant dense<0.000000e+00> : vector<8x8xf32>
    %234 = tpu.matmul %232, %233, %cst_107 {dimension_numbers = #tpu.dot_dimension_numbers<[1], [0], [0], [1], [0, 0, 1, 1], [], []>} : vector<8x10xf32>, vector<10x8xf32>, vector<8x8xf32> -> vector<8x8xf32>
    %235 = vector.extract_strided_slice %7 {offsets = [24, 0], sizes = [8, 32], strides = [1, 1]} : vector<32x32xf32> to vector<8x32xf32>
    %cst_108 = arith.constant dense<0.000000e+00> : vector<8x32xf32>
    %236 = tpu.matmul %234, %235, %cst_108 {dimension_numbers = #tpu.dot_dimension_numbers<[1], [0], [0], [1], [0, 0, 1, 1], [], []>} : vector<8x8xf32>, vector<8x32xf32>, vector<8x32xf32> -> vector<8x32xf32>
    %237 = arith.addf %213, %236 : vector<8x32xf32>
    %238 = tpu.concatenate %129, %237 in 0 : vector<8x32xf32>, vector<8x32xf32> -> vector<16x32xf32>
    %239 = vector.broadcast %8 : vector<1x32xf32> to vector<16x32xf32>
    %240 = arith.addf %238, %239 : vector<16x32xf32>
    %241 = arith.addf %240, %17 : vector<16x32xf32>
    %cst_109 = arith.constant dense<0.000000e+00> : vector<16xf32>
    %242 = vector.multi_reduction <add>, %241, %cst_109 [1] : vector<16x32xf32> to vector<16xf32>
    %243 = vector.shape_cast %242 : vector<16xf32> to vector<16x1xf32>
    %cst_110 = arith.constant 3.200000e+01 : f32
    %244 = vector.broadcast %cst_110 : f32 to vector<16x1xf32>
    %245 = arith.divf %243, %244 : vector<16x1xf32>
    %246 = vector.broadcast %245 : vector<16x1xf32> to vector<16x32xf32>
    %247 = arith.subf %241, %246 : vector<16x32xf32>
    %248 = arith.mulf %247, %247 : vector<16x32xf32>
    %cst_111 = arith.constant dense<0.000000e+00> : vector<16xf32>
    %249 = vector.multi_reduction <add>, %248, %cst_111 [1] : vector<16x32xf32> to vector<16xf32>
    %250 = vector.shape_cast %249 : vector<16xf32> to vector<16x1xf32>
    %cst_112 = arith.constant 3.200000e+01 : f32
    %251 = vector.broadcast %cst_112 : f32 to vector<16x1xf32>
    %252 = arith.divf %250, %251 : vector<16x1xf32>
    %cst_113 = arith.constant 9.99999974E-6 : f32
    %253 = vector.broadcast %cst_113 : f32 to vector<16x1xf32>
    %254 = arith.addf %252, %253 : vector<16x1xf32>
    %255 = math.rsqrt %254 : vector<16x1xf32>
    %256 = vector.broadcast %255 : vector<16x1xf32> to vector<16x32xf32>
    %257 = arith.mulf %247, %256 : vector<16x32xf32>
    %258 = vector.broadcast %9 : vector<1x32xf32> to vector<16x32xf32>
    %259 = arith.mulf %257, %258 : vector<16x32xf32>
    %260 = vector.broadcast %10 : vector<1x32xf32> to vector<16x32xf32>
    %261 = arith.addf %259, %260 : vector<16x32xf32>
    %cst_114 = arith.constant dense<0.000000e+00> : vector<16x64xf32>
    %262 = tpu.matmul %261, %11, %cst_114 {dimension_numbers = #tpu.dot_dimension_numbers<[1], [0], [0], [1], [0, 0, 1, 1], [], []>} : vector<16x32xf32>, vector<32x64xf32>, vector<16x64xf32> -> vector<16x64xf32>
    %263 = vector.broadcast %12 : vector<1x64xf32> to vector<16x64xf32>
    %264 = arith.addf %262, %263 : vector<16x64xf32>
    %cst_115 = arith.constant 0.000000e+00 : f32
    %265 = vector.broadcast %cst_115 : f32 to vector<16x64xf32>
    %266 = arith.maximumf %264, %265 : vector<16x64xf32>
    %cst_116 = arith.constant dense<0.000000e+00> : vector<16x32xf32>
    %267 = tpu.matmul %266, %13, %cst_116 {dimension_numbers = #tpu.dot_dimension_numbers<[1], [0], [0], [1], [0, 0, 1, 1], [], []>} : vector<16x64xf32>, vector<64x32xf32>, vector<16x32xf32> -> vector<16x32xf32>
    %268 = vector.broadcast %14 : vector<1x32xf32> to vector<16x32xf32>
    %269 = arith.addf %267, %268 : vector<16x32xf32>
    %270 = arith.addf %269, %261 : vector<16x32xf32>
    %cst_117 = arith.constant dense<0.000000e+00> : vector<16xf32>
    %271 = vector.multi_reduction <add>, %270, %cst_117 [1] : vector<16x32xf32> to vector<16xf32>
    %272 = vector.shape_cast %271 : vector<16xf32> to vector<16x1xf32>
    %cst_118 = arith.constant 3.200000e+01 : f32
    %273 = vector.broadcast %cst_118 : f32 to vector<16x1xf32>
    %274 = arith.divf %272, %273 : vector<16x1xf32>
    %275 = vector.broadcast %274 : vector<16x1xf32> to vector<16x32xf32>
    %276 = arith.subf %270, %275 : vector<16x32xf32>
    %277 = arith.mulf %276, %276 : vector<16x32xf32>
    %cst_119 = arith.constant dense<0.000000e+00> : vector<16xf32>
    %278 = vector.multi_reduction <add>, %277, %cst_119 [1] : vector<16x32xf32> to vector<16xf32>
    %279 = vector.shape_cast %278 : vector<16xf32> to vector<16x1xf32>
    %cst_120 = arith.constant 3.200000e+01 : f32
    %280 = vector.broadcast %cst_120 : f32 to vector<16x1xf32>
    %281 = arith.divf %279, %280 : vector<16x1xf32>
    %cst_121 = arith.constant 9.99999974E-6 : f32
    %282 = vector.broadcast %cst_121 : f32 to vector<16x1xf32>
    %283 = arith.addf %281, %282 : vector<16x1xf32>
    %284 = math.rsqrt %283 : vector<16x1xf32>
    %285 = vector.broadcast %284 : vector<16x1xf32> to vector<16x32xf32>
    %286 = arith.mulf %276, %285 : vector<16x32xf32>
    %287 = vector.broadcast %15 : vector<1x32xf32> to vector<16x32xf32>
    %288 = arith.mulf %286, %287 : vector<16x32xf32>
    %289 = vector.broadcast %16 : vector<1x32xf32> to vector<16x32xf32>
    %290 = arith.addf %288, %289 : vector<16x32xf32>
    %c0_122 = arith.constant 0 : index
    %c0_123 = arith.constant 0 : index
    %291 = vector.load %arg19[%c0_122, %c0_123] : memref<16x32xf32, #tpu.memory_space<vmem>>, vector<16x32xf32>
    tpu.vector_store %arg19[%c0_122, %c0_123], %290 {strides = array<i32>} : memref<16x32xf32, #tpu.memory_space<vmem>>, vector<16x32xf32>,
    return
  }
}

</mosaic_0001>

<llo_original>
// kernel: tpu_custom_call.1
$region0: #{tpu_custom_call.1}
  #allocation0 [shape = 'u32[]', space=smem, size = 0x4, offset = 0x4, fixed_abs, tag = 'smem constant byte address 0x4 - core index']
  #allocation1 [shape = 'u32[144,128]{1,0:T(1,128)}', space=vmem, size = 0x12000, scoped, tag = 'internal scratch']
  %s0 = inlined_call_operand.hbm [shape: f32[16,32], index: 0, kind: input, shape index: {}]
  %s1 = inlined_call_operand.vmem [shape: f32[2,10,32], index: 1, kind: input, shape index: {}]
  %s2 = inlined_call_operand.hbm [shape: f32[2,8,10], index: 2, kind: input, shape index: {}]
  %s3 = inlined_call_operand.vmem [shape: f32[32,32], index: 3, kind: input, shape index: {}]
  %s4 = inlined_call_operand.hbm [shape: f32[1,32], index: 4, kind: input, shape index: {}]
  %s5 = inlined_call_operand.vmem [shape: f32[32,32], index: 5, kind: input, shape index: {}]
  %s6 = inlined_call_operand.hbm [shape: f32[1,32], index: 6, kind: input, shape index: {}]
  %s7 = inlined_call_operand.vmem [shape: f32[32,32], index: 7, kind: input, shape index: {}]
  %s8 = inlined_call_operand.vmem [shape: f32[1,32], index: 8, kind: input, shape index: {}]
  %s9 = inlined_call_operand.vmem [shape: f32[32,32], index: 9, kind: input, shape index: {}]
  %s10 = inlined_call_operand.vmem [shape: f32[1,32], index: 10, kind: input, shape index: {}]
  %s11 = inlined_call_operand.vmem [shape: f32[1,32], index: 11, kind: input, shape index: {}]
  %s12 = inlined_call_operand.vmem [shape: f32[1,32], index: 12, kind: input, shape index: {}]
  %s13 = inlined_call_operand.hbm [shape: f32[32,64], index: 13, kind: input, shape index: {}]
  %s14 = inlined_call_operand.vmem [shape: f32[1,64], index: 14, kind: input, shape index: {}]
  %s15 = inlined_call_operand.vmem [shape: f32[64,32], index: 15, kind: input, shape index: {}]
  %s16 = inlined_call_operand.vmem [shape: f32[1,32], index: 16, kind: input, shape index: {}]
  %s17 = inlined_call_operand.vmem [shape: f32[1,32], index: 17, kind: input, shape index: {}]
  %s18 = inlined_call_operand.vmem [shape: f32[1,32], index: 18, kind: input, shape index: {}]
  %s19 = inlined_call_operand.hbm [shape: f32[16,32], index: 19, kind: output, shape index: {}]
  %s20 = sld [smem:[#allocation0]]
  $region106: #{tpu_custom_call.1} parent=0
    _
  %s22 = ssub.s32 1, %s20
  %s23 = scalar_select 0, %s22, %s20
  $region1: #{tpu_custom_call.1} parent=0
    #allocation2 [shape = 'u8[8192]{0}', space=vmem, size = 0x2000, scoped, tag = 'input window, operand 0, single buffered']
    #allocation3 [shape = 's32[1]{0}', space=sflag, size = 0x4, scoped, tag = 'scoped memory for tpu_custom_call.1']
    #allocation4 [shape = 's32[1]{0}', space=sflag, size = 0x4, scoped, tag = 'scoped memory for tpu_custom_call.1']
    #allocation5 [shape = 'u8[8192]{0}', space=vmem, size = 0x2000, scoped, tag = 'input window, operand 2, single buffered']
    #allocation6 [shape = 's32[1]{0}', space=sflag, size = 0x4, scoped, tag = 'scoped memory for tpu_custom_call.1']
    #allocation7 [shape = 'u8[512]{0}', space=vmem, size = 0x400, scoped, tag = 'input window, operand 4, single buffered']
    #allocation8 [shape = 'u8[512]{0}', space=vmem, size = 0x400, scoped, tag = 'input window, operand 6, single buffered']
    #allocation9 [shape = 's32[1]{0}', space=sflag, size = 0x4, scoped, tag = 'scoped memory for tpu_custom_call.1']
    #allocation10 [shape = 'u8[16384]{0}', space=vmem, size = 0x4000, scoped, tag = 'input window, operand 13, single buffered']
    #allocation11 [shape = 'u8[8192]{0}', space=vmem, size = 0x2000, scoped, tag = 'output window, operand 0, single buffered']
    %24 = vsyncpa [#allocation3], 0
    %25 = vsyncpa [#allocation6], 0
    %26 = vsyncpa [#allocation9], 0
    %27 = vsyncpa [#allocation4], 0
    // Predicated region
    $region2: #{tpu_custom_call.1} parent=1 // pred_check
      _
    $region3: #{tpu_custom_call.1} parent=1 // pred_check_branch
      %29 = sbr.rel (0) target = $region5
    $region4: #{tpu_custom_call.1} parent=1 // pred_region
      %s31 = ssub.s32 256, 256
      %32 = vsyncadd [#allocation3], %s31
      %s33 = sshll.u32 [#allocation2], 4
      %s34 = int_to_ptr.vmem [resolvable:$true] %s33
      %39 = dma.hbm_to_vmem [thread:$0]  %s0, 256, %s34, [#allocation3], 128, 128, 8
    $region5: #{tpu_custom_call.1} parent=1 // pred_fallthru
      _
    // Predicated region
    $region6: #{tpu_custom_call.1} parent=1 // pred_check
      _
    $region7: #{tpu_custom_call.1} parent=1 // pred_check_branch
      %41 = sbr.rel (0) target = $region9
    $region8: #{tpu_custom_call.1} parent=1 // pred_region
      _
    $region9: #{tpu_custom_call.1} parent=1 // pred_fallthru
      _
    // Predicated region
    $region10: #{tpu_custom_call.1} parent=1 // pred_check
      _
    $region11: #{tpu_custom_call.1} parent=1 // pred_check_branch
      %43 = sbr.rel (0) target = $region13
    $region12: #{tpu_custom_call.1} parent=1 // pred_region
      %s45 = ssub.s32 256, 256
      %46 = vsyncadd [#allocation6], %s45
      %s47 = sshll.u32 [#allocation5], 4
      %s48 = int_to_ptr.vmem [resolvable:$true] %s47
      %53 = dma.hbm_to_vmem [thread:$0]  %s2, 256, %s48, [#allocation6], 128, 128, 8
    $region13: #{tpu_custom_call.1} parent=1 // pred_fallthru
      _
    // Predicated region
    $region14: #{tpu_custom_call.1} parent=1 // pred_check
      _
    $region15: #{tpu_custom_call.1} parent=1 // pred_check_branch
      %55 = sbr.rel (0) target = $region17
    $region16: #{tpu_custom_call.1} parent=1 // pred_region
      _
    $region17: #{tpu_custom_call.1} parent=1 // pred_fallthru
      _
    // Predicated region
    $region18: #{tpu_custom_call.1} parent=1 // pred_check
      _
    $region19: #{tpu_custom_call.1} parent=1 // pred_check_branch
      %57 = sbr.rel (0) target = $region21
    $region20: #{tpu_custom_call.1} parent=1 // pred_region
      %s59 = ssub.s32 16, 16
      %60 = vsyncadd [#allocation6], %s59
      %s62 = sshll.u32 [#allocation7], 4
      %s63 = int_to_ptr.vmem [resolvable:$true] %s62
      %65 = dma.hbm_to_vmem [thread:$0]  %s4, 16, %s63, [#allocation6]
    $region21: #{tpu_custom_call.1} parent=1 // pred_fallthru
      _
    // Predicated region
    $region22: #{tpu_custom_call.1} parent=1 // pred_check
      _
    $region23: #{tpu_custom_call.1} parent=1 // pred_check_branch
      %67 = sbr.rel (0) target = $region25
    $region24: #{tpu_custom_call.1} parent=1 // pred_region
      _
    $region25: #{tpu_custom_call.1} parent=1 // pred_fallthru
      _
    // Predicated region
    $region26: #{tpu_custom_call.1} parent=1 // pred_check
      _
    $region27: #{tpu_custom_call.1} parent=1 // pred_check_branch
      %69 = sbr.rel (0) target = $region29
    $region28: #{tpu_custom_call.1} parent=1 // pred_region
      %s71 = ssub.s32 16, 16
      %72 = vsyncadd [#allocation9], %s71
      %s74 = sshll.u32 [#allocation8], 4
      %s75 = int_to_ptr.vmem [resolvable:$true] %s74
      %77 = dma.hbm_to_vmem [thread:$0]  %s6, 16, %s75, [#allocation9]
    $region29: #{tpu_custom_call.1} parent=1 // pred_fallthru
      _
    // Predicated region
    $region30: #{tpu_custom_call.1} parent=1 // pred_check
      _
    $region31: #{tpu_custom_call.1} parent=1 // pred_check_branch
      %79 = sbr.rel (0) target = $region33
    $region32: #{tpu_custom_call.1} parent=1 // pred_region
      _
    $region33: #{tpu_custom_call.1} parent=1 // pred_fallthru
      _
    // Predicated region
    $region34: #{tpu_custom_call.1} parent=1 // pred_check
      _
    $region35: #{tpu_custom_call.1} parent=1 // pred_check_branch
      %81 = sbr.rel (0) target = $region37
    $region36: #{tpu_custom_call.1} parent=1 // pred_region
      _
    $region37: #{tpu_custom_call.1} parent=1 // pred_fallthru
      _
    // Predicated region
    $region38: #{tpu_custom_call.1} parent=1 // pred_check
      _
    $region39: #{tpu_custom_call.1} parent=1 // pred_check_branch
      %83 = sbr.rel (0) target = $region41
    $region40: #{tpu_custom_call.1} parent=1 // pred_region
      _
    $region41: #{tpu_custom_call.1} parent=1 // pred_fallthru
      _
    // Predicated region
    $region42: #{tpu_custom_call.1} parent=1 // pred_check
      _
    $region43: #{tpu_custom_call.1} parent=1 // pred_check_branch
      %85 = sbr.rel (0) target = $region45
    $region44: #{tpu_custom_call.1} parent=1 // pred_region
      _
    $region45: #{tpu_custom_call.1} parent=1 // pred_fallthru
      _
    // Predicated region
    $region46: #{tpu_custom_call.1} parent=1 // pred_check
      _
    $region47: #{tpu_custom_call.1} parent=1 // pred_check_branch
      %87 = sbr.rel (0) target = $region49
    $region48: #{tpu_custom_call.1} parent=1 // pred_region
      _
    $region49: #{tpu_custom_call.1} parent=1 // pred_fallthru
      _
    // Predicated region
    $region50: #{tpu_custom_call.1} parent=1 // pred_check
      _
    $region51: #{tpu_custom_call.1} parent=1 // pred_check_branch
      %89 = sbr.rel (0) target = $region53
    $region52: #{tpu_custom_call.1} parent=1 // pred_region
      _
    $region53: #{tpu_custom_call.1} parent=1 // pred_fallthru
      _
    // Predicated region
    $region54: #{tpu_custom_call.1} parent=1 // pred_check
      _
    $region55: #{tpu_custom_call.1} parent=1 // pred_check_branch
      %91 = sbr.rel (0) target = $region57
    $region56: #{tpu_custom_call.1} parent=1 // pred_region
      %s93 = ssub.s32 512, 512
      %94 = vsyncadd [#allocation9], %s93
      %s95 = sshll.u32 [#allocation10], 4
      %s96 = int_to_ptr.vmem [resolvable:$true] %s95
      %101 = dma.hbm_to_vmem [thread:$0]  %s13, 512, %s96, [#allocation9], 128, 128, 8
    $region57: #{tpu_custom_call.1} parent=1 // pred_fallthru
      _
    // Predicated region
    $region58: #{tpu_custom_call.1} parent=1 // pred_check
      _
    $region59: #{tpu_custom_call.1} parent=1 // pred_check_branch
      %103 = sbr.rel (0) target = $region61
    $region60: #{tpu_custom_call.1} parent=1 // pred_region
      _
    $region61: #{tpu_custom_call.1} parent=1 // pred_fallthru
      _
    // Predicated region
    $region62: #{tpu_custom_call.1} parent=1 // pred_check
      _
    $region63: #{tpu_custom_call.1} parent=1 // pred_check_branch
      %105 = sbr.rel (0) target = $region65
    $region64: #{tpu_custom_call.1} parent=1 // pred_region
      _
    $region65: #{tpu_custom_call.1} parent=1 // pred_fallthru
      _
    // Predicated region
    $region66: #{tpu_custom_call.1} parent=1 // pred_check
      _
    $region67: #{tpu_custom_call.1} parent=1 // pred_check_branch
      %107 = sbr.rel (0) target = $region69
    $region68: #{tpu_custom_call.1} parent=1 // pred_region
      _
    $region69: #{tpu_custom_call.1} parent=1 // pred_fallthru
      _
    // Predicated region
    $region70: #{tpu_custom_call.1} parent=1 // pred_check
      _
    $region71: #{tpu_custom_call.1} parent=1 // pred_check_branch
      %109 = sbr.rel (0) target = $region73
    $region72: #{tpu_custom_call.1} parent=1 // pred_region
      _
    $region73: #{tpu_custom_call.1} parent=1 // pred_fallthru
      _
    // Predicated region
    $region74: #{tpu_custom_call.1} parent=1 // pred_check
      _
    $region75: #{tpu_custom_call.1} parent=1 // pred_check_branch
      %111 = sbr.rel (0) target = $region77
    $region76: #{tpu_custom_call.1} parent=1 // pred_region
      _
    $region77: #{tpu_custom_call.1} parent=1 // pred_fallthru
      _
    // Predicated region
    $region78: #{tpu_custom_call.1} parent=1 // pred_check
      _
    $region79: #{tpu_custom_call.1} parent=1 // pred_check_branch
      %113 = sbr.rel (0) target = $region81
    $region80: #{tpu_custom_call.1} parent=1 // pred_region
      %114 = dma.done [#allocation3], 256
    $region81: #{tpu_custom_call.1} parent=1 // pred_fallthru
      _
    // Predicated region
    $region82: #{tpu_custom_call.1} parent=1 // pred_check
      _
    $region83: #{tpu_custom_call.1} parent=1 // pred_check_branch
      %116 = sbr.rel (0) target = $region85
    $region84: #{tpu_custom_call.1} parent=1 // pred_region
      %117 = dma.done [#allocation6], 256
    $region85: #{tpu_custom_call.1} parent=1 // pred_fallthru
      _
    // Predicated region
    $region86: #{tpu_custom_call.1} parent=1 // pred_check
      _
    $region87: #{tpu_custom_call.1} parent=1 // pred_check_branch
      %119 = sbr.rel (0) target = $region89
    $region88: #{tpu_custom_call.1} parent=1 // pred_region
      %120 = dma.done [#allocation6], 16
    $region89: #{tpu_custom_call.1} parent=1 // pred_fallthru
      _
    // Predicated region
    $region90: #{tpu_custom_call.1} parent=1 // pred_check
      _
    $region91: #{tpu_custom_call.1} parent=1 // pred_check_branch
      %122 = sbr.rel (0) target = $region93
    $region92: #{tpu_custom_call.1} parent=1 // pred_region
      %123 = dma.done [#allocation9], 16
    $region93: #{tpu_custom_call.1} parent=1 // pred_fallthru
      _
    // Predicated region
    $region94: #{tpu_custom_call.1} parent=1 // pred_check
      _
    $region95: #{tpu_custom_call.1} parent=1 // pred_check_branch
      %125 = sbr.rel (0) target = $region97
    $region96: #{tpu_custom_call.1} parent=1 // pred_region
      %126 = dma.done [#allocation9], 512
    $region97: #{tpu_custom_call.1} parent=1 // pred_fallthru
      _
    %v127 = vld [vmem:[#allocation5] sm:$0xff]
    %v128 = vld [vmem:[#allocation5 + $0x8] sm:$0xff]
    %v129 = vld [vmem:[%s3] sm:$0xff]
    %v130 = vld [vmem:[%s3 + $0x8] sm:$0xff]
    %v131 = vld [vmem:[%s3 + $0x10] sm:$0xff]
    %v132 = vld [vmem:[%s3 + $0x18] sm:$0xff]
    %v133 = vld [vmem:[#allocation7] sm:$0x1]
    %v134 = vld [vmem:[%s5] sm:$0xff]
    %v135 = vld [vmem:[%s5 + $0x8] sm:$0xff]
    %v136 = vld [vmem:[%s5 + $0x10] sm:$0xff]
    %v137 = vld [vmem:[%s5 + $0x18] sm:$0xff]
    %v138 = vld [vmem:[#allocation8] sm:$0x1]
    %v139 = vld [vmem:[%s7] sm:$0xff]
    %v140 = vld [vmem:[%s7 + $0x8] sm:$0xff]
    %v141 = vld [vmem:[%s7 + $0x10] sm:$0xff]
    %v142 = vld [vmem:[%s7 + $0x18] sm:$0xff]
    %v143 = vld [vmem:[%s8] sm:$0x1]
    %v144 = vld [vmem:[%s9] sm:$0xff]
    %v145 = vld [vmem:[%s9 + $0x8] sm:$0xff]
    %v146 = vld [vmem:[%s9 + $0x10] sm:$0xff]
    %v147 = vld [vmem:[%s9 + $0x18] sm:$0xff]
    %v148 = vld [vmem:[%s10] sm:$0x1]
    %v149 = vld [vmem:[%s11] sm:$0x1]
    %v150 = vld [vmem:[%s12] sm:$0x1]
    %v151 = vld [vmem:[#allocation10] sm:$0xff]
    %v152 = vld [vmem:[#allocation10 + $0x8] sm:$0xff]
    %v153 = vld [vmem:[#allocation10 + $0x10] sm:$0xff]
    %v154 = vld [vmem:[#allocation10 + $0x18] sm:$0xff]
    %v155 = vld [vmem:[%s14] sm:$0x1]
    %v156 = vld [vmem:[%s15] sm:$0xff]
    %v157 = vld [vmem:[%s15 + $0x8] sm:$0xff]
    %v158 = vld [vmem:[%s15 + $0x10] sm:$0xff]
    %v159 = vld [vmem:[%s15 + $0x18] sm:$0xff]
    %v160 = vld [vmem:[%s15 + $0x20] sm:$0xff]
    %v161 = vld [vmem:[%s15 + $0x28] sm:$0xff]
    %v162 = vld [vmem:[%s15 + $0x30] sm:$0xff]
    %v163 = vld [vmem:[%s15 + $0x38] sm:$0xff]
    %v164 = vld [vmem:[%s16] sm:$0x1]
    %v165 = vld [vmem:[%s17] sm:$0x1]
    %v166 = vld [vmem:[%s18] sm:$0x1]
    %v167 = vld [vmem:[#allocation2] sm:$0xff]
    %v168 = vld [vmem:[#allocation2 + $0x8] sm:$0xff]
    %v169 = vld [vmem:[%s1] sm:$0xff]
    %v170 = vld [vmem:[%s1 + $0x8] sm:$0x3]
    %v171 = vld [vmem:[%s1 + $0x10] sm:$0xff]
    %v172 = vld [vmem:[%s1 + $0x18] sm:$0x3]
    %v174 = vlaneseq
    %v175 = vshrl.u32 %v174, 7
    %v176 = vsub.s32 0, %v175
    %v177 = vrot.slane %v133, %v176
    %vm179 = vcmask 261120
    %v181 = vsel %vm179, %v167, 0
    %v184 = vsel %vm179, %v168, 0
    %186 = vmatprep.subr.mxu0 0.0
    %187 = vmatpush1.msra.mxu0 0.0
    %188 = vmatprep.subr.mxu0 0.0
    %189 = vmatpush1.msra.mxu0 0.0
    %190 = vmatprep.subr.mxu0 0.0
    %191 = vmatpush1.msra.mxu0 0.0
    %192 = vmatprep.subr.mxu0 0.0
    %193 = vmatpush1.msra.mxu0 0.0
    %194 = vmatprep.subr.mxu0 0.0
    %195 = vmatpush1.msra.mxu0 0.0
    %196 = vmatprep.subr.mxu0 0.0
    %197 = vmatpush1.msra.mxu0 0.0
    %198 = vmatprep.subr.mxu0 0.0
    %199 = vmatpush1.msra.mxu0 0.0
    %200 = vmatprep.subr.mxu0 0.0
    %201 = vmatpush1.msra.mxu0 0.0
    %202 = vmatprep.subr.mxu0 0.0
    %203 = vmatpush1.msra.mxu0 0.0
    %204 = vmatprep.subr.mxu0 0.0
    %205 = vmatpush1.msra.mxu0 0.0
    %206 = vmatprep.subr.mxu0 0.0
    %207 = vmatpush1.msra.mxu0 0.0
    %208 = vmatprep.subr.mxu0 0.0
    %209 = vmatpush1.msra.mxu0 0.0
    %210 = vmatprep.subr.mxu0 0.0
    %211 = vmatpush1.msra.mxu0 %v132
    %212 = vmatprep.subr.mxu0 0.0
    %213 = vmatpush1.msra.mxu0 %v131
    %214 = vmatprep.subr.mxu0 0.0
    %215 = vmatpush1.msra.mxu0 %v130
    %216 = vmatprep.subr.mxu0 0.0
    %217 = vmatpush1.msra.mxu0 %v129
    %218 = vmatprep.subr.mxu0 0.0
    %219 = vmatpush2.msra.mxu0 0.0
    %220 = vmatprep.subr.mxu0 0.0
    %221 = vmatpush2.msra.mxu0 0.0
    %222 = vmatprep.subr.mxu0 0.0
    %223 = vmatpush2.msra.mxu0 0.0
    %224 = vmatprep.subr.mxu0 0.0
    %225 = vmatpush2.msra.mxu0 0.0
    %226 = vmatprep.subr.mxu0 0.0
    %227 = vmatpush2.msra.mxu0 0.0
    %228 = vmatprep.subr.mxu0 0.0
    %229 = vmatpush2.msra.mxu0 0.0
    %230 = vmatprep.subr.mxu0 0.0
    %231 = vmatpush2.msra.mxu0 0.0
    %232 = vmatprep.subr.mxu0 0.0
    %233 = vmatpush2.msra.mxu0 0.0
    %234 = vmatprep.subr.mxu0 0.0
    %235 = vmatpush2.msra.mxu0 0.0
    %236 = vmatprep.subr.mxu0 0.0
    %237 = vmatpush2.msra.mxu0 0.0
    %238 = vmatprep.subr.mxu0 0.0
    %239 = vmatpush2.msra.mxu0 0.0
    %240 = vmatprep.subr.mxu0 0.0
    %241 = vmatpush2.msra.mxu0 0.0
    %242 = vmatprep.subr.mxu0 0.0
    %243 = vmatpush2.msra.mxu0 0.0
    %244 = vmatprep.subr.mxu0 0.0
    %245 = vmatpush2.msra.mxu0 0.0
    %246 = vmatprep.subr.mxu0 0.0
    %247 = vmatpush2.msra.mxu0 0.0
    %248 = vmatprep.subr.mxu0 0.0
    %249 = vmatpush2.msra.mxu0 0.0
    %250 = vmatprep.mubr.f32.mxu0 0.0
    %251 = vmatmul.mubr.f32.gmra.mxu0 %v181
    %v252 = vpop.f32.mrf.mxu0
    %v253 = vadd.f32 %v177, %v252
    %v254 = vpop.f32.mrf.mxu0
    %255 = vmatprep.mubr.f32.mxu0 0.0
    %256 = vmatmul.mubr.f32.gmra.mxu0 %v184
    %v257 = vpop.f32.mrf.mxu0
    %v258 = vadd.f32 %v177, %v257
    %v259 = vpop.f32.mrf.mxu0
    %260 = vdwg.mxu0
    %v262 = vlaneseq
    %v263 = vshrl.u32 %v262, 7
    %v264 = vsub.s32 0, %v263
    %v265 = vrot.slane %v138, %v264
    %v268 = vsel %vm179, %v169, 0
    %v271 = vsel %vm179, %v170, 0
    %273 = vmatprep.subr.mxu0 0.0
    %274 = vmatpush1.msra.mxu0 0.0
    %275 = vmatprep.subr.mxu0 0.0
    %276 = vmatpush1.msra.mxu0 0.0
    %277 = vmatprep.subr.mxu0 0.0
    %278 = vmatpush1.msra.mxu0 0.0
    %279 = vmatprep.subr.mxu0 0.0
    %280 = vmatpush1.msra.mxu0 0.0
    %281 = vmatprep.subr.mxu0 0.0
    %282 = vmatpush1.msra.mxu0 0.0
    %283 = vmatprep.subr.mxu0 0.0
    %284 = vmatpush1.msra.mxu0 0.0
    %285 = vmatprep.subr.mxu0 0.0
    %286 = vmatpush1.msra.mxu0 0.0
    %287 = vmatprep.subr.mxu0 0.0
    %288 = vmatpush1.msra.mxu0 0.0
    %289 = vmatprep.subr.mxu0 0.0
    %290 = vmatpush1.msra.mxu0 0.0
    %291 = vmatprep.subr.mxu0 0.0
    %292 = vmatpush1.msra.mxu0 0.0
    %293 = vmatprep.subr.mxu0 0.0
    %294 = vmatpush1.msra.mxu0 0.0
    %295 = vmatprep.subr.mxu0 0.0
    %296 = vmatpush1.msra.mxu0 0.0
    %297 = vmatprep.subr.mxu0 0.0
    %298 = vmatpush1.msra.mxu0 %v137
    %299 = vmatprep.subr.mxu0 0.0
    %300 = vmatpush1.msra.mxu0 %v136
    %301 = vmatprep.subr.mxu0 0.0
    %302 = vmatpush1.msra.mxu0 %v135
    %303 = vmatprep.subr.mxu0 0.0
    %304 = vmatpush1.msra.mxu0 %v134
    %305 = vmatprep.subr.mxu0 0.0
    %306 = vmatpush2.msra.mxu0 0.0
    %307 = vmatprep.subr.mxu0 0.0
    %308 = vmatpush2.msra.mxu0 0.0
    %309 = vmatprep.subr.mxu0 0.0
    %310 = vmatpush2.msra.mxu0 0.0
    %311 = vmatprep.subr.mxu0 0.0
    %312 = vmatpush2.msra.mxu0 0.0
    %313 = vmatprep.subr.mxu0 0.0
    %314 = vmatpush2.msra.mxu0 0.0
    %315 = vmatprep.subr.mxu0 0.0
    %316 = vmatpush2.msra.mxu0 0.0
    %317 = vmatprep.subr.mxu0 0.0
    %318 = vmatpush2.msra.mxu0 0.0
    %319 = vmatprep.subr.mxu0 0.0
    %320 = vmatpush2.msra.mxu0 0.0
    %321 = vmatprep.subr.mxu0 0.0
    %322 = vmatpush2.msra.mxu0 0.0
    %323 = vmatprep.subr.mxu0 0.0
    %324 = vmatpush2.msra.mxu0 0.0
    %325 = vmatprep.subr.mxu0 0.0
    %326 = vmatpush2.msra.mxu0 0.0
    %327 = vmatprep.subr.mxu0 0.0
    %328 = vmatpush2.msra.mxu0 0.0
    %329 = vmatprep.subr.mxu0 0.0
    %330 = vmatpush2.msra.mxu0 0.0
    %331 = vmatprep.subr.mxu0 0.0
    %332 = vmatpush2.msra.mxu0 0.0
    %333 = vmatprep.subr.mxu0 0.0
    %334 = vmatpush2.msra.mxu0 0.0
    %335 = vmatprep.subr.mxu0 0.0
    %336 = vmatpush2.msra.mxu0 0.0
    %337 = vmatprep.mubr.f32.mxu0 0.0
    %338 = vmatmul.mubr.f32.gmra.mxu0 %v268
    %v339 = vpop.f32.mrf.mxu0
    %v340 = vadd.f32 %v265, %v339
    %v341 = vpop.f32.mrf.mxu0
    %342 = vmatprep.mubr.f32.mxu0 0.0
    %343 = vmatmul.mubr.f32.gmra.mxu0 %v271
    %v344 = vpop.f32.mrf.mxu0
    %v345 = vadd.f32 %v265, %v344
    %v346 = vpop.f32.mrf.mxu0
    %347 = vdwg.mxu0
    %v349 = vlaneseq
    %v350 = vshrl.u32 %v349, 7
    %v351 = vsub.s32 0, %v350
    %v352 = vrot.slane %v143, %v351
    %354 = vmatprep.subr.mxu0 0.0
    %355 = vmatpush1.msra.mxu0 0.0
    %356 = vmatprep.subr.mxu0 0.0
    %357 = vmatpush1.msra.mxu0 0.0
    %358 = vmatprep.subr.mxu0 0.0
    %359 = vmatpush1.msra.mxu0 0.0
    %360 = vmatprep.subr.mxu0 0.0
    %361 = vmatpush1.msra.mxu0 0.0
    %362 = vmatprep.subr.mxu0 0.0
    %363 = vmatpush1.msra.mxu0 0.0
    %364 = vmatprep.subr.mxu0 0.0
    %365 = vmatpush1.msra.mxu0 0.0
    %366 = vmatprep.subr.mxu0 0.0
    %367 = vmatpush1.msra.mxu0 0.0
    %368 = vmatprep.subr.mxu0 0.0
    %369 = vmatpush1.msra.mxu0 0.0
    %370 = vmatprep.subr.mxu0 0.0
    %371 = vmatpush1.msra.mxu0 0.0
    %372 = vmatprep.subr.mxu0 0.0
    %373 = vmatpush1.msra.mxu0 0.0
    %374 = vmatprep.subr.mxu0 0.0
    %375 = vmatpush1.msra.mxu0 0.0
    %376 = vmatprep.subr.mxu0 0.0
    %377 = vmatpush1.msra.mxu0 0.0
    %378 = vmatprep.subr.mxu0 0.0
    %379 = vmatpush1.msra.mxu0 %v142
    %380 = vmatprep.subr.mxu0 0.0
    %381 = vmatpush1.msra.mxu0 %v141
    %382 = vmatprep.subr.mxu0 0.0
    %383 = vmatpush1.msra.mxu0 %v140
    %384 = vmatprep.subr.mxu0 0.0
    %385 = vmatpush1.msra.mxu0 %v139
    %386 = vmatprep.subr.mxu0 0.0
    %387 = vmatpush2.msra.mxu0 0.0
    %388 = vmatprep.subr.mxu0 0.0
    %389 = vmatpush2.msra.mxu0 0.0
    %390 = vmatprep.subr.mxu0 0.0
    %391 = vmatpush2.msra.mxu0 0.0
    %392 = vmatprep.subr.mxu0 0.0
    %393 = vmatpush2.msra.mxu0 0.0
    %394 = vmatprep.subr.mxu0 0.0
    %395 = vmatpush2.msra.mxu0 0.0
    %396 = vmatprep.subr.mxu0 0.0
    %397 = vmatpush2.msra.mxu0 0.0
    %398 = vmatprep.subr.mxu0 0.0
    %399 = vmatpush2.msra.mxu0 0.0
    %400 = vmatprep.subr.mxu0 0.0
    %401 = vmatpush2.msra.mxu0 0.0
    %402 = vmatprep.subr.mxu0 0.0
    %403 = vmatpush2.msra.mxu0 0.0
    %404 = vmatprep.subr.mxu0 0.0
    %405 = vmatpush2.msra.mxu0 0.0
    %406 = vmatprep.subr.mxu0 0.0
    %407 = vmatpush2.msra.mxu0 0.0
    %408 = vmatprep.subr.mxu0 0.0
    %409 = vmatpush2.msra.mxu0 0.0
    %410 = vmatprep.subr.mxu0 0.0
    %411 = vmatpush2.msra.mxu0 0.0
    %412 = vmatprep.subr.mxu0 0.0
    %413 = vmatpush2.msra.mxu0 0.0
    %414 = vmatprep.subr.mxu0 0.0
    %415 = vmatpush2.msra.mxu0 0.0
    %416 = vmatprep.subr.mxu0 0.0
    %417 = vmatpush2.msra.mxu0 0.0
    %418 = vmatprep.mubr.f32.mxu0 0.0
    %419 = vmatmul.mubr.f32.gmra.mxu0 %v268
    %v420 = vpop.f32.mrf.mxu0
    %v421 = vadd.f32 %v352, %v420
    %v422 = vpop.f32.mrf.mxu0
    %423 = vmatprep.mubr.f32.mxu0 0.0
    %424 = vmatmul.mubr.f32.gmra.mxu0 %v271
    %v425 = vpop.f32.mrf.mxu0
    %v426 = vadd.f32 %v352, %v425
    %v427 = vpop.f32.mrf.mxu0
    %428 = vdwg.mxu0
    %vm429 = vcmask 64512
    %v431 = vsel %vm429, %v253, 0
    %v434 = vsel %vm429, %v340, 0
    %v437 = vsel %vm429, %v345, 0
    %439 = vmatprep.subr.mxu0 0.0
    %440 = vmatpush1.xpose.msra.mxu0 0.0
    %441 = vmatprep.subr.mxu0 0.0
    %442 = vmatpush1.xpose.msra.mxu0 0.0
    %443 = vmatprep.subr.mxu0 0.0
    %444 = vmatpush1.xpose.msra.mxu0 0.0
    %445 = vmatprep.subr.mxu0 0.0
    %446 = vmatpush1.xpose.msra.mxu0 0.0
    %447 = vmatprep.subr.mxu0 0.0
    %448 = vmatpush1.xpose.msra.mxu0 0.0
    %449 = vmatprep.subr.mxu0 0.0
    %450 = vmatpush1.xpose.msra.mxu0 0.0
    %451 = vmatprep.subr.mxu0 0.0
    %452 = vmatpush1.xpose.msra.mxu0 0.0
    %453 = vmatprep.subr.mxu0 0.0
    %454 = vmatpush1.xpose.msra.mxu0 0.0
    %455 = vmatprep.subr.mxu0 0.0
    %456 = vmatpush1.xpose.msra.mxu0 0.0
    %457 = vmatprep.subr.mxu0 0.0
    %458 = vmatpush1.xpose.msra.mxu0 0.0
    %459 = vmatprep.subr.mxu0 0.0
    %460 = vmatpush1.xpose.msra.mxu0 0.0
    %461 = vmatprep.subr.mxu0 0.0
    %462 = vmatpush1.xpose.msra.mxu0 0.0
    %463 = vmatprep.subr.mxu0 0.0
    %464 = vmatpush1.xpose.msra.mxu0 0.0
    %465 = vmatprep.subr.mxu0 0.0
    %466 = vmatpush1.xpose.msra.mxu0 0.0
    %467 = vmatprep.subr.mxu0 0.0
    %468 = vmatpush1.xpose.msra.mxu0 %v437
    %469 = vmatprep.subr.mxu0 0.0
    %470 = vmatpush1.xpose.msra.mxu0 %v434
    %471 = vmatprep.subr.mxu0 0.0
    %472 = vmatpush2.xpose.msra.mxu0 0.0
    %473 = vmatprep.subr.mxu0 0.0
    %474 = vmatpush2.xpose.msra.mxu0 0.0
    %475 = vmatprep.subr.mxu0 0.0
    %476 = vmatpush2.xpose.msra.mxu0 0.0
    %477 = vmatprep.subr.mxu0 0.0
    %478 = vmatpush2.xpose.msra.mxu0 0.0
    %479 = vmatprep.subr.mxu0 0.0
    %480 = vmatpush2.xpose.msra.mxu0 0.0
    %481 = vmatprep.subr.mxu0 0.0
    %482 = vmatpush2.xpose.msra.mxu0 0.0
    %483 = vmatprep.subr.mxu0 0.0
    %484 = vmatpush2.xpose.msra.mxu0 0.0
    %485 = vmatprep.subr.mxu0 0.0
    %486 = vmatpush2.xpose.msra.mxu0 0.0
    %487 = vmatprep.subr.mxu0 0.0
    %488 = vmatpush2.xpose.msra.mxu0 0.0
    %489 = vmatprep.subr.mxu0 0.0
    %490 = vmatpush2.xpose.msra.mxu0 0.0
    %491 = vmatprep.subr.mxu0 0.0
    %492 = vmatpush2.xpose.msra.mxu0 0.0
    %493 = vmatprep.subr.mxu0 0.0
    %494 = vmatpush2.xpose.msra.mxu0 0.0
    %495 = vmatprep.subr.mxu0 0.0
    %496 = vmatpush2.xpose.msra.mxu0 0.0
    %497 = vmatprep.subr.mxu0 0.0
    %498 = vmatpush2.xpose.msra.mxu0 0.0
    %499 = vmatprep.subr.mxu0 0.0
    %500 = vmatpush2.xpose.msra.mxu0 0.0
    %501 = vmatprep.subr.mxu0 0.0
    %502 = vmatpush2.xpose.msra.mxu0 0.0
    %503 = vmatprep.mubr.f32.mxu0 0.0
    %504 = vmatmul.mubr.f32.gmra.mxu0 %v431
    %v505 = vpop.f32.mrf.mxu0
    %v506 = vadd.f32 0.0, %v505
    %v507 = vpop.f32.mrf.mxu0
    %508 = vdwg.mxu0
    %v509 = vmul.f32 %v506, 0.35355338
    %vm510 = vcmp.gt.f32.partialorder %v127, 0.0
    %v511 = vsel %vm510, %v509, -1e+09
    %vm512 = vcmask 80896
    %v513 = vsel %vm512, %v511, -inf
    %514 = vmax.xlane.f32.xlu0 %v513
    %v515 = vpop.xlane.xlu0 %514
    %v516 = vsub.f32 %v511, %v515
    %v517 = vmul.f32 %v516, 1.442695
    %v518 = vpow.pop %v517
    %v519 = vsel %vm512, %v518, 0.0
    %520 = vadd.xlane.f32.xlu0 %v519
    %v521 = vpop.xlane.xlu0 %520
    %v522 = vrcp.pop %v521
    %v523 = vmul.f32 %v518, %v522
    %v525 = vsel %vm512, %v523, 0
    %vm527 = vcmask 1041408
    %v529 = vsel %vm527, %v426, 0
    %531 = vmatprep.subr.mxu0 0.0
    %532 = vmatpush1.msra.mxu0 0.0
    %533 = vmatprep.subr.mxu0 0.0
    %534 = vmatpush1.msra.mxu0 0.0
    %535 = vmatprep.subr.mxu0 0.0
    %536 = vmatpush1.msra.mxu0 0.0
    %537 = vmatprep.subr.mxu0 0.0
    %538 = vmatpush1.msra.mxu0 0.0
    %539 = vmatprep.subr.mxu0 0.0
    %540 = vmatpush1.msra.mxu0 0.0
    %541 = vmatprep.subr.mxu0 0.0
    %542 = vmatpush1.msra.mxu0 0.0
    %543 = vmatprep.subr.mxu0 0.0
    %544 = vmatpush1.msra.mxu0 0.0
    %545 = vmatprep.subr.mxu0 0.0
    %546 = vmatpush1.msra.mxu0 0.0
    %547 = vmatprep.subr.mxu0 0.0
    %548 = vmatpush1.msra.mxu0 0.0
    %549 = vmatprep.subr.mxu0 0.0
    %550 = vmatpush1.msra.mxu0 0.0
    %551 = vmatprep.subr.mxu0 0.0
    %552 = vmatpush1.msra.mxu0 0.0
    %553 = vmatprep.subr.mxu0 0.0
    %554 = vmatpush1.msra.mxu0 0.0
    %555 = vmatprep.subr.mxu0 0.0
    %556 = vmatpush1.msra.mxu0 0.0
    %557 = vmatprep.subr.mxu0 0.0
    %558 = vmatpush1.msra.mxu0 0.0
    %559 = vmatprep.subr.mxu0 0.0
    %560 = vmatpush1.msra.mxu0 %v529
    %561 = vmatprep.subr.mxu0 0.0
    %562 = vmatpush1.msra.mxu0 %v421
    %563 = vmatprep.subr.mxu0 0.0
    %564 = vmatpush2.msra.mxu0 0.0
    %565 = vmatprep.subr.mxu0 0.0
    %566 = vmatpush2.msra.mxu0 0.0
    %567 = vmatprep.subr.mxu0 0.0
    %568 = vmatpush2.msra.mxu0 0.0
    %569 = vmatprep.subr.mxu0 0.0
    %570 = vmatpush2.msra.mxu0 0.0
    %571 = vmatprep.subr.mxu0 0.0
    %572 = vmatpush2.msra.mxu0 0.0
    %573 = vmatprep.subr.mxu0 0.0
    %574 = vmatpush2.msra.mxu0 0.0
    %575 = vmatprep.subr.mxu0 0.0
    %576 = vmatpush2.msra.mxu0 0.0
    %577 = vmatprep.subr.mxu0 0.0
    %578 = vmatpush2.msra.mxu0 0.0
    %579 = vmatprep.subr.mxu0 0.0
    %580 = vmatpush2.msra.mxu0 0.0
    %581 = vmatprep.subr.mxu0 0.0
    %582 = vmatpush2.msra.mxu0 0.0
    %583 = vmatprep.subr.mxu0 0.0
    %584 = vmatpush2.msra.mxu0 0.0
    %585 = vmatprep.subr.mxu0 0.0
    %586 = vmatpush2.msra.mxu0 0.0
    %587 = vmatprep.subr.mxu0 0.0
    %588 = vmatpush2.msra.mxu0 0.0
    %589 = vmatprep.subr.mxu0 0.0
    %590 = vmatpush2.msra.mxu0 0.0
    %591 = vmatprep.subr.mxu0 0.0
    %592 = vmatpush2.msra.mxu0 0.0
    %593 = vmatprep.subr.mxu0 0.0
    %594 = vmatpush2.msra.mxu0 0.0
    %595 = vmatprep.mubr.f32.mxu0 0.0
    %596 = vmatmul.mubr.f32.gmra.mxu0 %v525
    %v597 = vpop.f32.mrf.mxu0
    %v598 = vadd.f32 0.0, %v597
    %v599 = vpop.f32.mrf.mxu0
    %600 = vdwg.mxu0
    %601 = vrot.lane.b32.xlu0 %v253, 120
    %v602 = vpop.permute.xlu0 %601
    %603 = vrot.lane.b32.xlu0 %v340, 120
    %v604 = vpop.permute.xlu0 %603
    %605 = vrot.lane.b32.xlu0 %v345, 120
    %v606 = vpop.permute.xlu0 %605
    %v607 = vsel %vm429, %v602, 0
    %v609 = vsel %vm429, %v604, 0
    %v611 = vsel %vm429, %v606, 0
    %613 = vmatprep.subr.mxu0 0.0
    %614 = vmatpush1.xpose.msra.mxu0 0.0
    %615 = vmatprep.subr.mxu0 0.0
    %616 = vmatpush1.xpose.msra.mxu0 0.0
    %617 = vmatprep.subr.mxu0 0.0
    %618 = vmatpush1.xpose.msra.mxu0 0.0
    %619 = vmatprep.subr.mxu0 0.0
    %620 = vmatpush1.xpose.msra.mxu0 0.0
    %621 = vmatprep.subr.mxu0 0.0
    %622 = vmatpush1.xpose.msra.mxu0 0.0
    %623 = vmatprep.subr.mxu0 0.0
    %624 = vmatpush1.xpose.msra.mxu0 0.0
    %625 = vmatprep.subr.mxu0 0.0
    %626 = vmatpush1.xpose.msra.mxu0 0.0
    %627 = vmatprep.subr.mxu0 0.0
    %628 = vmatpush1.xpose.msra.mxu0 0.0
    %629 = vmatprep.subr.mxu0 0.0
    %630 = vmatpush1.xpose.msra.mxu0 0.0
    %631 = vmatprep.subr.mxu0 0.0
    %632 = vmatpush1.xpose.msra.mxu0 0.0
    %633 = vmatprep.subr.mxu0 0.0
    %634 = vmatpush1.xpose.msra.mxu0 0.0
    %635 = vmatprep.subr.mxu0 0.0
    %636 = vmatpush1.xpose.msra.mxu0 0.0
    %637 = vmatprep.subr.mxu0 0.0
    %638 = vmatpush1.xpose.msra.mxu0 0.0
    %639 = vmatprep.subr.mxu0 0.0
    %640 = vmatpush1.xpose.msra.mxu0 0.0
    %641 = vmatprep.subr.mxu0 0.0
    %642 = vmatpush1.xpose.msra.mxu0 %v611
    %643 = vmatprep.subr.mxu0 0.0
    %644 = vmatpush1.xpose.msra.mxu0 %v609
    %645 = vmatprep.subr.mxu0 0.0
    %646 = vmatpush2.xpose.msra.mxu0 0.0
    %647 = vmatprep.subr.mxu0 0.0
    %648 = vmatpush2.xpose.msra.mxu0 0.0
    %649 = vmatprep.subr.mxu0 0.0
    %650 = vmatpush2.xpose.msra.mxu0 0.0
    %651 = vmatprep.subr.mxu0 0.0
    %652 = vmatpush2.xpose.msra.mxu0 0.0
    %653 = vmatprep.subr.mxu0 0.0
    %654 = vmatpush2.xpose.msra.mxu0 0.0
    %655 = vmatprep.subr.mxu0 0.0
    %656 = vmatpush2.xpose.msra.mxu0 0.0
    %657 = vmatprep.subr.mxu0 0.0
    %658 = vmatpush2.xpose.msra.mxu0 0.0
    %659 = vmatprep.subr.mxu0 0.0
    %660 = vmatpush2.xpose.msra.mxu0 0.0
    %661 = vmatprep.subr.mxu0 0.0
    %662 = vmatpush2.xpose.msra.mxu0 0.0
    %663 = vmatprep.subr.mxu0 0.0
    %664 = vmatpush2.xpose.msra.mxu0 0.0
    %665 = vmatprep.subr.mxu0 0.0
    %666 = vmatpush2.xpose.msra.mxu0 0.0
    %667 = vmatprep.subr.mxu0 0.0
    %668 = vmatpush2.xpose.msra.mxu0 0.0
    %669 = vmatprep.subr.mxu0 0.0
    %670 = vmatpush2.xpose.msra.mxu0 0.0
    %671 = vmatprep.subr.mxu0 0.0
    %672 = vmatpush2.xpose.msra.mxu0 0.0
    %673 = vmatprep.subr.mxu0 0.0
    %674 = vmatpush2.xpose.msra.mxu0 0.0
    %675 = vmatprep.subr.mxu0 0.0
    %676 = vmatpush2.xpose.msra.mxu0 0.0
    %677 = vmatprep.mubr.f32.mxu0 0.0
    %678 = vmatmul.mubr.f32.gmra.mxu0 %v607
    %v679 = vpop.f32.mrf.mxu0
    %v680 = vadd.f32 0.0, %v679
    %v681 = vpop.f32.mrf.mxu0
    %682 = vdwg.mxu0
    %v683 = vmul.f32 %v680, 0.35355338
    %v684 = vsel %vm510, %v683, -1e+09
    %v685 = vsel %vm512, %v684, -inf
    %686 = vmax.xlane.f32.xlu0 %v685
    %v687 = vpop.xlane.xlu0 %686
    %v688 = vsub.f32 %v684, %v687
    %v689 = vmul.f32 %v688, 1.442695
    %v690 = vpow.pop %v689
    %v691 = vsel %vm512, %v690, 0.0
    %692 = vadd.xlane.f32.xlu0 %v691
    %v693 = vpop.xlane.xlu0 %692
    %v694 = vrcp.pop %v693
    %v695 = vmul.f32 %v690, %v694
    %697 = vrot.lane.b32.xlu0 %v421, 120
    %v698 = vpop.permute.xlu0 %697
    %699 = vrot.lane.b32.xlu0 %v426, 120
    %v700 = vpop.permute.xlu0 %699
    %v703 = vsel %vm512, %v695, 0
    %v705 = vsel %vm527, %v700, 0
    %707 = vmatprep.subr.mxu0 0.0
    %708 = vmatpush1.msra.mxu0 0.0
    %709 = vmatprep.subr.mxu0 0.0
    %710 = vmatpush1.msra.mxu0 0.0
    %711 = vmatprep.subr.mxu0 0.0
    %712 = vmatpush1.msra.mxu0 0.0
    %713 = vmatprep.subr.mxu0 0.0
    %714 = vmatpush1.msra.mxu0 0.0
    %715 = vmatprep.subr.mxu0 0.0
    %716 = vmatpush1.msra.mxu0 0.0
    %717 = vmatprep.subr.mxu0 0.0
    %718 = vmatpush1.msra.mxu0 0.0
    %719 = vmatprep.subr.mxu0 0.0
    %720 = vmatpush1.msra.mxu0 0.0
    %721 = vmatprep.subr.mxu0 0.0
    %722 = vmatpush1.msra.mxu0 0.0
    %723 = vmatprep.subr.mxu0 0.0
    %724 = vmatpush1.msra.mxu0 0.0
    %725 = vmatprep.subr.mxu0 0.0
    %726 = vmatpush1.msra.mxu0 0.0
    %727 = vmatprep.subr.mxu0 0.0
    %728 = vmatpush1.msra.mxu0 0.0
    %729 = vmatprep.subr.mxu0 0.0
    %730 = vmatpush1.msra.mxu0 0.0
    %731 = vmatprep.subr.mxu0 0.0
    %732 = vmatpush1.msra.mxu0 0.0
    %733 = vmatprep.subr.mxu0 0.0
    %734 = vmatpush1.msra.mxu0 0.0
    %735 = vmatprep.subr.mxu0 0.0
    %736 = vmatpush1.msra.mxu0 %v705
    %737 = vmatprep.subr.mxu0 0.0
    %738 = vmatpush1.msra.mxu0 %v698
    %739 = vmatprep.subr.mxu0 0.0
    %740 = vmatpush2.msra.mxu0 0.0
    %741 = vmatprep.subr.mxu0 0.0
    %742 = vmatpush2.msra.mxu0 0.0
    %743 = vmatprep.subr.mxu0 0.0
    %744 = vmatpush2.msra.mxu0 0.0
    %745 = vmatprep.subr.mxu0 0.0
    %746 = vmatpush2.msra.mxu0 0.0
    %747 = vmatprep.subr.mxu0 0.0
    %748 = vmatpush2.msra.mxu0 0.0
    %749 = vmatprep.subr.mxu0 0.0
    %750 = vmatpush2.msra.mxu0 0.0
    %751 = vmatprep.subr.mxu0 0.0
    %752 = vmatpush2.msra.mxu0 0.0
    %753 = vmatprep.subr.mxu0 0.0
    %754 = vmatpush2.msra.mxu0 0.0
    %755 = vmatprep.subr.mxu0 0.0
    %756 = vmatpush2.msra.mxu0 0.0
    %757 = vmatprep.subr.mxu0 0.0
    %758 = vmatpush2.msra.mxu0 0.0
    %759 = vmatprep.subr.mxu0 0.0
    %760 = vmatpush2.msra.mxu0 0.0
    %761 = vmatprep.subr.mxu0 0.0
    %762 = vmatpush2.msra.mxu0 0.0
    %763 = vmatprep.subr.mxu0 0.0
    %764 = vmatpush2.msra.mxu0 0.0
    %765 = vmatprep.subr.mxu0 0.0
    %766 = vmatpush2.msra.mxu0 0.0
    %767 = vmatprep.subr.mxu0 0.0
    %768 = vmatpush2.msra.mxu0 0.0
    %769 = vmatprep.subr.mxu0 0.0
    %770 = vmatpush2.msra.mxu0 0.0
    %771 = vmatprep.mubr.f32.mxu0 0.0
    %772 = vmatmul.mubr.f32.gmra.mxu0 %v703
    %v773 = vpop.f32.mrf.mxu0
    %v774 = vadd.f32 0.0, %v773
    %v775 = vpop.f32.mrf.mxu0
    %776 = vdwg.mxu0
    %v778 = vsel %vm429, %v774, 0
    %780 = vmatprep.subr.mxu0 0.0
    %781 = vmatpush1.msra.mxu0 0.0
    %782 = vmatprep.subr.mxu0 0.0
    %783 = vmatpush1.msra.mxu0 0.0
    %784 = vmatprep.subr.mxu0 0.0
    %785 = vmatpush1.msra.mxu0 0.0
    %786 = vmatprep.subr.mxu0 0.0
    %787 = vmatpush1.msra.mxu0 0.0
    %788 = vmatprep.subr.mxu0 0.0
    %789 = vmatpush1.msra.mxu0 0.0
    %790 = vmatprep.subr.mxu0 0.0
    %791 = vmatpush1.msra.mxu0 0.0
    %792 = vmatprep.subr.mxu0 0.0
    %793 = vmatpush1.msra.mxu0 0.0
    %794 = vmatprep.subr.mxu0 0.0
    %795 = vmatpush1.msra.mxu0 0.0
    %796 = vmatprep.subr.mxu0 0.0
    %797 = vmatpush1.msra.mxu0 0.0
    %798 = vmatprep.subr.mxu0 0.0
    %799 = vmatpush1.msra.mxu0 0.0
    %800 = vmatprep.subr.mxu0 0.0
    %801 = vmatpush1.msra.mxu0 0.0
    %802 = vmatprep.subr.mxu0 0.0
    %803 = vmatpush1.msra.mxu0 0.0
    %804 = vmatprep.subr.mxu0 0.0
    %805 = vmatpush1.msra.mxu0 0.0
    %806 = vmatprep.subr.mxu0 0.0
    %807 = vmatpush1.msra.mxu0 0.0
    %808 = vmatprep.subr.mxu0 0.0
    %809 = vmatpush1.msra.mxu0 0.0
    %810 = vmatprep.subr.mxu0 0.0
    %811 = vmatpush1.msra.mxu0 %v145
    %812 = vmatprep.subr.mxu0 0.0
    %813 = vmatpush2.msra.mxu0 0.0
    %814 = vmatprep.subr.mxu0 0.0
    %815 = vmatpush2.msra.mxu0 0.0
    %816 = vmatprep.subr.mxu0 0.0
    %817 = vmatpush2.msra.mxu0 0.0
    %818 = vmatprep.subr.mxu0 0.0
    %819 = vmatpush2.msra.mxu0 0.0
    %820 = vmatprep.subr.mxu0 0.0
    %821 = vmatpush2.msra.mxu0 0.0
    %822 = vmatprep.subr.mxu0 0.0
    %823 = vmatpush2.msra.mxu0 0.0
    %824 = vmatprep.subr.mxu0 0.0
    %825 = vmatpush2.msra.mxu0 0.0
    %826 = vmatprep.subr.mxu0 0.0
    %827 = vmatpush2.msra.mxu0 0.0
    %828 = vmatprep.subr.mxu0 0.0
    %829 = vmatpush2.msra.mxu0 0.0
    %830 = vmatprep.subr.mxu0 0.0
    %831 = vmatpush2.msra.mxu0 0.0
    %832 = vmatprep.subr.mxu0 0.0
    %833 = vmatpush2.msra.mxu0 0.0
    %834 = vmatprep.subr.mxu0 0.0
    %835 = vmatpush2.msra.mxu0 0.0
    %836 = vmatprep.subr.mxu0 0.0
    %837 = vmatpush2.msra.mxu0 0.0
    %838 = vmatprep.subr.mxu0 0.0
    %839 = vmatpush2.msra.mxu0 0.0
    %840 = vmatprep.subr.mxu0 0.0
    %841 = vmatpush2.msra.mxu0 0.0
    %842 = vmatprep.subr.mxu0 0.0
    %843 = vmatpush2.msra.mxu0 0.0
    %844 = vmatprep.mubr.f32.mxu0 0.0
    %845 = vmatmul.mubr.f32.gmra.mxu0 %v778
    %v846 = vpop.f32.mrf.mxu0
    %v847 = vadd.f32 0.0, %v846
    %v848 = vpop.f32.mrf.mxu0
    %849 = vdwg.mxu0
    %v851 = vsel %vm429, %v598, 0
    %853 = vmatprep.subr.mxu0 0.0
    %854 = vmatpush1.msra.mxu0 0.0
    %855 = vmatprep.subr.mxu0 0.0
    %856 = vmatpush1.msra.mxu0 0.0
    %857 = vmatprep.subr.mxu0 0.0
    %858 = vmatpush1.msra.mxu0 0.0
    %859 = vmatprep.subr.mxu0 0.0
    %860 = vmatpush1.msra.mxu0 0.0
    %861 = vmatprep.subr.mxu0 0.0
    %862 = vmatpush1.msra.mxu0 0.0
    %863 = vmatprep.subr.mxu0 0.0
    %864 = vmatpush1.msra.mxu0 0.0
    %865 = vmatprep.subr.mxu0 0.0
    %866 = vmatpush1.msra.mxu0 0.0
    %867 = vmatprep.subr.mxu0 0.0
    %868 = vmatpush1.msra.mxu0 0.0
    %869 = vmatprep.subr.mxu0 0.0
    %870 = vmatpush1.msra.mxu0 0.0
    %871 = vmatprep.subr.mxu0 0.0
    %872 = vmatpush1.msra.mxu0 0.0
    %873 = vmatprep.subr.mxu0 0.0
    %874 = vmatpush1.msra.mxu0 0.0
    %875 = vmatprep.subr.mxu0 0.0
    %876 = vmatpush1.msra.mxu0 0.0
    %877 = vmatprep.subr.mxu0 0.0
    %878 = vmatpush1.msra.mxu0 0.0
    %879 = vmatprep.subr.mxu0 0.0
    %880 = vmatpush1.msra.mxu0 0.0
    %881 = vmatprep.subr.mxu0 0.0
    %882 = vmatpush1.msra.mxu0 0.0
    %883 = vmatprep.subr.mxu0 0.0
    %884 = vmatpush1.msra.mxu0 %v144
    %885 = vmatprep.subr.mxu0 0.0
    %886 = vmatpush2.msra.mxu0 0.0
    %887 = vmatprep.subr.mxu0 0.0
    %888 = vmatpush2.msra.mxu0 0.0
    %889 = vmatprep.subr.mxu0 0.0
    %890 = vmatpush2.msra.mxu0 0.0
    %891 = vmatprep.subr.mxu0 0.0
    %892 = vmatpush2.msra.mxu0 0.0
    %893 = vmatprep.subr.mxu0 0.0
    %894 = vmatpush2.msra.mxu0 0.0
    %895 = vmatprep.subr.mxu0 0.0
    %896 = vmatpush2.msra.mxu0 0.0
    %897 = vmatprep.subr.mxu0 0.0
    %898 = vmatpush2.msra.mxu0 0.0
    %899 = vmatprep.subr.mxu0 0.0
    %900 = vmatpush2.msra.mxu0 0.0
    %901 = vmatprep.subr.mxu0 0.0
    %902 = vmatpush2.msra.mxu0 0.0
    %903 = vmatprep.subr.mxu0 0.0
    %904 = vmatpush2.msra.mxu0 0.0
    %905 = vmatprep.subr.mxu0 0.0
    %906 = vmatpush2.msra.mxu0 0.0
    %907 = vmatprep.subr.mxu0 0.0
    %908 = vmatpush2.msra.mxu0 0.0
    %909 = vmatprep.subr.mxu0 0.0
    %910 = vmatpush2.msra.mxu0 0.0
    %911 = vmatprep.subr.mxu0 0.0
    %912 = vmatpush2.msra.mxu0 0.0
    %913 = vmatprep.subr.mxu0 0.0
    %914 = vmatpush2.msra.mxu0 0.0
    %915 = vmatprep.subr.mxu0 0.0
    %916 = vmatpush2.msra.mxu0 0.0
    %917 = vmatprep.mubr.f32.mxu0 0.0
    %918 = vmatmul.mubr.f32.gmra.mxu0 %v851
    %v919 = vpop.f32.mrf.mxu0
    %v920 = vadd.f32 %v847, %v919
    %v921 = vpop.f32.mrf.mxu0
    %922 = vdwg.mxu0
    %923 = vrot.lane.b32.xlu0 %v253, 112
    %v924 = vpop.permute.xlu0 %923
    %925 = vrot.lane.b32.xlu0 %v340, 112
    %v926 = vpop.permute.xlu0 %925
    %927 = vrot.lane.b32.xlu0 %v345, 112
    %v928 = vpop.permute.xlu0 %927
    %v929 = vsel %vm429, %v924, 0
    %v931 = vsel %vm429, %v926, 0
    %v933 = vsel %vm429, %v928, 0
    %935 = vmatprep.subr.mxu0 0.0
    %936 = vmatpush1.xpose.msra.mxu0 0.0
    %937 = vmatprep.subr.mxu0 0.0
    %938 = vmatpush1.xpose.msra.mxu0 0.0
    %939 = vmatprep.subr.mxu0 0.0
    %940 = vmatpush1.xpose.msra.mxu0 0.0
    %941 = vmatprep.subr.mxu0 0.0
    %942 = vmatpush1.xpose.msra.mxu0 0.0
    %943 = vmatprep.subr.mxu0 0.0
    %944 = vmatpush1.xpose.msra.mxu0 0.0
    %945 = vmatprep.subr.mxu0 0.0
    %946 = vmatpush1.xpose.msra.mxu0 0.0
    %947 = vmatprep.subr.mxu0 0.0
    %948 = vmatpush1.xpose.msra.mxu0 0.0
    %949 = vmatprep.subr.mxu0 0.0
    %950 = vmatpush1.xpose.msra.mxu0 0.0
    %951 = vmatprep.subr.mxu0 0.0
    %952 = vmatpush1.xpose.msra.mxu0 0.0
    %953 = vmatprep.subr.mxu0 0.0
    %954 = vmatpush1.xpose.msra.mxu0 0.0
    %955 = vmatprep.subr.mxu0 0.0
    %956 = vmatpush1.xpose.msra.mxu0 0.0
    %957 = vmatprep.subr.mxu0 0.0
    %958 = vmatpush1.xpose.msra.mxu0 0.0
    %959 = vmatprep.subr.mxu0 0.0
    %960 = vmatpush1.xpose.msra.mxu0 0.0
    %961 = vmatprep.subr.mxu0 0.0
    %962 = vmatpush1.xpose.msra.mxu0 0.0
    %963 = vmatprep.subr.mxu0 0.0
    %964 = vmatpush1.xpose.msra.mxu0 %v933
    %965 = vmatprep.subr.mxu0 0.0
    %966 = vmatpush1.xpose.msra.mxu0 %v931
    %967 = vmatprep.subr.mxu0 0.0
    %968 = vmatpush2.xpose.msra.mxu0 0.0
    %969 = vmatprep.subr.mxu0 0.0
    %970 = vmatpush2.xpose.msra.mxu0 0.0
    %971 = vmatprep.subr.mxu0 0.0
    %972 = vmatpush2.xpose.msra.mxu0 0.0
    %973 = vmatprep.subr.mxu0 0.0
    %974 = vmatpush2.xpose.msra.mxu0 0.0
    %975 = vmatprep.subr.mxu0 0.0
    %976 = vmatpush2.xpose.msra.mxu0 0.0
    %977 = vmatprep.subr.mxu0 0.0
    %978 = vmatpush2.xpose.msra.mxu0 0.0
    %979 = vmatprep.subr.mxu0 0.0
    %980 = vmatpush2.xpose.msra.mxu0 0.0
    %981 = vmatprep.subr.mxu0 0.0
    %982 = vmatpush2.xpose.msra.mxu0 0.0
    %983 = vmatprep.subr.mxu0 0.0
    %984 = vmatpush2.xpose.msra.mxu0 0.0
    %985 = vmatprep.subr.mxu0 0.0
    %986 = vmatpush2.xpose.msra.mxu0 0.0
    %987 = vmatprep.subr.mxu0 0.0
    %988 = vmatpush2.xpose.msra.mxu0 0.0
    %989 = vmatprep.subr.mxu0 0.0
    %990 = vmatpush2.xpose.msra.mxu0 0.0
    %991 = vmatprep.subr.mxu0 0.0
    %992 = vmatpush2.xpose.msra.mxu0 0.0
    %993 = vmatprep.subr.mxu0 0.0
    %994 = vmatpush2.xpose.msra.mxu0 0.0
    %995 = vmatprep.subr.mxu0 0.0
    %996 = vmatpush2.xpose.msra.mxu0 0.0
    %997 = vmatprep.subr.mxu0 0.0
    %998 = vmatpush2.xpose.msra.mxu0 0.0
    %999 = vmatprep.mubr.f32.mxu0 0.0
    %1000 = vmatmul.mubr.f32.gmra.mxu0 %v929
    %v1001 = vpop.f32.mrf.mxu0
    %v1002 = vadd.f32 0.0, %v1001
    %v1003 = vpop.f32.mrf.mxu0
    %1004 = vdwg.mxu0
    %v1005 = vmul.f32 %v1002, 0.35355338
    %v1006 = vsel %vm510, %v1005, -1e+09
    %v1007 = vsel %vm512, %v1006, -inf
    %1008 = vmax.xlane.f32.xlu0 %v1007
    %v1009 = vpop.xlane.xlu0 %1008
    %v1010 = vsub.f32 %v1006, %v1009
    %v1011 = vmul.f32 %v1010, 1.442695
    %v1012 = vpow.pop %v1011
    %v1013 = vsel %vm512, %v1012, 0.0
    %1014 = vadd.xlane.f32.xlu0 %v1013
    %v1015 = vpop.xlane.xlu0 %1014
    %v1016 = vrcp.pop %v1015
    %v1017 = vmul.f32 %v1012, %v1016
    %1018 = vrot.lane.b32.xlu0 %v421, 112
    %v1019 = vpop.permute.xlu0 %1018
    %1020 = vrot.lane.b32.xlu0 %v426, 112
    %v1021 = vpop.permute.xlu0 %1020
    %v1024 = vsel %vm512, %v1017, 0
    %v1026 = vsel %vm527, %v1021, 0
    %1028 = vmatprep.subr.mxu0 0.0
    %1029 = vmatpush1.msra.mxu0 0.0
    %1030 = vmatprep.subr.mxu0 0.0
    %1031 = vmatpush1.msra.mxu0 0.0
    %1032 = vmatprep.subr.mxu0 0.0
    %1033 = vmatpush1.msra.mxu0 0.0
    %1034 = vmatprep.subr.mxu0 0.0
    %1035 = vmatpush1.msra.mxu0 0.0
    %1036 = vmatprep.subr.mxu0 0.0
    %1037 = vmatpush1.msra.mxu0 0.0
    %1038 = vmatprep.subr.mxu0 0.0
    %1039 = vmatpush1.msra.mxu0 0.0
    %1040 = vmatprep.subr.mxu0 0.0
    %1041 = vmatpush1.msra.mxu0 0.0
    %1042 = vmatprep.subr.mxu0 0.0
    %1043 = vmatpush1.msra.mxu0 0.0
    %1044 = vmatprep.subr.mxu0 0.0
    %1045 = vmatpush1.msra.mxu0 0.0
    %1046 = vmatprep.subr.mxu0 0.0
    %1047 = vmatpush1.msra.mxu0 0.0
    %1048 = vmatprep.subr.mxu0 0.0
    %1049 = vmatpush1.msra.mxu0 0.0
    %1050 = vmatprep.subr.mxu0 0.0
    %1051 = vmatpush1.msra.mxu0 0.0
    %1052 = vmatprep.subr.mxu0 0.0
    %1053 = vmatpush1.msra.mxu0 0.0
    %1054 = vmatprep.subr.mxu0 0.0
    %1055 = vmatpush1.msra.mxu0 0.0
    %1056 = vmatprep.subr.mxu0 0.0
    %1057 = vmatpush1.msra.mxu0 %v1026
    %1058 = vmatprep.subr.mxu0 0.0
    %1059 = vmatpush1.msra.mxu0 %v1019
    %1060 = vmatprep.subr.mxu0 0.0
    %1061 = vmatpush2.msra.mxu0 0.0
    %1062 = vmatprep.subr.mxu0 0.0
    %1063 = vmatpush2.msra.mxu0 0.0
    %1064 = vmatprep.subr.mxu0 0.0
    %1065 = vmatpush2.msra.mxu0 0.0
    %1066 = vmatprep.subr.mxu0 0.0
    %1067 = vmatpush2.msra.mxu0 0.0
    %1068 = vmatprep.subr.mxu0 0.0
    %1069 = vmatpush2.msra.mxu0 0.0
    %1070 = vmatprep.subr.mxu0 0.0
    %1071 = vmatpush2.msra.mxu0 0.0
    %1072 = vmatprep.subr.mxu0 0.0
    %1073 = vmatpush2.msra.mxu0 0.0
    %1074 = vmatprep.subr.mxu0 0.0
    %1075 = vmatpush2.msra.mxu0 0.0
    %1076 = vmatprep.subr.mxu0 0.0
    %1077 = vmatpush2.msra.mxu0 0.0
    %1078 = vmatprep.subr.mxu0 0.0
    %1079 = vmatpush2.msra.mxu0 0.0
    %1080 = vmatprep.subr.mxu0 0.0
    %1081 = vmatpush2.msra.mxu0 0.0
    %1082 = vmatprep.subr.mxu0 0.0
    %1083 = vmatpush2.msra.mxu0 0.0
    %1084 = vmatprep.subr.mxu0 0.0
    %1085 = vmatpush2.msra.mxu0 0.0
    %1086 = vmatprep.subr.mxu0 0.0
    %1087 = vmatpush2.msra.mxu0 0.0
    %1088 = vmatprep.subr.mxu0 0.0
    %1089 = vmatpush2.msra.mxu0 0.0
    %1090 = vmatprep.subr.mxu0 0.0
    %1091 = vmatpush2.msra.mxu0 0.0
    %1092 = vmatprep.mubr.f32.mxu0 0.0
    %1093 = vmatmul.mubr.f32.gmra.mxu0 %v1024
    %v1094 = vpop.f32.mrf.mxu0
    %v1095 = vadd.f32 0.0, %v1094
    %v1096 = vpop.f32.mrf.mxu0
    %1097 = vdwg.mxu0
    %v1099 = vsel %vm429, %v1095, 0
    %1101 = vmatprep.subr.mxu0 0.0
    %1102 = vmatpush1.msra.mxu0 0.0
    %1103 = vmatprep.subr.mxu0 0.0
    %1104 = vmatpush1.msra.mxu0 0.0
    %1105 = vmatprep.subr.mxu0 0.0
    %1106 = vmatpush1.msra.mxu0 0.0
    %1107 = vmatprep.subr.mxu0 0.0
    %1108 = vmatpush1.msra.mxu0 0.0
    %1109 = vmatprep.subr.mxu0 0.0
    %1110 = vmatpush1.msra.mxu0 0.0
    %1111 = vmatprep.subr.mxu0 0.0
    %1112 = vmatpush1.msra.mxu0 0.0
    %1113 = vmatprep.subr.mxu0 0.0
    %1114 = vmatpush1.msra.mxu0 0.0
    %1115 = vmatprep.subr.mxu0 0.0
    %1116 = vmatpush1.msra.mxu0 0.0
    %1117 = vmatprep.subr.mxu0 0.0
    %1118 = vmatpush1.msra.mxu0 0.0
    %1119 = vmatprep.subr.mxu0 0.0
    %1120 = vmatpush1.msra.mxu0 0.0
    %1121 = vmatprep.subr.mxu0 0.0
    %1122 = vmatpush1.msra.mxu0 0.0
    %1123 = vmatprep.subr.mxu0 0.0
    %1124 = vmatpush1.msra.mxu0 0.0
    %1125 = vmatprep.subr.mxu0 0.0
    %1126 = vmatpush1.msra.mxu0 0.0
    %1127 = vmatprep.subr.mxu0 0.0
    %1128 = vmatpush1.msra.mxu0 0.0
    %1129 = vmatprep.subr.mxu0 0.0
    %1130 = vmatpush1.msra.mxu0 0.0
    %1131 = vmatprep.subr.mxu0 0.0
    %1132 = vmatpush1.msra.mxu0 %v146
    %1133 = vmatprep.subr.mxu0 0.0
    %1134 = vmatpush2.msra.mxu0 0.0
    %1135 = vmatprep.subr.mxu0 0.0
    %1136 = vmatpush2.msra.mxu0 0.0
    %1137 = vmatprep.subr.mxu0 0.0
    %1138 = vmatpush2.msra.mxu0 0.0
    %1139 = vmatprep.subr.mxu0 0.0
    %1140 = vmatpush2.msra.mxu0 0.0
    %1141 = vmatprep.subr.mxu0 0.0
    %1142 = vmatpush2.msra.mxu0 0.0
    %1143 = vmatprep.subr.mxu0 0.0
    %1144 = vmatpush2.msra.mxu0 0.0
    %1145 = vmatprep.subr.mxu0 0.0
    %1146 = vmatpush2.msra.mxu0 0.0
    %1147 = vmatprep.subr.mxu0 0.0
    %1148 = vmatpush2.msra.mxu0 0.0
    %1149 = vmatprep.subr.mxu0 0.0
    %1150 = vmatpush2.msra.mxu0 0.0
    %1151 = vmatprep.subr.mxu0 0.0
    %1152 = vmatpush2.msra.mxu0 0.0
    %1153 = vmatprep.subr.mxu0 0.0
    %1154 = vmatpush2.msra.mxu0 0.0
    %1155 = vmatprep.subr.mxu0 0.0
    %1156 = vmatpush2.msra.mxu0 0.0
    %1157 = vmatprep.subr.mxu0 0.0
    %1158 = vmatpush2.msra.mxu0 0.0
    %1159 = vmatprep.subr.mxu0 0.0
    %1160 = vmatpush2.msra.mxu0 0.0
    %1161 = vmatprep.subr.mxu0 0.0
    %1162 = vmatpush2.msra.mxu0 0.0
    %1163 = vmatprep.subr.mxu0 0.0
    %1164 = vmatpush2.msra.mxu0 0.0
    %1165 = vmatprep.mubr.f32.mxu0 0.0
    %1166 = vmatmul.mubr.f32.gmra.mxu0 %v1099
    %v1167 = vpop.f32.mrf.mxu0
    %v1168 = vadd.f32 0.0, %v1167
    %v1169 = vpop.f32.mrf.mxu0
    %1170 = vdwg.mxu0
    %v1171 = vadd.f32 %v920, %v1168
    %1172 = vrot.lane.b32.xlu0 %v253, 104
    %v1173 = vpop.permute.xlu0 %1172
    %1174 = vrot.lane.b32.xlu0 %v340, 104
    %v1175 = vpop.permute.xlu0 %1174
    %1176 = vrot.lane.b32.xlu0 %v345, 104
    %v1177 = vpop.permute.xlu0 %1176
    %v1178 = vsel %vm429, %v1173, 0
    %v1180 = vsel %vm429, %v1175, 0
    %v1182 = vsel %vm429, %v1177, 0
    %1184 = vmatprep.subr.mxu0 0.0
    %1185 = vmatpush1.xpose.msra.mxu0 0.0
    %1186 = vmatprep.subr.mxu0 0.0
    %1187 = vmatpush1.xpose.msra.mxu0 0.0
    %1188 = vmatprep.subr.mxu0 0.0
    %1189 = vmatpush1.xpose.msra.mxu0 0.0
    %1190 = vmatprep.subr.mxu0 0.0
    %1191 = vmatpush1.xpose.msra.mxu0 0.0
    %1192 = vmatprep.subr.mxu0 0.0
    %1193 = vmatpush1.xpose.msra.mxu0 0.0
    %1194 = vmatprep.subr.mxu0 0.0
    %1195 = vmatpush1.xpose.msra.mxu0 0.0
    %1196 = vmatprep.subr.mxu0 0.0
    %1197 = vmatpush1.xpose.msra.mxu0 0.0
    %1198 = vmatprep.subr.mxu0 0.0
    %1199 = vmatpush1.xpose.msra.mxu0 0.0
    %1200 = vmatprep.subr.mxu0 0.0
    %1201 = vmatpush1.xpose.msra.mxu0 0.0
    %1202 = vmatprep.subr.mxu0 0.0
    %1203 = vmatpush1.xpose.msra.mxu0 0.0
    %1204 = vmatprep.subr.mxu0 0.0
    %1205 = vmatpush1.xpose.msra.mxu0 0.0
    %1206 = vmatprep.subr.mxu0 0.0
    %1207 = vmatpush1.xpose.msra.mxu0 0.0
    %1208 = vmatprep.subr.mxu0 0.0
    %1209 = vmatpush1.xpose.msra.mxu0 0.0
    %1210 = vmatprep.subr.mxu0 0.0
    %1211 = vmatpush1.xpose.msra.mxu0 0.0
    %1212 = vmatprep.subr.mxu0 0.0
    %1213 = vmatpush1.xpose.msra.mxu0 %v1182
    %1214 = vmatprep.subr.mxu0 0.0
    %1215 = vmatpush1.xpose.msra.mxu0 %v1180
    %1216 = vmatprep.subr.mxu0 0.0
    %1217 = vmatpush2.xpose.msra.mxu0 0.0
    %1218 = vmatprep.subr.mxu0 0.0
    %1219 = vmatpush2.xpose.msra.mxu0 0.0
    %1220 = vmatprep.subr.mxu0 0.0
    %1221 = vmatpush2.xpose.msra.mxu0 0.0
    %1222 = vmatprep.subr.mxu0 0.0
    %1223 = vmatpush2.xpose.msra.mxu0 0.0
    %1224 = vmatprep.subr.mxu0 0.0
    %1225 = vmatpush2.xpose.msra.mxu0 0.0
    %1226 = vmatprep.subr.mxu0 0.0
    %1227 = vmatpush2.xpose.msra.mxu0 0.0
    %1228 = vmatprep.subr.mxu0 0.0
    %1229 = vmatpush2.xpose.msra.mxu0 0.0
    %1230 = vmatprep.subr.mxu0 0.0
    %1231 = vmatpush2.xpose.msra.mxu0 0.0
    %1232 = vmatprep.subr.mxu0 0.0
    %1233 = vmatpush2.xpose.msra.mxu0 0.0
    %1234 = vmatprep.subr.mxu0 0.0
    %1235 = vmatpush2.xpose.msra.mxu0 0.0
    %1236 = vmatprep.subr.mxu0 0.0
    %1237 = vmatpush2.xpose.msra.mxu0 0.0
    %1238 = vmatprep.subr.mxu0 0.0
    %1239 = vmatpush2.xpose.msra.mxu0 0.0
    %1240 = vmatprep.subr.mxu0 0.0
    %1241 = vmatpush2.xpose.msra.mxu0 0.0
    %1242 = vmatprep.subr.mxu0 0.0
    %1243 = vmatpush2.xpose.msra.mxu0 0.0
    %1244 = vmatprep.subr.mxu0 0.0
    %1245 = vmatpush2.xpose.msra.mxu0 0.0
    %1246 = vmatprep.subr.mxu0 0.0
    %1247 = vmatpush2.xpose.msra.mxu0 0.0
    %1248 = vmatprep.mubr.f32.mxu0 0.0
    %1249 = vmatmul.mubr.f32.gmra.mxu0 %v1178
    %v1250 = vpop.f32.mrf.mxu0
    %v1251 = vadd.f32 0.0, %v1250
    %v1252 = vpop.f32.mrf.mxu0
    %1253 = vdwg.mxu0
    %v1254 = vmul.f32 %v1251, 0.35355338
    %v1255 = vsel %vm510, %v1254, -1e+09
    %v1256 = vsel %vm512, %v1255, -inf
    %1257 = vmax.xlane.f32.xlu0 %v1256
    %v1258 = vpop.xlane.xlu0 %1257
    %v1259 = vsub.f32 %v1255, %v1258
    %v1260 = vmul.f32 %v1259, 1.442695
    %v1261 = vpow.pop %v1260
    %v1262 = vsel %vm512, %v1261, 0.0
    %1263 = vadd.xlane.f32.xlu0 %v1262
    %v1264 = vpop.xlane.xlu0 %1263
    %v1265 = vrcp.pop %v1264
    %v1266 = vmul.f32 %v1261, %v1265
    %1267 = vrot.lane.b32.xlu0 %v421, 104
    %v1268 = vpop.permute.xlu0 %1267
    %1269 = vrot.lane.b32.xlu0 %v426, 104
    %v1270 = vpop.permute.xlu0 %1269
    %v1273 = vsel %vm512, %v1266, 0
    %v1275 = vsel %vm527, %v1270, 0
    %1277 = vmatprep.subr.mxu0 0.0
    %1278 = vmatpush1.msra.mxu0 0.0
    %1279 = vmatprep.subr.mxu0 0.0
    %1280 = vmatpush1.msra.mxu0 0.0
    %1281 = vmatprep.subr.mxu0 0.0
    %1282 = vmatpush1.msra.mxu0 0.0
    %1283 = vmatprep.subr.mxu0 0.0
    %1284 = vmatpush1.msra.mxu0 0.0
    %1285 = vmatprep.subr.mxu0 0.0
    %1286 = vmatpush1.msra.mxu0 0.0
    %1287 = vmatprep.subr.mxu0 0.0
    %1288 = vmatpush1.msra.mxu0 0.0
    %1289 = vmatprep.subr.mxu0 0.0
    %1290 = vmatpush1.msra.mxu0 0.0
    %1291 = vmatprep.subr.mxu0 0.0
    %1292 = vmatpush1.msra.mxu0 0.0
    %1293 = vmatprep.subr.mxu0 0.0
    %1294 = vmatpush1.msra.mxu0 0.0
    %1295 = vmatprep.subr.mxu0 0.0
    %1296 = vmatpush1.msra.mxu0 0.0
    %1297 = vmatprep.subr.mxu0 0.0
    %1298 = vmatpush1.msra.mxu0 0.0
    %1299 = vmatprep.subr.mxu0 0.0
    %1300 = vmatpush1.msra.mxu0 0.0
    %1301 = vmatprep.subr.mxu0 0.0
    %1302 = vmatpush1.msra.mxu0 0.0
    %1303 = vmatprep.subr.mxu0 0.0
    %1304 = vmatpush1.msra.mxu0 0.0
    %1305 = vmatprep.subr.mxu0 0.0
    %1306 = vmatpush1.msra.mxu0 %v1275
    %1307 = vmatprep.subr.mxu0 0.0
    %1308 = vmatpush1.msra.mxu0 %v1268
    %1309 = vmatprep.subr.mxu0 0.0
    %1310 = vmatpush2.msra.mxu0 0.0
    %1311 = vmatprep.subr.mxu0 0.0
    %1312 = vmatpush2.msra.mxu0 0.0
    %1313 = vmatprep.subr.mxu0 0.0
    %1314 = vmatpush2.msra.mxu0 0.0
    %1315 = vmatprep.subr.mxu0 0.0
    %1316 = vmatpush2.msra.mxu0 0.0
    %1317 = vmatprep.subr.mxu0 0.0
    %1318 = vmatpush2.msra.mxu0 0.0
    %1319 = vmatprep.subr.mxu0 0.0
    %1320 = vmatpush2.msra.mxu0 0.0
    %1321 = vmatprep.subr.mxu0 0.0
    %1322 = vmatpush2.msra.mxu0 0.0
    %1323 = vmatprep.subr.mxu0 0.0
    %1324 = vmatpush2.msra.mxu0 0.0
    %1325 = vmatprep.subr.mxu0 0.0
    %1326 = vmatpush2.msra.mxu0 0.0
    %1327 = vmatprep.subr.mxu0 0.0
    %1328 = vmatpush2.msra.mxu0 0.0
    %1329 = vmatprep.subr.mxu0 0.0
    %1330 = vmatpush2.msra.mxu0 0.0
    %1331 = vmatprep.subr.mxu0 0.0
    %1332 = vmatpush2.msra.mxu0 0.0
    %1333 = vmatprep.subr.mxu0 0.0
    %1334 = vmatpush2.msra.mxu0 0.0
    %1335 = vmatprep.subr.mxu0 0.0
    %1336 = vmatpush2.msra.mxu0 0.0
    %1337 = vmatprep.subr.mxu0 0.0
    %1338 = vmatpush2.msra.mxu0 0.0
    %1339 = vmatprep.subr.mxu0 0.0
    %1340 = vmatpush2.msra.mxu0 0.0
    %1341 = vmatprep.mubr.f32.mxu0 0.0
    %1342 = vmatmul.mubr.f32.gmra.mxu0 %v1273
    %v1343 = vpop.f32.mrf.mxu0
    %v1344 = vadd.f32 0.0, %v1343
    %v1345 = vpop.f32.mrf.mxu0
    %1346 = vdwg.mxu0
    %v1348 = vsel %vm429, %v1344, 0
    %1350 = vmatprep.subr.mxu0 0.0
    %1351 = vmatpush1.msra.mxu0 0.0
    %1352 = vmatprep.subr.mxu0 0.0
    %1353 = vmatpush1.msra.mxu0 0.0
    %1354 = vmatprep.subr.mxu0 0.0
    %1355 = vmatpush1.msra.mxu0 0.0
    %1356 = vmatprep.subr.mxu0 0.0
    %1357 = vmatpush1.msra.mxu0 0.0
    %1358 = vmatprep.subr.mxu0 0.0
    %1359 = vmatpush1.msra.mxu0 0.0
    %1360 = vmatprep.subr.mxu0 0.0
    %1361 = vmatpush1.msra.mxu0 0.0
    %1362 = vmatprep.subr.mxu0 0.0
    %1363 = vmatpush1.msra.mxu0 0.0
    %1364 = vmatprep.subr.mxu0 0.0
    %1365 = vmatpush1.msra.mxu0 0.0
    %1366 = vmatprep.subr.mxu0 0.0
    %1367 = vmatpush1.msra.mxu0 0.0
    %1368 = vmatprep.subr.mxu0 0.0
    %1369 = vmatpush1.msra.mxu0 0.0
    %1370 = vmatprep.subr.mxu0 0.0
    %1371 = vmatpush1.msra.mxu0 0.0
    %1372 = vmatprep.subr.mxu0 0.0
    %1373 = vmatpush1.msra.mxu0 0.0
    %1374 = vmatprep.subr.mxu0 0.0
    %1375 = vmatpush1.msra.mxu0 0.0
    %1376 = vmatprep.subr.mxu0 0.0
    %1377 = vmatpush1.msra.mxu0 0.0
    %1378 = vmatprep.subr.mxu0 0.0
    %1379 = vmatpush1.msra.mxu0 0.0
    %1380 = vmatprep.subr.mxu0 0.0
    %1381 = vmatpush1.msra.mxu0 %v147
    %1382 = vmatprep.subr.mxu0 0.0
    %1383 = vmatpush2.msra.mxu0 0.0
    %1384 = vmatprep.subr.mxu0 0.0
    %1385 = vmatpush2.msra.mxu0 0.0
    %1386 = vmatprep.subr.mxu0 0.0
    %1387 = vmatpush2.msra.mxu0 0.0
    %1388 = vmatprep.subr.mxu0 0.0
    %1389 = vmatpush2.msra.mxu0 0.0
    %1390 = vmatprep.subr.mxu0 0.0
    %1391 = vmatpush2.msra.mxu0 0.0
    %1392 = vmatprep.subr.mxu0 0.0
    %1393 = vmatpush2.msra.mxu0 0.0
    %1394 = vmatprep.subr.mxu0 0.0
    %1395 = vmatpush2.msra.mxu0 0.0
    %1396 = vmatprep.subr.mxu0 0.0
    %1397 = vmatpush2.msra.mxu0 0.0
    %1398 = vmatprep.subr.mxu0 0.0
    %1399 = vmatpush2.msra.mxu0 0.0
    %1400 = vmatprep.subr.mxu0 0.0
    %1401 = vmatpush2.msra.mxu0 0.0
    %1402 = vmatprep.subr.mxu0 0.0
    %1403 = vmatpush2.msra.mxu0 0.0
    %1404 = vmatprep.subr.mxu0 0.0
    %1405 = vmatpush2.msra.mxu0 0.0
    %1406 = vmatprep.subr.mxu0 0.0
    %1407 = vmatpush2.msra.mxu0 0.0
    %1408 = vmatprep.subr.mxu0 0.0
    %1409 = vmatpush2.msra.mxu0 0.0
    %1410 = vmatprep.subr.mxu0 0.0
    %1411 = vmatpush2.msra.mxu0 0.0
    %1412 = vmatprep.subr.mxu0 0.0
    %1413 = vmatpush2.msra.mxu0 0.0
    %1414 = vmatprep.mubr.f32.mxu0 0.0
    %1415 = vmatmul.mubr.f32.gmra.mxu0 %v1348
    %v1416 = vpop.f32.mrf.mxu0
    %v1417 = vadd.f32 0.0, %v1416
    %v1418 = vpop.f32.mrf.mxu0
    %1419 = vdwg.mxu0
    %v1420 = vadd.f32 %v1171, %v1417
    %v1422 = vsel %vm179, %v171, 0
    %v1425 = vsel %vm179, %v172, 0
    %1427 = vmatprep.subr.mxu0 0.0
    %1428 = vmatpush1.msra.mxu0 0.0
    %1429 = vmatprep.subr.mxu0 0.0
    %1430 = vmatpush1.msra.mxu0 0.0
    %1431 = vmatprep.subr.mxu0 0.0
    %1432 = vmatpush1.msra.mxu0 0.0
    %1433 = vmatprep.subr.mxu0 0.0
    %1434 = vmatpush1.msra.mxu0 0.0
    %1435 = vmatprep.subr.mxu0 0.0
    %1436 = vmatpush1.msra.mxu0 0.0
    %1437 = vmatprep.subr.mxu0 0.0
    %1438 = vmatpush1.msra.mxu0 0.0
    %1439 = vmatprep.subr.mxu0 0.0
    %1440 = vmatpush1.msra.mxu0 0.0
    %1441 = vmatprep.subr.mxu0 0.0
    %1442 = vmatpush1.msra.mxu0 0.0
    %1443 = vmatprep.subr.mxu0 0.0
    %1444 = vmatpush1.msra.mxu0 0.0
    %1445 = vmatprep.subr.mxu0 0.0
    %1446 = vmatpush1.msra.mxu0 0.0
    %1447 = vmatprep.subr.mxu0 0.0
    %1448 = vmatpush1.msra.mxu0 0.0
    %1449 = vmatprep.subr.mxu0 0.0
    %1450 = vmatpush1.msra.mxu0 0.0
    %1451 = vmatprep.subr.mxu0 0.0
    %1452 = vmatpush1.msra.mxu0 %v137
    %1453 = vmatprep.subr.mxu0 0.0
    %1454 = vmatpush1.msra.mxu0 %v136
    %1455 = vmatprep.subr.mxu0 0.0
    %1456 = vmatpush1.msra.mxu0 %v135
    %1457 = vmatprep.subr.mxu0 0.0
    %1458 = vmatpush1.msra.mxu0 %v134
    %1459 = vmatprep.subr.mxu0 0.0
    %1460 = vmatpush2.msra.mxu0 0.0
    %1461 = vmatprep.subr.mxu0 0.0
    %1462 = vmatpush2.msra.mxu0 0.0
    %1463 = vmatprep.subr.mxu0 0.0
    %1464 = vmatpush2.msra.mxu0 0.0
    %1465 = vmatprep.subr.mxu0 0.0
    %1466 = vmatpush2.msra.mxu0 0.0
    %1467 = vmatprep.subr.mxu0 0.0
    %1468 = vmatpush2.msra.mxu0 0.0
    %1469 = vmatprep.subr.mxu0 0.0
    %1470 = vmatpush2.msra.mxu0 0.0
    %1471 = vmatprep.subr.mxu0 0.0
    %1472 = vmatpush2.msra.mxu0 0.0
    %1473 = vmatprep.subr.mxu0 0.0
    %1474 = vmatpush2.msra.mxu0 0.0
    %1475 = vmatprep.subr.mxu0 0.0
    %1476 = vmatpush2.msra.mxu0 0.0
    %1477 = vmatprep.subr.mxu0 0.0
    %1478 = vmatpush2.msra.mxu0 0.0
    %1479 = vmatprep.subr.mxu0 0.0
    %1480 = vmatpush2.msra.mxu0 0.0
    %1481 = vmatprep.subr.mxu0 0.0
    %1482 = vmatpush2.msra.mxu0 0.0
    %1483 = vmatprep.subr.mxu0 0.0
    %1484 = vmatpush2.msra.mxu0 0.0
    %1485 = vmatprep.subr.mxu0 0.0
    %1486 = vmatpush2.msra.mxu0 0.0
    %1487 = vmatprep.subr.mxu0 0.0
    %1488 = vmatpush2.msra.mxu0 0.0
    %1489 = vmatprep.subr.mxu0 0.0
    %1490 = vmatpush2.msra.mxu0 0.0
    %1491 = vmatprep.mubr.f32.mxu0 0.0
    %1492 = vmatmul.mubr.f32.gmra.mxu0 %v1422
    %v1493 = vpop.f32.mrf.mxu0
    %v1494 = vadd.f32 %v265, %v1493
    %v1495 = vpop.f32.mrf.mxu0
    %1496 = vmatprep.mubr.f32.mxu0 0.0
    %1497 = vmatmul.mubr.f32.gmra.mxu0 %v1425
    %v1498 = vpop.f32.mrf.mxu0
    %v1499 = vadd.f32 %v265, %v1498
    %v1500 = vpop.f32.mrf.mxu0
    %1501 = vdwg.mxu0
    %1502 = vmatprep.subr.mxu0 0.0
    %1503 = vmatpush1.msra.mxu0 0.0
    %1504 = vmatprep.subr.mxu0 0.0
    %1505 = vmatpush1.msra.mxu0 0.0
    %1506 = vmatprep.subr.mxu0 0.0
    %1507 = vmatpush1.msra.mxu0 0.0
    %1508 = vmatprep.subr.mxu0 0.0
    %1509 = vmatpush1.msra.mxu0 0.0
    %1510 = vmatprep.subr.mxu0 0.0
    %1511 = vmatpush1.msra.mxu0 0.0
    %1512 = vmatprep.subr.mxu0 0.0
    %1513 = vmatpush1.msra.mxu0 0.0
    %1514 = vmatprep.subr.mxu0 0.0
    %1515 = vmatpush1.msra.mxu0 0.0
    %1516 = vmatprep.subr.mxu0 0.0
    %1517 = vmatpush1.msra.mxu0 0.0
    %1518 = vmatprep.subr.mxu0 0.0
    %1519 = vmatpush1.msra.mxu0 0.0
    %1520 = vmatprep.subr.mxu0 0.0
    %1521 = vmatpush1.msra.mxu0 0.0
    %1522 = vmatprep.subr.mxu0 0.0
    %1523 = vmatpush1.msra.mxu0 0.0
    %1524 = vmatprep.subr.mxu0 0.0
    %1525 = vmatpush1.msra.mxu0 0.0
    %1526 = vmatprep.subr.mxu0 0.0
    %1527 = vmatpush1.msra.mxu0 %v142
    %1528 = vmatprep.subr.mxu0 0.0
    %1529 = vmatpush1.msra.mxu0 %v141
    %1530 = vmatprep.subr.mxu0 0.0
    %1531 = vmatpush1.msra.mxu0 %v140
    %1532 = vmatprep.subr.mxu0 0.0
    %1533 = vmatpush1.msra.mxu0 %v139
    %1534 = vmatprep.subr.mxu0 0.0
    %1535 = vmatpush2.msra.mxu0 0.0
    %1536 = vmatprep.subr.mxu0 0.0
    %1537 = vmatpush2.msra.mxu0 0.0
    %1538 = vmatprep.subr.mxu0 0.0
    %1539 = vmatpush2.msra.mxu0 0.0
    %1540 = vmatprep.subr.mxu0 0.0
    %1541 = vmatpush2.msra.mxu0 0.0
    %1542 = vmatprep.subr.mxu0 0.0
    %1543 = vmatpush2.msra.mxu0 0.0
    %1544 = vmatprep.subr.mxu0 0.0
    %1545 = vmatpush2.msra.mxu0 0.0
    %1546 = vmatprep.subr.mxu0 0.0
    %1547 = vmatpush2.msra.mxu0 0.0
    %1548 = vmatprep.subr.mxu0 0.0
    %1549 = vmatpush2.msra.mxu0 0.0
    %1550 = vmatprep.subr.mxu0 0.0
    %1551 = vmatpush2.msra.mxu0 0.0
    %1552 = vmatprep.subr.mxu0 0.0
    %1553 = vmatpush2.msra.mxu0 0.0
    %1554 = vmatprep.subr.mxu0 0.0
    %1555 = vmatpush2.msra.mxu0 0.0
    %1556 = vmatprep.subr.mxu0 0.0
    %1557 = vmatpush2.msra.mxu0 0.0
    %1558 = vmatprep.subr.mxu0 0.0
    %1559 = vmatpush2.msra.mxu0 0.0
    %1560 = vmatprep.subr.mxu0 0.0
    %1561 = vmatpush2.msra.mxu0 0.0
    %1562 = vmatprep.subr.mxu0 0.0
    %1563 = vmatpush2.msra.mxu0 0.0
    %1564 = vmatprep.subr.mxu0 0.0
    %1565 = vmatpush2.msra.mxu0 0.0
    %1566 = vmatprep.mubr.f32.mxu0 0.0
    %1567 = vmatmul.mubr.f32.gmra.mxu0 %v1422
    %v1568 = vpop.f32.mrf.mxu0
    %v1569 = vadd.f32 %v352, %v1568
    %v1570 = vpop.f32.mrf.mxu0
    %1571 = vmatprep.mubr.f32.mxu0 0.0
    %1572 = vmatmul.mubr.f32.gmra.mxu0 %v1425
    %v1573 = vpop.f32.mrf.mxu0
    %v1574 = vadd.f32 %v352, %v1573
    %v1575 = vpop.f32.mrf.mxu0
    %1576 = vdwg.mxu0
    %v1578 = vsel %vm429, %v258, 0
    %v1581 = vsel %vm429, %v1494, 0
    %v1584 = vsel %vm429, %v1499, 0
    %1586 = vmatprep.subr.mxu0 0.0
    %1587 = vmatpush1.xpose.msra.mxu0 0.0
    %1588 = vmatprep.subr.mxu0 0.0
    %1589 = vmatpush1.xpose.msra.mxu0 0.0
    %1590 = vmatprep.subr.mxu0 0.0
    %1591 = vmatpush1.xpose.msra.mxu0 0.0
    %1592 = vmatprep.subr.mxu0 0.0
    %1593 = vmatpush1.xpose.msra.mxu0 0.0
    %1594 = vmatprep.subr.mxu0 0.0
    %1595 = vmatpush1.xpose.msra.mxu0 0.0
    %1596 = vmatprep.subr.mxu0 0.0
    %1597 = vmatpush1.xpose.msra.mxu0 0.0
    %1598 = vmatprep.subr.mxu0 0.0
    %1599 = vmatpush1.xpose.msra.mxu0 0.0
    %1600 = vmatprep.subr.mxu0 0.0
    %1601 = vmatpush1.xpose.msra.mxu0 0.0
    %1602 = vmatprep.subr.mxu0 0.0
    %1603 = vmatpush1.xpose.msra.mxu0 0.0
    %1604 = vmatprep.subr.mxu0 0.0
    %1605 = vmatpush1.xpose.msra.mxu0 0.0
    %1606 = vmatprep.subr.mxu0 0.0
    %1607 = vmatpush1.xpose.msra.mxu0 0.0
    %1608 = vmatprep.subr.mxu0 0.0
    %1609 = vmatpush1.xpose.msra.mxu0 0.0
    %1610 = vmatprep.subr.mxu0 0.0
    %1611 = vmatpush1.xpose.msra.mxu0 0.0
    %1612 = vmatprep.subr.mxu0 0.0
    %1613 = vmatpush1.xpose.msra.mxu0 0.0
    %1614 = vmatprep.subr.mxu0 0.0
    %1615 = vmatpush1.xpose.msra.mxu0 %v1584
    %1616 = vmatprep.subr.mxu0 0.0
    %1617 = vmatpush1.xpose.msra.mxu0 %v1581
    %1618 = vmatprep.subr.mxu0 0.0
    %1619 = vmatpush2.xpose.msra.mxu0 0.0
    %1620 = vmatprep.subr.mxu0 0.0
    %1621 = vmatpush2.xpose.msra.mxu0 0.0
    %1622 = vmatprep.subr.mxu0 0.0
    %1623 = vmatpush2.xpose.msra.mxu0 0.0
    %1624 = vmatprep.subr.mxu0 0.0
    %1625 = vmatpush2.xpose.msra.mxu0 0.0
    %1626 = vmatprep.subr.mxu0 0.0
    %1627 = vmatpush2.xpose.msra.mxu0 0.0
    %1628 = vmatprep.subr.mxu0 0.0
    %1629 = vmatpush2.xpose.msra.mxu0 0.0
    %1630 = vmatprep.subr.mxu0 0.0
    %1631 = vmatpush2.xpose.msra.mxu0 0.0
    %1632 = vmatprep.subr.mxu0 0.0
    %1633 = vmatpush2.xpose.msra.mxu0 0.0
    %1634 = vmatprep.subr.mxu0 0.0
    %1635 = vmatpush2.xpose.msra.mxu0 0.0
    %1636 = vmatprep.subr.mxu0 0.0
    %1637 = vmatpush2.xpose.msra.mxu0 0.0
    %1638 = vmatprep.subr.mxu0 0.0
    %1639 = vmatpush2.xpose.msra.mxu0 0.0
    %1640 = vmatprep.subr.mxu0 0.0
    %1641 = vmatpush2.xpose.msra.mxu0 0.0
    %1642 = vmatprep.subr.mxu0 0.0
    %1643 = vmatpush2.xpose.msra.mxu0 0.0
    %1644 = vmatprep.subr.mxu0 0.0
    %1645 = vmatpush2.xpose.msra.mxu0 0.0
    %1646 = vmatprep.subr.mxu0 0.0
    %1647 = vmatpush2.xpose.msra.mxu0 0.0
    %1648 = vmatprep.subr.mxu0 0.0
    %1649 = vmatpush2.xpose.msra.mxu0 0.0
    %1650 = vmatprep.mubr.f32.mxu0 0.0
    %1651 = vmatmul.mubr.f32.gmra.mxu0 %v1578
    %v1652 = vpop.f32.mrf.mxu0
    %v1653 = vadd.f32 0.0, %v1652
    %v1654 = vpop.f32.mrf.mxu0
    %1655 = vdwg.mxu0
    %v1656 = vmul.f32 %v1653, 0.35355338
    %vm1657 = vcmp.gt.f32.partialorder %v128, 0.0
    %v1658 = vsel %vm1657, %v1656, -1e+09
    %v1659 = vsel %vm512, %v1658, -inf
    %1660 = vmax.xlane.f32.xlu0 %v1659
    %v1661 = vpop.xlane.xlu0 %1660
    %v1662 = vsub.f32 %v1658, %v1661
    %v1663 = vmul.f32 %v1662, 1.442695
    %v1664 = vpow.pop %v1663
    %v1665 = vsel %vm512, %v1664, 0.0
    %1666 = vadd.xlane.f32.xlu0 %v1665
    %v1667 = vpop.xlane.xlu0 %1666
    %v1668 = vrcp.pop %v1667
    %v1669 = vmul.f32 %v1664, %v1668
    %v1671 = vsel %vm512, %v1669, 0
    %v1674 = vsel %vm527, %v1574, 0
    %1676 = vmatprep.subr.mxu0 0.0
    %1677 = vmatpush1.msra.mxu0 0.0
    %1678 = vmatprep.subr.mxu0 0.0
    %1679 = vmatpush1.msra.mxu0 0.0
    %1680 = vmatprep.subr.mxu0 0.0
    %1681 = vmatpush1.msra.mxu0 0.0
    %1682 = vmatprep.subr.mxu0 0.0
    %1683 = vmatpush1.msra.mxu0 0.0
    %1684 = vmatprep.subr.mxu0 0.0
    %1685 = vmatpush1.msra.mxu0 0.0
    %1686 = vmatprep.subr.mxu0 0.0
    %1687 = vmatpush1.msra.mxu0 0.0
    %1688 = vmatprep.subr.mxu0 0.0
    %1689 = vmatpush1.msra.mxu0 0.0
    %1690 = vmatprep.subr.mxu0 0.0
    %1691 = vmatpush1.msra.mxu0 0.0
    %1692 = vmatprep.subr.mxu0 0.0
    %1693 = vmatpush1.msra.mxu0 0.0
    %1694 = vmatprep.subr.mxu0 0.0
    %1695 = vmatpush1.msra.mxu0 0.0
    %1696 = vmatprep.subr.mxu0 0.0
    %1697 = vmatpush1.msra.mxu0 0.0
    %1698 = vmatprep.subr.mxu0 0.0
    %1699 = vmatpush1.msra.mxu0 0.0
    %1700 = vmatprep.subr.mxu0 0.0
    %1701 = vmatpush1.msra.mxu0 0.0
    %1702 = vmatprep.subr.mxu0 0.0
    %1703 = vmatpush1.msra.mxu0 0.0
    %1704 = vmatprep.subr.mxu0 0.0
    %1705 = vmatpush1.msra.mxu0 %v1674
    %1706 = vmatprep.subr.mxu0 0.0
    %1707 = vmatpush1.msra.mxu0 %v1569
    %1708 = vmatprep.subr.mxu0 0.0
    %1709 = vmatpush2.msra.mxu0 0.0
    %1710 = vmatprep.subr.mxu0 0.0
    %1711 = vmatpush2.msra.mxu0 0.0
    %1712 = vmatprep.subr.mxu0 0.0
    %1713 = vmatpush2.msra.mxu0 0.0
    %1714 = vmatprep.subr.mxu0 0.0
    %1715 = vmatpush2.msra.mxu0 0.0
    %1716 = vmatprep.subr.mxu0 0.0
    %1717 = vmatpush2.msra.mxu0 0.0
    %1718 = vmatprep.subr.mxu0 0.0
    %1719 = vmatpush2.msra.mxu0 0.0
    %1720 = vmatprep.subr.mxu0 0.0
    %1721 = vmatpush2.msra.mxu0 0.0
    %1722 = vmatprep.subr.mxu0 0.0
    %1723 = vmatpush2.msra.mxu0 0.0
    %1724 = vmatprep.subr.mxu0 0.0
    %1725 = vmatpush2.msra.mxu0 0.0
    %1726 = vmatprep.subr.mxu0 0.0
    %1727 = vmatpush2.msra.mxu0 0.0
    %1728 = vmatprep.subr.mxu0 0.0
    %1729 = vmatpush2.msra.mxu0 0.0
    %1730 = vmatprep.subr.mxu0 0.0
    %1731 = vmatpush2.msra.mxu0 0.0
    %1732 = vmatprep.subr.mxu0 0.0
    %1733 = vmatpush2.msra.mxu0 0.0
    %1734 = vmatprep.subr.mxu0 0.0
    %1735 = vmatpush2.msra.mxu0 0.0
    %1736 = vmatprep.subr.mxu0 0.0
    %1737 = vmatpush2.msra.mxu0 0.0
    %1738 = vmatprep.subr.mxu0 0.0
    %1739 = vmatpush2.msra.mxu0 0.0
    %1740 = vmatprep.mubr.f32.mxu0 0.0
    %1741 = vmatmul.mubr.f32.gmra.mxu0 %v1671
    %v1742 = vpop.f32.mrf.mxu0
    %v1743 = vadd.f32 0.0, %v1742
    %v1744 = vpop.f32.mrf.mxu0
    %1745 = vdwg.mxu0
    %1746 = vrot.lane.b32.xlu0 %v258, 120
    %v1747 = vpop.permute.xlu0 %1746
    %1748 = vrot.lane.b32.xlu0 %v1494, 120
    %v1749 = vpop.permute.xlu0 %1748
    %1750 = vrot.lane.b32.xlu0 %v1499, 120
    %v1751 = vpop.permute.xlu0 %1750
    %v1752 = vsel %vm429, %v1747, 0
    %v1754 = vsel %vm429, %v1749, 0
    %v1756 = vsel %vm429, %v1751, 0
    %1758 = vmatprep.subr.mxu0 0.0
    %1759 = vmatpush1.xpose.msra.mxu0 0.0
    %1760 = vmatprep.subr.mxu0 0.0
    %1761 = vmatpush1.xpose.msra.mxu0 0.0
    %1762 = vmatprep.subr.mxu0 0.0
    %1763 = vmatpush1.xpose.msra.mxu0 0.0
    %1764 = vmatprep.subr.mxu0 0.0
    %1765 = vmatpush1.xpose.msra.mxu0 0.0
    %1766 = vmatprep.subr.mxu0 0.0
    %1767 = vmatpush1.xpose.msra.mxu0 0.0
    %1768 = vmatprep.subr.mxu0 0.0
    %1769 = vmatpush1.xpose.msra.mxu0 0.0
    %1770 = vmatprep.subr.mxu0 0.0
    %1771 = vmatpush1.xpose.msra.mxu0 0.0
    %1772 = vmatprep.subr.mxu0 0.0
    %1773 = vmatpush1.xpose.msra.mxu0 0.0
    %1774 = vmatprep.subr.mxu0 0.0
    %1775 = vmatpush1.xpose.msra.mxu0 0.0
    %1776 = vmatprep.subr.mxu0 0.0
    %1777 = vmatpush1.xpose.msra.mxu0 0.0
    %1778 = vmatprep.subr.mxu0 0.0
    %1779 = vmatpush1.xpose.msra.mxu0 0.0
    %1780 = vmatprep.subr.mxu0 0.0
    %1781 = vmatpush1.xpose.msra.mxu0 0.0
    %1782 = vmatprep.subr.mxu0 0.0
    %1783 = vmatpush1.xpose.msra.mxu0 0.0
    %1784 = vmatprep.subr.mxu0 0.0
    %1785 = vmatpush1.xpose.msra.mxu0 0.0
    %1786 = vmatprep.subr.mxu0 0.0
    %1787 = vmatpush1.xpose.msra.mxu0 %v1756
    %1788 = vmatprep.subr.mxu0 0.0
    %1789 = vmatpush1.xpose.msra.mxu0 %v1754
    %1790 = vmatprep.subr.mxu0 0.0
    %1791 = vmatpush2.xpose.msra.mxu0 0.0
    %1792 = vmatprep.subr.mxu0 0.0
    %1793 = vmatpush2.xpose.msra.mxu0 0.0
    %1794 = vmatprep.subr.mxu0 0.0
    %1795 = vmatpush2.xpose.msra.mxu0 0.0
    %1796 = vmatprep.subr.mxu0 0.0
    %1797 = vmatpush2.xpose.msra.mxu0 0.0
    %1798 = vmatprep.subr.mxu0 0.0
    %1799 = vmatpush2.xpose.msra.mxu0 0.0
    %1800 = vmatprep.subr.mxu0 0.0
    %1801 = vmatpush2.xpose.msra.mxu0 0.0
    %1802 = vmatprep.subr.mxu0 0.0
    %1803 = vmatpush2.xpose.msra.mxu0 0.0
    %1804 = vmatprep.subr.mxu0 0.0
    %1805 = vmatpush2.xpose.msra.mxu0 0.0
    %1806 = vmatprep.subr.mxu0 0.0
    %1807 = vmatpush2.xpose.msra.mxu0 0.0
    %1808 = vmatprep.subr.mxu0 0.0
    %1809 = vmatpush2.xpose.msra.mxu0 0.0
    %1810 = vmatprep.subr.mxu0 0.0
    %1811 = vmatpush2.xpose.msra.mxu0 0.0
    %1812 = vmatprep.subr.mxu0 0.0
    %1813 = vmatpush2.xpose.msra.mxu0 0.0
    %1814 = vmatprep.subr.mxu0 0.0
    %1815 = vmatpush2.xpose.msra.mxu0 0.0
    %1816 = vmatprep.subr.mxu0 0.0
    %1817 = vmatpush2.xpose.msra.mxu0 0.0
    %1818 = vmatprep.subr.mxu0 0.0
    %1819 = vmatpush2.xpose.msra.mxu0 0.0
    %1820 = vmatprep.subr.mxu0 0.0
    %1821 = vmatpush2.xpose.msra.mxu0 0.0
    %1822 = vmatprep.mubr.f32.mxu0 0.0
    %1823 = vmatmul.mubr.f32.gmra.mxu0 %v1752
    %v1824 = vpop.f32.mrf.mxu0
    %v1825 = vadd.f32 0.0, %v1824
    %v1826 = vpop.f32.mrf.mxu0
    %1827 = vdwg.mxu0
    %v1828 = vmul.f32 %v1825, 0.35355338
    %v1829 = vsel %vm1657, %v1828, -1e+09
    %v1830 = vsel %vm512, %v1829, -inf
    %1831 = vmax.xlane.f32.xlu0 %v1830
    %v1832 = vpop.xlane.xlu0 %1831
    %v1833 = vsub.f32 %v1829, %v1832
    %v1834 = vmul.f32 %v1833, 1.442695
    %v1835 = vpow.pop %v1834
    %v1836 = vsel %vm512, %v1835, 0.0
    %1837 = vadd.xlane.f32.xlu0 %v1836
    %v1838 = vpop.xlane.xlu0 %1837
    %v1839 = vrcp.pop %v1838
    %v1840 = vmul.f32 %v1835, %v1839
    %1842 = vrot.lane.b32.xlu0 %v1569, 120
    %v1843 = vpop.permute.xlu0 %1842
    %1844 = vrot.lane.b32.xlu0 %v1574, 120
    %v1845 = vpop.permute.xlu0 %1844
    %v1848 = vsel %vm512, %v1840, 0
    %v1850 = vsel %vm527, %v1845, 0
    %1852 = vmatprep.subr.mxu0 0.0
    %1853 = vmatpush1.msra.mxu0 0.0
    %1854 = vmatprep.subr.mxu0 0.0
    %1855 = vmatpush1.msra.mxu0 0.0
    %1856 = vmatprep.subr.mxu0 0.0
    %1857 = vmatpush1.msra.mxu0 0.0
    %1858 = vmatprep.subr.mxu0 0.0
    %1859 = vmatpush1.msra.mxu0 0.0
    %1860 = vmatprep.subr.mxu0 0.0
    %1861 = vmatpush1.msra.mxu0 0.0
    %1862 = vmatprep.subr.mxu0 0.0
    %1863 = vmatpush1.msra.mxu0 0.0
    %1864 = vmatprep.subr.mxu0 0.0
    %1865 = vmatpush1.msra.mxu0 0.0
    %1866 = vmatprep.subr.mxu0 0.0
    %1867 = vmatpush1.msra.mxu0 0.0
    %1868 = vmatprep.subr.mxu0 0.0
    %1869 = vmatpush1.msra.mxu0 0.0
    %1870 = vmatprep.subr.mxu0 0.0
    %1871 = vmatpush1.msra.mxu0 0.0
    %1872 = vmatprep.subr.mxu0 0.0
    %1873 = vmatpush1.msra.mxu0 0.0
    %1874 = vmatprep.subr.mxu0 0.0
    %1875 = vmatpush1.msra.mxu0 0.0
    %1876 = vmatprep.subr.mxu0 0.0
    %1877 = vmatpush1.msra.mxu0 0.0
    %1878 = vmatprep.subr.mxu0 0.0
    %1879 = vmatpush1.msra.mxu0 0.0
    %1880 = vmatprep.subr.mxu0 0.0
    %1881 = vmatpush1.msra.mxu0 %v1850
    %1882 = vmatprep.subr.mxu0 0.0
    %1883 = vmatpush1.msra.mxu0 %v1843
    %1884 = vmatprep.subr.mxu0 0.0
    %1885 = vmatpush2.msra.mxu0 0.0
    %1886 = vmatprep.subr.mxu0 0.0
    %1887 = vmatpush2.msra.mxu0 0.0
    %1888 = vmatprep.subr.mxu0 0.0
    %1889 = vmatpush2.msra.mxu0 0.0
    %1890 = vmatprep.subr.mxu0 0.0
    %1891 = vmatpush2.msra.mxu0 0.0
    %1892 = vmatprep.subr.mxu0 0.0
    %1893 = vmatpush2.msra.mxu0 0.0
    %1894 = vmatprep.subr.mxu0 0.0
    %1895 = vmatpush2.msra.mxu0 0.0
    %1896 = vmatprep.subr.mxu0 0.0
    %1897 = vmatpush2.msra.mxu0 0.0
    %1898 = vmatprep.subr.mxu0 0.0
    %1899 = vmatpush2.msra.mxu0 0.0
    %1900 = vmatprep.subr.mxu0 0.0
    %1901 = vmatpush2.msra.mxu0 0.0
    %1902 = vmatprep.subr.mxu0 0.0
    %1903 = vmatpush2.msra.mxu0 0.0
    %1904 = vmatprep.subr.mxu0 0.0
    %1905 = vmatpush2.msra.mxu0 0.0
    %1906 = vmatprep.subr.mxu0 0.0
    %1907 = vmatpush2.msra.mxu0 0.0
    %1908 = vmatprep.subr.mxu0 0.0
    %1909 = vmatpush2.msra.mxu0 0.0
    %1910 = vmatprep.subr.mxu0 0.0
    %1911 = vmatpush2.msra.mxu0 0.0
    %1912 = vmatprep.subr.mxu0 0.0
    %1913 = vmatpush2.msra.mxu0 0.0
    %1914 = vmatprep.subr.mxu0 0.0
    %1915 = vmatpush2.msra.mxu0 0.0
    %1916 = vmatprep.mubr.f32.mxu0 0.0
    %1917 = vmatmul.mubr.f32.gmra.mxu0 %v1848
    %v1918 = vpop.f32.mrf.mxu0
    %v1919 = vadd.f32 0.0, %v1918
    %v1920 = vpop.f32.mrf.mxu0
    %1921 = vdwg.mxu0
    %v1923 = vsel %vm429, %v1919, 0
    %1925 = vmatprep.subr.mxu0 0.0
    %1926 = vmatpush1.msra.mxu0 0.0
    %1927 = vmatprep.subr.mxu0 0.0
    %1928 = vmatpush1.msra.mxu0 0.0
    %1929 = vmatprep.subr.mxu0 0.0
    %1930 = vmatpush1.msra.mxu0 0.0
    %1931 = vmatprep.subr.mxu0 0.0
    %1932 = vmatpush1.msra.mxu0 0.0
    %1933 = vmatprep.subr.mxu0 0.0
    %1934 = vmatpush1.msra.mxu0 0.0
    %1935 = vmatprep.subr.mxu0 0.0
    %1936 = vmatpush1.msra.mxu0 0.0
    %1937 = vmatprep.subr.mxu0 0.0
    %1938 = vmatpush1.msra.mxu0 0.0
    %1939 = vmatprep.subr.mxu0 0.0
    %1940 = vmatpush1.msra.mxu0 0.0
    %1941 = vmatprep.subr.mxu0 0.0
    %1942 = vmatpush1.msra.mxu0 0.0
    %1943 = vmatprep.subr.mxu0 0.0
    %1944 = vmatpush1.msra.mxu0 0.0
    %1945 = vmatprep.subr.mxu0 0.0
    %1946 = vmatpush1.msra.mxu0 0.0
    %1947 = vmatprep.subr.mxu0 0.0
    %1948 = vmatpush1.msra.mxu0 0.0
    %1949 = vmatprep.subr.mxu0 0.0
    %1950 = vmatpush1.msra.mxu0 0.0
    %1951 = vmatprep.subr.mxu0 0.0
    %1952 = vmatpush1.msra.mxu0 0.0
    %1953 = vmatprep.subr.mxu0 0.0
    %1954 = vmatpush1.msra.mxu0 0.0
    %1955 = vmatprep.subr.mxu0 0.0
    %1956 = vmatpush1.msra.mxu0 %v145
    %1957 = vmatprep.subr.mxu0 0.0
    %1958 = vmatpush2.msra.mxu0 0.0
    %1959 = vmatprep.subr.mxu0 0.0
    %1960 = vmatpush2.msra.mxu0 0.0
    %1961 = vmatprep.subr.mxu0 0.0
    %1962 = vmatpush2.msra.mxu0 0.0
    %1963 = vmatprep.subr.mxu0 0.0
    %1964 = vmatpush2.msra.mxu0 0.0
    %1965 = vmatprep.subr.mxu0 0.0
    %1966 = vmatpush2.msra.mxu0 0.0
    %1967 = vmatprep.subr.mxu0 0.0
    %1968 = vmatpush2.msra.mxu0 0.0
    %1969 = vmatprep.subr.mxu0 0.0
    %1970 = vmatpush2.msra.mxu0 0.0
    %1971 = vmatprep.subr.mxu0 0.0
    %1972 = vmatpush2.msra.mxu0 0.0
    %1973 = vmatprep.subr.mxu0 0.0
    %1974 = vmatpush2.msra.mxu0 0.0
    %1975 = vmatprep.subr.mxu0 0.0
    %1976 = vmatpush2.msra.mxu0 0.0
    %1977 = vmatprep.subr.mxu0 0.0
    %1978 = vmatpush2.msra.mxu0 0.0
    %1979 = vmatprep.subr.mxu0 0.0
    %1980 = vmatpush2.msra.mxu0 0.0
    %1981 = vmatprep.subr.mxu0 0.0
    %1982 = vmatpush2.msra.mxu0 0.0
    %1983 = vmatprep.subr.mxu0 0.0
    %1984 = vmatpush2.msra.mxu0 0.0
    %1985 = vmatprep.subr.mxu0 0.0
    %1986 = vmatpush2.msra.mxu0 0.0
    %1987 = vmatprep.subr.mxu0 0.0
    %1988 = vmatpush2.msra.mxu0 0.0
    %1989 = vmatprep.mubr.f32.mxu0 0.0
    %1990 = vmatmul.mubr.f32.gmra.mxu0 %v1923
    %v1991 = vpop.f32.mrf.mxu0
    %v1992 = vadd.f32 0.0, %v1991
    %v1993 = vpop.f32.mrf.mxu0
    %1994 = vdwg.mxu0
    %v1996 = vsel %vm429, %v1743, 0
    %1998 = vmatprep.subr.mxu0 0.0
    %1999 = vmatpush1.msra.mxu0 0.0
    %2000 = vmatprep.subr.mxu0 0.0
    %2001 = vmatpush1.msra.mxu0 0.0
    %2002 = vmatprep.subr.mxu0 0.0
    %2003 = vmatpush1.msra.mxu0 0.0
    %2004 = vmatprep.subr.mxu0 0.0
    %2005 = vmatpush1.msra.mxu0 0.0
    %2006 = vmatprep.subr.mxu0 0.0
    %2007 = vmatpush1.msra.mxu0 0.0
    %2008 = vmatprep.subr.mxu0 0.0
    %2009 = vmatpush1.msra.mxu0 0.0
    %2010 = vmatprep.subr.mxu0 0.0
    %2011 = vmatpush1.msra.mxu0 0.0
    %2012 = vmatprep.subr.mxu0 0.0
    %2013 = vmatpush1.msra.mxu0 0.0
    %2014 = vmatprep.subr.mxu0 0.0
    %2015 = vmatpush1.msra.mxu0 0.0
    %2016 = vmatprep.subr.mxu0 0.0
    %2017 = vmatpush1.msra.mxu0 0.0
    %2018 = vmatprep.subr.mxu0 0.0
    %2019 = vmatpush1.msra.mxu0 0.0
    %2020 = vmatprep.subr.mxu0 0.0
    %2021 = vmatpush1.msra.mxu0 0.0
    %2022 = vmatprep.subr.mxu0 0.0
    %2023 = vmatpush1.msra.mxu0 0.0
    %2024 = vmatprep.subr.mxu0 0.0
    %2025 = vmatpush1.msra.mxu0 0.0
    %2026 = vmatprep.subr.mxu0 0.0
    %2027 = vmatpush1.msra.mxu0 0.0
    %2028 = vmatprep.subr.mxu0 0.0
    %2029 = vmatpush1.msra.mxu0 %v144
    %2030 = vmatprep.subr.mxu0 0.0
    %2031 = vmatpush2.msra.mxu0 0.0
    %2032 = vmatprep.subr.mxu0 0.0
    %2033 = vmatpush2.msra.mxu0 0.0
    %2034 = vmatprep.subr.mxu0 0.0
    %2035 = vmatpush2.msra.mxu0 0.0
    %2036 = vmatprep.subr.mxu0 0.0
    %2037 = vmatpush2.msra.mxu0 0.0
    %2038 = vmatprep.subr.mxu0 0.0
    %2039 = vmatpush2.msra.mxu0 0.0
    %2040 = vmatprep.subr.mxu0 0.0
    %2041 = vmatpush2.msra.mxu0 0.0
    %2042 = vmatprep.subr.mxu0 0.0
    %2043 = vmatpush2.msra.mxu0 0.0
    %2044 = vmatprep.subr.mxu0 0.0
    %2045 = vmatpush2.msra.mxu0 0.0
    %2046 = vmatprep.subr.mxu0 0.0
    %2047 = vmatpush2.msra.mxu0 0.0
    %2048 = vmatprep.subr.mxu0 0.0
    %2049 = vmatpush2.msra.mxu0 0.0
    %2050 = vmatprep.subr.mxu0 0.0
    %2051 = vmatpush2.msra.mxu0 0.0
    %2052 = vmatprep.subr.mxu0 0.0
    %2053 = vmatpush2.msra.mxu0 0.0
    %2054 = vmatprep.subr.mxu0 0.0
    %2055 = vmatpush2.msra.mxu0 0.0
    %2056 = vmatprep.subr.mxu0 0.0
    %2057 = vmatpush2.msra.mxu0 0.0
    %2058 = vmatprep.subr.mxu0 0.0
    %2059 = vmatpush2.msra.mxu0 0.0
    %2060 = vmatprep.subr.mxu0 0.0
    %2061 = vmatpush2.msra.mxu0 0.0
    %2062 = vmatprep.mubr.f32.mxu0 0.0
    %2063 = vmatmul.mubr.f32.gmra.mxu0 %v1996
    %v2064 = vpop.f32.mrf.mxu0
    %v2065 = vadd.f32 %v1992, %v2064
    %v2066 = vpop.f32.mrf.mxu0
    %2067 = vdwg.mxu0
    %2068 = vrot.lane.b32.xlu0 %v258, 112
    %v2069 = vpop.permute.xlu0 %2068
    %2070 = vrot.lane.b32.xlu0 %v1494, 112
    %v2071 = vpop.permute.xlu0 %2070
    %2072 = vrot.lane.b32.xlu0 %v1499, 112
    %v2073 = vpop.permute.xlu0 %2072
    %v2074 = vsel %vm429, %v2069, 0
    %v2076 = vsel %vm429, %v2071, 0
    %v2078 = vsel %vm429, %v2073, 0
    %2080 = vmatprep.subr.mxu0 0.0
    %2081 = vmatpush1.xpose.msra.mxu0 0.0
    %2082 = vmatprep.subr.mxu0 0.0
    %2083 = vmatpush1.xpose.msra.mxu0 0.0
    %2084 = vmatprep.subr.mxu0 0.0
    %2085 = vmatpush1.xpose.msra.mxu0 0.0
    %2086 = vmatprep.subr.mxu0 0.0
    %2087 = vmatpush1.xpose.msra.mxu0 0.0
    %2088 = vmatprep.subr.mxu0 0.0
    %2089 = vmatpush1.xpose.msra.mxu0 0.0
    %2090 = vmatprep.subr.mxu0 0.0
    %2091 = vmatpush1.xpose.msra.mxu0 0.0
    %2092 = vmatprep.subr.mxu0 0.0
    %2093 = vmatpush1.xpose.msra.mxu0 0.0
    %2094 = vmatprep.subr.mxu0 0.0
    %2095 = vmatpush1.xpose.msra.mxu0 0.0
    %2096 = vmatprep.subr.mxu0 0.0
    %2097 = vmatpush1.xpose.msra.mxu0 0.0
    %2098 = vmatprep.subr.mxu0 0.0
    %2099 = vmatpush1.xpose.msra.mxu0 0.0
    %2100 = vmatprep.subr.mxu0 0.0
    %2101 = vmatpush1.xpose.msra.mxu0 0.0
    %2102 = vmatprep.subr.mxu0 0.0
    %2103 = vmatpush1.xpose.msra.mxu0 0.0
    %2104 = vmatprep.subr.mxu0 0.0
    %2105 = vmatpush1.xpose.msra.mxu0 0.0
    %2106 = vmatprep.subr.mxu0 0.0
    %2107 = vmatpush1.xpose.msra.mxu0 0.0
    %2108 = vmatprep.subr.mxu0 0.0
    %2109 = vmatpush1.xpose.msra.mxu0 %v2078
    %2110 = vmatprep.subr.mxu0 0.0
    %2111 = vmatpush1.xpose.msra.mxu0 %v2076
    %2112 = vmatprep.subr.mxu0 0.0
    %2113 = vmatpush2.xpose.msra.mxu0 0.0
    %2114 = vmatprep.subr.mxu0 0.0
    %2115 = vmatpush2.xpose.msra.mxu0 0.0
    %2116 = vmatprep.subr.mxu0 0.0
    %2117 = vmatpush2.xpose.msra.mxu0 0.0
    %2118 = vmatprep.subr.mxu0 0.0
    %2119 = vmatpush2.xpose.msra.mxu0 0.0
    %2120 = vmatprep.subr.mxu0 0.0
    %2121 = vmatpush2.xpose.msra.mxu0 0.0
    %2122 = vmatprep.subr.mxu0 0.0
    %2123 = vmatpush2.xpose.msra.mxu0 0.0
    %2124 = vmatprep.subr.mxu0 0.0
    %2125 = vmatpush2.xpose.msra.mxu0 0.0
    %2126 = vmatprep.subr.mxu0 0.0
    %2127 = vmatpush2.xpose.msra.mxu0 0.0
    %2128 = vmatprep.subr.mxu0 0.0
    %2129 = vmatpush2.xpose.msra.mxu0 0.0
    %2130 = vmatprep.subr.mxu0 0.0
    %2131 = vmatpush2.xpose.msra.mxu0 0.0
    %2132 = vmatprep.subr.mxu0 0.0
    %2133 = vmatpush2.xpose.msra.mxu0 0.0
    %2134 = vmatprep.subr.mxu0 0.0
    %2135 = vmatpush2.xpose.msra.mxu0 0.0
    %2136 = vmatprep.subr.mxu0 0.0
    %2137 = vmatpush2.xpose.msra.mxu0 0.0
    %2138 = vmatprep.subr.mxu0 0.0
    %2139 = vmatpush2.xpose.msra.mxu0 0.0
    %2140 = vmatprep.subr.mxu0 0.0
    %2141 = vmatpush2.xpose.msra.mxu0 0.0
    %2142 = vmatprep.subr.mxu0 0.0
    %2143 = vmatpush2.xpose.msra.mxu0 0.0
    %2144 = vmatprep.mubr.f32.mxu0 0.0
    %2145 = vmatmul.mubr.f32.gmra.mxu0 %v2074
    %v2146 = vpop.f32.mrf.mxu0
    %v2147 = vadd.f32 0.0, %v2146
    %v2148 = vpop.f32.mrf.mxu0
    %2149 = vdwg.mxu0
    %v2150 = vmul.f32 %v2147, 0.35355338
    %v2151 = vsel %vm1657, %v2150, -1e+09
    %v2152 = vsel %vm512, %v2151, -inf
    %2153 = vmax.xlane.f32.xlu0 %v2152
    %v2154 = vpop.xlane.xlu0 %2153
    %v2155 = vsub.f32 %v2151, %v2154
    %v2156 = vmul.f32 %v2155, 1.442695
    %v2157 = vpow.pop %v2156
    %v2158 = vsel %vm512, %v2157, 0.0
    %2159 = vadd.xlane.f32.xlu0 %v2158
    %v2160 = vpop.xlane.xlu0 %2159
    %v2161 = vrcp.pop %v2160
    %v2162 = vmul.f32 %v2157, %v2161
    %2163 = vrot.lane.b32.xlu0 %v1569, 112
    %v2164 = vpop.permute.xlu0 %2163
    %2165 = vrot.lane.b32.xlu0 %v1574, 112
    %v2166 = vpop.permute.xlu0 %2165
    %v2169 = vsel %vm512, %v2162, 0
    %v2171 = vsel %vm527, %v2166, 0
    %2173 = vmatprep.subr.mxu0 0.0
    %2174 = vmatpush1.msra.mxu0 0.0
    %2175 = vmatprep.subr.mxu0 0.0
    %2176 = vmatpush1.msra.mxu0 0.0
    %2177 = vmatprep.subr.mxu0 0.0
    %2178 = vmatpush1.msra.mxu0 0.0
    %2179 = vmatprep.subr.mxu0 0.0
    %2180 = vmatpush1.msra.mxu0 0.0
    %2181 = vmatprep.subr.mxu0 0.0
    %2182 = vmatpush1.msra.mxu0 0.0
    %2183 = vmatprep.subr.mxu0 0.0
    %2184 = vmatpush1.msra.mxu0 0.0
    %2185 = vmatprep.subr.mxu0 0.0
    %2186 = vmatpush1.msra.mxu0 0.0
    %2187 = vmatprep.subr.mxu0 0.0
    %2188 = vmatpush1.msra.mxu0 0.0
    %2189 = vmatprep.subr.mxu0 0.0
    %2190 = vmatpush1.msra.mxu0 0.0
    %2191 = vmatprep.subr.mxu0 0.0
    %2192 = vmatpush1.msra.mxu0 0.0
    %2193 = vmatprep.subr.mxu0 0.0
    %2194 = vmatpush1.msra.mxu0 0.0
    %2195 = vmatprep.subr.mxu0 0.0
    %2196 = vmatpush1.msra.mxu0 0.0
    %2197 = vmatprep.subr.mxu0 0.0
    %2198 = vmatpush1.msra.mxu0 0.0
    %2199 = vmatprep.subr.mxu0 0.0
    %2200 = vmatpush1.msra.mxu0 0.0
    %2201 = vmatprep.subr.mxu0 0.0
    %2202 = vmatpush1.msra.mxu0 %v2171
    %2203 = vmatprep.subr.mxu0 0.0
    %2204 = vmatpush1.msra.mxu0 %v2164
    %2205 = vmatprep.subr.mxu0 0.0
    %2206 = vmatpush2.msra.mxu0 0.0
    %2207 = vmatprep.subr.mxu0 0.0
    %2208 = vmatpush2.msra.mxu0 0.0
    %2209 = vmatprep.subr.mxu0 0.0
    %2210 = vmatpush2.msra.mxu0 0.0
    %2211 = vmatprep.subr.mxu0 0.0
    %2212 = vmatpush2.msra.mxu0 0.0
    %2213 = vmatprep.subr.mxu0 0.0
    %2214 = vmatpush2.msra.mxu0 0.0
    %2215 = vmatprep.subr.mxu0 0.0
    %2216 = vmatpush2.msra.mxu0 0.0
    %2217 = vmatprep.subr.mxu0 0.0
    %2218 = vmatpush2.msra.mxu0 0.0
    %2219 = vmatprep.subr.mxu0 0.0
    %2220 = vmatpush2.msra.mxu0 0.0
    %2221 = vmatprep.subr.mxu0 0.0
    %2222 = vmatpush2.msra.mxu0 0.0
    %2223 = vmatprep.subr.mxu0 0.0
    %2224 = vmatpush2.msra.mxu0 0.0
    %2225 = vmatprep.subr.mxu0 0.0
    %2226 = vmatpush2.msra.mxu0 0.0
    %2227 = vmatprep.subr.mxu0 0.0
    %2228 = vmatpush2.msra.mxu0 0.0
    %2229 = vmatprep.subr.mxu0 0.0
    %2230 = vmatpush2.msra.mxu0 0.0
    %2231 = vmatprep.subr.mxu0 0.0
    %2232 = vmatpush2.msra.mxu0 0.0
    %2233 = vmatprep.subr.mxu0 0.0
    %2234 = vmatpush2.msra.mxu0 0.0
    %2235 = vmatprep.subr.mxu0 0.0
    %2236 = vmatpush2.msra.mxu0 0.0
    %2237 = vmatprep.mubr.f32.mxu0 0.0
    %2238 = vmatmul.mubr.f32.gmra.mxu0 %v2169
    %v2239 = vpop.f32.mrf.mxu0
    %v2240 = vadd.f32 0.0, %v2239
    %v2241 = vpop.f32.mrf.mxu0
    %2242 = vdwg.mxu0
    %v2244 = vsel %vm429, %v2240, 0
    %2246 = vmatprep.subr.mxu0 0.0
    %2247 = vmatpush1.msra.mxu0 0.0
    %2248 = vmatprep.subr.mxu0 0.0
    %2249 = vmatpush1.msra.mxu0 0.0
    %2250 = vmatprep.subr.mxu0 0.0
    %2251 = vmatpush1.msra.mxu0 0.0
    %2252 = vmatprep.subr.mxu0 0.0
    %2253 = vmatpush1.msra.mxu0 0.0
    %2254 = vmatprep.subr.mxu0 0.0
    %2255 = vmatpush1.msra.mxu0 0.0
    %2256 = vmatprep.subr.mxu0 0.0
    %2257 = vmatpush1.msra.mxu0 0.0
    %2258 = vmatprep.subr.mxu0 0.0
    %2259 = vmatpush1.msra.mxu0 0.0
    %2260 = vmatprep.subr.mxu0 0.0
    %2261 = vmatpush1.msra.mxu0 0.0
    %2262 = vmatprep.subr.mxu0 0.0
    %2263 = vmatpush1.msra.mxu0 0.0
    %2264 = vmatprep.subr.mxu0 0.0
    %2265 = vmatpush1.msra.mxu0 0.0
    %2266 = vmatprep.subr.mxu0 0.0
    %2267 = vmatpush1.msra.mxu0 0.0
    %2268 = vmatprep.subr.mxu0 0.0
    %2269 = vmatpush1.msra.mxu0 0.0
    %2270 = vmatprep.subr.mxu0 0.0
    %2271 = vmatpush1.msra.mxu0 0.0
    %2272 = vmatprep.subr.mxu0 0.0
    %2273 = vmatpush1.msra.mxu0 0.0
    %2274 = vmatprep.subr.mxu0 0.0
    %2275 = vmatpush1.msra.mxu0 0.0
    %2276 = vmatprep.subr.mxu0 0.0
    %2277 = vmatpush1.msra.mxu0 %v146
    %2278 = vmatprep.subr.mxu0 0.0
    %2279 = vmatpush2.msra.mxu0 0.0
    %2280 = vmatprep.subr.mxu0 0.0
    %2281 = vmatpush2.msra.mxu0 0.0
    %2282 = vmatprep.subr.mxu0 0.0
    %2283 = vmatpush2.msra.mxu0 0.0
    %2284 = vmatprep.subr.mxu0 0.0
    %2285 = vmatpush2.msra.mxu0 0.0
    %2286 = vmatprep.subr.mxu0 0.0
    %2287 = vmatpush2.msra.mxu0 0.0
    %2288 = vmatprep.subr.mxu0 0.0
    %2289 = vmatpush2.msra.mxu0 0.0
    %2290 = vmatprep.subr.mxu0 0.0
    %2291 = vmatpush2.msra.mxu0 0.0
    %2292 = vmatprep.subr.mxu0 0.0
    %2293 = vmatpush2.msra.mxu0 0.0
    %2294 = vmatprep.subr.mxu0 0.0
    %2295 = vmatpush2.msra.mxu0 0.0
    %2296 = vmatprep.subr.mxu0 0.0
    %2297 = vmatpush2.msra.mxu0 0.0
    %2298 = vmatprep.subr.mxu0 0.0
    %2299 = vmatpush2.msra.mxu0 0.0
    %2300 = vmatprep.subr.mxu0 0.0
    %2301 = vmatpush2.msra.mxu0 0.0
    %2302 = vmatprep.subr.mxu0 0.0
    %2303 = vmatpush2.msra.mxu0 0.0
    %2304 = vmatprep.subr.mxu0 0.0
    %2305 = vmatpush2.msra.mxu0 0.0
    %2306 = vmatprep.subr.mxu0 0.0
    %2307 = vmatpush2.msra.mxu0 0.0
    %2308 = vmatprep.subr.mxu0 0.0
    %2309 = vmatpush2.msra.mxu0 0.0
    %2310 = vmatprep.mubr.f32.mxu0 0.0
    %2311 = vmatmul.mubr.f32.gmra.mxu0 %v2244
    %v2312 = vpop.f32.mrf.mxu0
    %v2313 = vadd.f32 0.0, %v2312
    %v2314 = vpop.f32.mrf.mxu0
    %2315 = vdwg.mxu0
    %v2316 = vadd.f32 %v2065, %v2313
    %2317 = vrot.lane.b32.xlu0 %v258, 104
    %v2318 = vpop.permute.xlu0 %2317
    %2319 = vrot.lane.b32.xlu0 %v1494, 104
    %v2320 = vpop.permute.xlu0 %2319
    %2321 = vrot.lane.b32.xlu0 %v1499, 104
    %v2322 = vpop.permute.xlu0 %2321
    %v2323 = vsel %vm429, %v2318, 0
    %v2325 = vsel %vm429, %v2320, 0
    %v2327 = vsel %vm429, %v2322, 0
    %2329 = vmatprep.subr.mxu0 0.0
    %2330 = vmatpush1.xpose.msra.mxu0 0.0
    %2331 = vmatprep.subr.mxu0 0.0
    %2332 = vmatpush1.xpose.msra.mxu0 0.0
    %2333 = vmatprep.subr.mxu0 0.0
    %2334 = vmatpush1.xpose.msra.mxu0 0.0
    %2335 = vmatprep.subr.mxu0 0.0
    %2336 = vmatpush1.xpose.msra.mxu0 0.0
    %2337 = vmatprep.subr.mxu0 0.0
    %2338 = vmatpush1.xpose.msra.mxu0 0.0
    %2339 = vmatprep.subr.mxu0 0.0
    %2340 = vmatpush1.xpose.msra.mxu0 0.0
    %2341 = vmatprep.subr.mxu0 0.0
    %2342 = vmatpush1.xpose.msra.mxu0 0.0
    %2343 = vmatprep.subr.mxu0 0.0
    %2344 = vmatpush1.xpose.msra.mxu0 0.0
    %2345 = vmatprep.subr.mxu0 0.0
    %2346 = vmatpush1.xpose.msra.mxu0 0.0
    %2347 = vmatprep.subr.mxu0 0.0
    %2348 = vmatpush1.xpose.msra.mxu0 0.0
    %2349 = vmatprep.subr.mxu0 0.0
    %2350 = vmatpush1.xpose.msra.mxu0 0.0
    %2351 = vmatprep.subr.mxu0 0.0
    %2352 = vmatpush1.xpose.msra.mxu0 0.0
    %2353 = vmatprep.subr.mxu0 0.0
    %2354 = vmatpush1.xpose.msra.mxu0 0.0
    %2355 = vmatprep.subr.mxu0 0.0
    %2356 = vmatpush1.xpose.msra.mxu0 0.0
    %2357 = vmatprep.subr.mxu0 0.0
    %2358 = vmatpush1.xpose.msra.mxu0 %v2327
    %2359 = vmatprep.subr.mxu0 0.0
    %2360 = vmatpush1.xpose.msra.mxu0 %v2325
    %2361 = vmatprep.subr.mxu0 0.0
    %2362 = vmatpush2.xpose.msra.mxu0 0.0
    %2363 = vmatprep.subr.mxu0 0.0
    %2364 = vmatpush2.xpose.msra.mxu0 0.0
    %2365 = vmatprep.subr.mxu0 0.0
    %2366 = vmatpush2.xpose.msra.mxu0 0.0
    %2367 = vmatprep.subr.mxu0 0.0
    %2368 = vmatpush2.xpose.msra.mxu0 0.0
    %2369 = vmatprep.subr.mxu0 0.0
    %2370 = vmatpush2.xpose.msra.mxu0 0.0
    %2371 = vmatprep.subr.mxu0 0.0
    %2372 = vmatpush2.xpose.msra.mxu0 0.0
    %2373 = vmatprep.subr.mxu0 0.0
    %2374 = vmatpush2.xpose.msra.mxu0 0.0
    %2375 = vmatprep.subr.mxu0 0.0
    %2376 = vmatpush2.xpose.msra.mxu0 0.0
    %2377 = vmatprep.subr.mxu0 0.0
    %2378 = vmatpush2.xpose.msra.mxu0 0.0
    %2379 = vmatprep.subr.mxu0 0.0
    %2380 = vmatpush2.xpose.msra.mxu0 0.0
    %2381 = vmatprep.subr.mxu0 0.0
    %2382 = vmatpush2.xpose.msra.mxu0 0.0
    %2383 = vmatprep.subr.mxu0 0.0
    %2384 = vmatpush2.xpose.msra.mxu0 0.0
    %2385 = vmatprep.subr.mxu0 0.0
    %2386 = vmatpush2.xpose.msra.mxu0 0.0
    %2387 = vmatprep.subr.mxu0 0.0
    %2388 = vmatpush2.xpose.msra.mxu0 0.0
    %2389 = vmatprep.subr.mxu0 0.0
    %2390 = vmatpush2.xpose.msra.mxu0 0.0
    %2391 = vmatprep.subr.mxu0 0.0
    %2392 = vmatpush2.xpose.msra.mxu0 0.0
    %2393 = vmatprep.mubr.f32.mxu0 0.0
    %2394 = vmatmul.mubr.f32.gmra.mxu0 %v2323
    %v2395 = vpop.f32.mrf.mxu0
    %v2396 = vadd.f32 0.0, %v2395
    %v2397 = vpop.f32.mrf.mxu0
    %2398 = vdwg.mxu0
    %v2399 = vmul.f32 %v2396, 0.35355338
    %v2400 = vsel %vm1657, %v2399, -1e+09
    %v2401 = vsel %vm512, %v2400, -inf
    %2402 = vmax.xlane.f32.xlu0 %v2401
    %v2403 = vpop.xlane.xlu0 %2402
    %v2404 = vsub.f32 %v2400, %v2403
    %v2405 = vmul.f32 %v2404, 1.442695
    %v2406 = vpow.pop %v2405
    %v2407 = vsel %vm512, %v2406, 0.0
    %2408 = vadd.xlane.f32.xlu0 %v2407
    %v2409 = vpop.xlane.xlu0 %2408
    %v2410 = vrcp.pop %v2409
    %v2411 = vmul.f32 %v2406, %v2410
    %2412 = vrot.lane.b32.xlu0 %v1569, 104
    %v2413 = vpop.permute.xlu0 %2412
    %2414 = vrot.lane.b32.xlu0 %v1574, 104
    %v2415 = vpop.permute.xlu0 %2414
    %v2418 = vsel %vm512, %v2411, 0
    %v2420 = vsel %vm527, %v2415, 0
    %2422 = vmatprep.subr.mxu0 0.0
    %2423 = vmatpush1.msra.mxu0 0.0
    %2424 = vmatprep.subr.mxu0 0.0
    %2425 = vmatpush1.msra.mxu0 0.0
    %2426 = vmatprep.subr.mxu0 0.0
    %2427 = vmatpush1.msra.mxu0 0.0
    %2428 = vmatprep.subr.mxu0 0.0
    %2429 = vmatpush1.msra.mxu0 0.0
    %2430 = vmatprep.subr.mxu0 0.0
    %2431 = vmatpush1.msra.mxu0 0.0
    %2432 = vmatprep.subr.mxu0 0.0
    %2433 = vmatpush1.msra.mxu0 0.0
    %2434 = vmatprep.subr.mxu0 0.0
    %2435 = vmatpush1.msra.mxu0 0.0
    %2436 = vmatprep.subr.mxu0 0.0
    %2437 = vmatpush1.msra.mxu0 0.0
    %2438 = vmatprep.subr.mxu0 0.0
    %2439 = vmatpush1.msra.mxu0 0.0
    %2440 = vmatprep.subr.mxu0 0.0
    %2441 = vmatpush1.msra.mxu0 0.0
    %2442 = vmatprep.subr.mxu0 0.0
    %2443 = vmatpush1.msra.mxu0 0.0
    %2444 = vmatprep.subr.mxu0 0.0
    %2445 = vmatpush1.msra.mxu0 0.0
    %2446 = vmatprep.subr.mxu0 0.0
    %2447 = vmatpush1.msra.mxu0 0.0
    %2448 = vmatprep.subr.mxu0 0.0
    %2449 = vmatpush1.msra.mxu0 0.0
    %2450 = vmatprep.subr.mxu0 0.0
    %2451 = vmatpush1.msra.mxu0 %v2420
    %2452 = vmatprep.subr.mxu0 0.0
    %2453 = vmatpush1.msra.mxu0 %v2413
    %2454 = vmatprep.subr.mxu0 0.0
    %2455 = vmatpush2.msra.mxu0 0.0
    %2456 = vmatprep.subr.mxu0 0.0
    %2457 = vmatpush2.msra.mxu0 0.0
    %2458 = vmatprep.subr.mxu0 0.0
    %2459 = vmatpush2.msra.mxu0 0.0
    %2460 = vmatprep.subr.mxu0 0.0
    %2461 = vmatpush2.msra.mxu0 0.0
    %2462 = vmatprep.subr.mxu0 0.0
    %2463 = vmatpush2.msra.mxu0 0.0
    %2464 = vmatprep.subr.mxu0 0.0
    %2465 = vmatpush2.msra.mxu0 0.0
    %2466 = vmatprep.subr.mxu0 0.0
    %2467 = vmatpush2.msra.mxu0 0.0
    %2468 = vmatprep.subr.mxu0 0.0
    %2469 = vmatpush2.msra.mxu0 0.0
    %2470 = vmatprep.subr.mxu0 0.0
    %2471 = vmatpush2.msra.mxu0 0.0
    %2472 = vmatprep.subr.mxu0 0.0
    %2473 = vmatpush2.msra.mxu0 0.0
    %2474 = vmatprep.subr.mxu0 0.0
    %2475 = vmatpush2.msra.mxu0 0.0
    %2476 = vmatprep.subr.mxu0 0.0
    %2477 = vmatpush2.msra.mxu0 0.0
    %2478 = vmatprep.subr.mxu0 0.0
    %2479 = vmatpush2.msra.mxu0 0.0
    %2480 = vmatprep.subr.mxu0 0.0
    %2481 = vmatpush2.msra.mxu0 0.0
    %2482 = vmatprep.subr.mxu0 0.0
    %2483 = vmatpush2.msra.mxu0 0.0
    %2484 = vmatprep.subr.mxu0 0.0
    %2485 = vmatpush2.msra.mxu0 0.0
    %2486 = vmatprep.mubr.f32.mxu0 0.0
    %2487 = vmatmul.mubr.f32.gmra.mxu0 %v2418
    %v2488 = vpop.f32.mrf.mxu0
    %v2489 = vadd.f32 0.0, %v2488
    %v2490 = vpop.f32.mrf.mxu0
    %2491 = vdwg.mxu0
    %v2493 = vsel %vm429, %v2489, 0
    %2495 = vmatprep.subr.mxu0 0.0
    %2496 = vmatpush1.msra.mxu0 0.0
    %2497 = vmatprep.subr.mxu0 0.0
    %2498 = vmatpush1.msra.mxu0 0.0
    %2499 = vmatprep.subr.mxu0 0.0
    %2500 = vmatpush1.msra.mxu0 0.0
    %2501 = vmatprep.subr.mxu0 0.0
    %2502 = vmatpush1.msra.mxu0 0.0
    %2503 = vmatprep.subr.mxu0 0.0
    %2504 = vmatpush1.msra.mxu0 0.0
    %2505 = vmatprep.subr.mxu0 0.0
    %2506 = vmatpush1.msra.mxu0 0.0
    %2507 = vmatprep.subr.mxu0 0.0
    %2508 = vmatpush1.msra.mxu0 0.0
    %2509 = vmatprep.subr.mxu0 0.0
    %2510 = vmatpush1.msra.mxu0 0.0
    %2511 = vmatprep.subr.mxu0 0.0
    %2512 = vmatpush1.msra.mxu0 0.0
    %2513 = vmatprep.subr.mxu0 0.0
    %2514 = vmatpush1.msra.mxu0 0.0
    %2515 = vmatprep.subr.mxu0 0.0
    %2516 = vmatpush1.msra.mxu0 0.0
    %2517 = vmatprep.subr.mxu0 0.0
    %2518 = vmatpush1.msra.mxu0 0.0
    %2519 = vmatprep.subr.mxu0 0.0
    %2520 = vmatpush1.msra.mxu0 0.0
    %2521 = vmatprep.subr.mxu0 0.0
    %2522 = vmatpush1.msra.mxu0 0.0
    %2523 = vmatprep.subr.mxu0 0.0
    %2524 = vmatpush1.msra.mxu0 0.0
    %2525 = vmatprep.subr.mxu0 0.0
    %2526 = vmatpush1.msra.mxu0 %v147
    %2527 = vmatprep.subr.mxu0 0.0
    %2528 = vmatpush2.msra.mxu0 0.0
    %2529 = vmatprep.subr.mxu0 0.0
    %2530 = vmatpush2.msra.mxu0 0.0
    %2531 = vmatprep.subr.mxu0 0.0
    %2532 = vmatpush2.msra.mxu0 0.0
    %2533 = vmatprep.subr.mxu0 0.0
    %2534 = vmatpush2.msra.mxu0 0.0
    %2535 = vmatprep.subr.mxu0 0.0
    %2536 = vmatpush2.msra.mxu0 0.0
    %2537 = vmatprep.subr.mxu0 0.0
    %2538 = vmatpush2.msra.mxu0 0.0
    %2539 = vmatprep.subr.mxu0 0.0
    %2540 = vmatpush2.msra.mxu0 0.0
    %2541 = vmatprep.subr.mxu0 0.0
    %2542 = vmatpush2.msra.mxu0 0.0
    %2543 = vmatprep.subr.mxu0 0.0
    %2544 = vmatpush2.msra.mxu0 0.0
    %2545 = vmatprep.subr.mxu0 0.0
    %2546 = vmatpush2.msra.mxu0 0.0
    %2547 = vmatprep.subr.mxu0 0.0
    %2548 = vmatpush2.msra.mxu0 0.0
    %2549 = vmatprep.subr.mxu0 0.0
    %2550 = vmatpush2.msra.mxu0 0.0
    %2551 = vmatprep.subr.mxu0 0.0
    %2552 = vmatpush2.msra.mxu0 0.0
    %2553 = vmatprep.subr.mxu0 0.0
    %2554 = vmatpush2.msra.mxu0 0.0
    %2555 = vmatprep.subr.mxu0 0.0
    %2556 = vmatpush2.msra.mxu0 0.0
    %2557 = vmatprep.subr.mxu0 0.0
    %2558 = vmatpush2.msra.mxu0 0.0
    %2559 = vmatprep.mubr.f32.mxu0 0.0
    %2560 = vmatmul.mubr.f32.gmra.mxu0 %v2493
    %v2561 = vpop.f32.mrf.mxu0
    %v2562 = vadd.f32 0.0, %v2561
    %v2563 = vpop.f32.mrf.mxu0
    %2564 = vdwg.mxu0
    %v2565 = vadd.f32 %v2316, %v2562
    %v2567 = vlaneseq
    %v2568 = vshrl.u32 %v2567, 7
    %v2569 = vsub.s32 0, %v2568
    %v2570 = vrot.slane %v148, %v2569
    %v2572 = vadd.f32 %v1420, %v2570
    %v2573 = vadd.f32 %v2565, %v2570
    %v2574 = vadd.f32 %v2572, %v167
    %v2575 = vadd.f32 %v2573, %v168
    %v2576 = vsel %vm179, %v2574, 0.0
    %2577 = vadd.xlane.f32.xlu0 %v2576
    %v2578 = vpop.xlane.xlu0 %2577
    %v2579 = vsel %vm179, %v2575, 0.0
    %2580 = vadd.xlane.f32.xlu0 %v2579
    %v2581 = vpop.xlane.xlu0 %2580
    %v2582 = vrcp.pop 32.0
    %v2583 = vmul.f32 %v2578, %v2582
    %v2584 = vmul.f32 %v2581, %v2582
    %v2585 = vsub.f32 %v2574, %v2583
    %v2586 = vsub.f32 %v2575, %v2584
    %v2587 = vmul.f32 %v2585, %v2585
    %v2588 = vmul.f32 %v2586, %v2586
    %v2589 = vsel %vm179, %v2587, 0.0
    %2590 = vadd.xlane.f32.xlu0 %v2589
    %v2591 = vpop.xlane.xlu0 %2590
    %v2592 = vsel %vm179, %v2588, 0.0
    %2593 = vadd.xlane.f32.xlu0 %v2592
    %v2594 = vpop.xlane.xlu0 %2593
    %v2595 = vmul.f32 %v2591, %v2582
    %v2596 = vmul.f32 %v2594, %v2582
    %v2597 = vadd.f32 %v2595, 1e-05
    %v2598 = vadd.f32 %v2596, 1e-05
    %v2599 = vrsqrt.pop %v2597
    %v2600 = vrsqrt.pop %v2598
    %v2601 = vmul.f32 %v2585, %v2599
    %v2602 = vmul.f32 %v2586, %v2600
    %v2604 = vlaneseq
    %v2605 = vshrl.u32 %v2604, 7
    %v2606 = vsub.s32 0, %v2605
    %v2607 = vrot.slane %v149, %v2606
    %v2609 = vmul.f32 %v2601, %v2607
    %v2610 = vmul.f32 %v2602, %v2607
    %v2612 = vlaneseq
    %v2613 = vshrl.u32 %v2612, 7
    %v2614 = vsub.s32 0, %v2613
    %v2615 = vrot.slane %v150, %v2614
    %v2617 = vadd.f32 %v2609, %v2615
    %v2618 = vadd.f32 %v2610, %v2615
    %v2620 = vlaneseq
    %v2621 = vshrl.u32 %v2620, 7
    %v2622 = vsub.s32 0, %v2621
    %v2623 = vrot.slane %v155, %v2622
    %v2626 = vsel %vm179, %v2617, 0
    %v2629 = vsel %vm179, %v2618, 0
    %2631 = vmatprep.subr.mxu0 0.0
    %2632 = vmatpush1.msra.mxu0 0.0
    %2633 = vmatprep.subr.mxu0 0.0
    %2634 = vmatpush1.msra.mxu0 0.0
    %2635 = vmatprep.subr.mxu0 0.0
    %2636 = vmatpush1.msra.mxu0 0.0
    %2637 = vmatprep.subr.mxu0 0.0
    %2638 = vmatpush1.msra.mxu0 0.0
    %2639 = vmatprep.subr.mxu0 0.0
    %2640 = vmatpush1.msra.mxu0 0.0
    %2641 = vmatprep.subr.mxu0 0.0
    %2642 = vmatpush1.msra.mxu0 0.0
    %2643 = vmatprep.subr.mxu0 0.0
    %2644 = vmatpush1.msra.mxu0 0.0
    %2645 = vmatprep.subr.mxu0 0.0
    %2646 = vmatpush1.msra.mxu0 0.0
    %2647 = vmatprep.subr.mxu0 0.0
    %2648 = vmatpush1.msra.mxu0 0.0
    %2649 = vmatprep.subr.mxu0 0.0
    %2650 = vmatpush1.msra.mxu0 0.0
    %2651 = vmatprep.subr.mxu0 0.0
    %2652 = vmatpush1.msra.mxu0 0.0
    %2653 = vmatprep.subr.mxu0 0.0
    %2654 = vmatpush1.msra.mxu0 0.0
    %2655 = vmatprep.subr.mxu0 0.0
    %2656 = vmatpush1.msra.mxu0 %v154
    %2657 = vmatprep.subr.mxu0 0.0
    %2658 = vmatpush1.msra.mxu0 %v153
    %2659 = vmatprep.subr.mxu0 0.0
    %2660 = vmatpush1.msra.mxu0 %v152
    %2661 = vmatprep.subr.mxu0 0.0
    %2662 = vmatpush1.msra.mxu0 %v151
    %2663 = vmatprep.subr.mxu0 0.0
    %2664 = vmatpush2.msra.mxu0 0.0
    %2665 = vmatprep.subr.mxu0 0.0
    %2666 = vmatpush2.msra.mxu0 0.0
    %2667 = vmatprep.subr.mxu0 0.0
    %2668 = vmatpush2.msra.mxu0 0.0
    %2669 = vmatprep.subr.mxu0 0.0
    %2670 = vmatpush2.msra.mxu0 0.0
    %2671 = vmatprep.subr.mxu0 0.0
    %2672 = vmatpush2.msra.mxu0 0.0
    %2673 = vmatprep.subr.mxu0 0.0
    %2674 = vmatpush2.msra.mxu0 0.0
    %2675 = vmatprep.subr.mxu0 0.0
    %2676 = vmatpush2.msra.mxu0 0.0
    %2677 = vmatprep.subr.mxu0 0.0
    %2678 = vmatpush2.msra.mxu0 0.0
    %2679 = vmatprep.subr.mxu0 0.0
    %2680 = vmatpush2.msra.mxu0 0.0
    %2681 = vmatprep.subr.mxu0 0.0
    %2682 = vmatpush2.msra.mxu0 0.0
    %2683 = vmatprep.subr.mxu0 0.0
    %2684 = vmatpush2.msra.mxu0 0.0
    %2685 = vmatprep.subr.mxu0 0.0
    %2686 = vmatpush2.msra.mxu0 0.0
    %2687 = vmatprep.subr.mxu0 0.0
    %2688 = vmatpush2.msra.mxu0 0.0
    %2689 = vmatprep.subr.mxu0 0.0
    %2690 = vmatpush2.msra.mxu0 0.0
    %2691 = vmatprep.subr.mxu0 0.0
    %2692 = vmatpush2.msra.mxu0 0.0
    %2693 = vmatprep.subr.mxu0 0.0
    %2694 = vmatpush2.msra.mxu0 0.0
    %2695 = vmatprep.mubr.f32.mxu0 0.0
    %2696 = vmatmul.mubr.f32.gmra.mxu0 %v2626
    %v2697 = vpop.f32.mrf.mxu0
    %v2698 = vadd.f32 %v2623, %v2697
    %v2699 = vpop.f32.mrf.mxu0
    %2700 = vmatprep.mubr.f32.mxu0 0.0
    %2701 = vmatmul.mubr.f32.gmra.mxu0 %v2629
    %v2702 = vpop.f32.mrf.mxu0
    %v2703 = vadd.f32 %v2623, %v2702
    %v2704 = vpop.f32.mrf.mxu0
    %2705 = vdwg.mxu0
    %v2706 = vmax.f32 %v2698, 0.0
    %v2707 = vmax.f32 %v2703, 0.0
    %v2709 = vlaneseq
    %v2710 = vshrl.u32 %v2709, 7
    %v2711 = vsub.s32 0, %v2710
    %v2712 = vrot.slane %v164, %v2711
    %vm2714 = vcmask 523264
    %v2716 = vsel %vm2714, %v2706, 0
    %v2719 = vsel %vm2714, %v2707, 0
    %2721 = vmatprep.subr.mxu0 0.0
    %2722 = vmatpush1.msra.mxu0 0.0
    %2723 = vmatprep.subr.mxu0 0.0
    %2724 = vmatpush1.msra.mxu0 0.0
    %2725 = vmatprep.subr.mxu0 0.0
    %2726 = vmatpush1.msra.mxu0 0.0
    %2727 = vmatprep.subr.mxu0 0.0
    %2728 = vmatpush1.msra.mxu0 0.0
    %2729 = vmatprep.subr.mxu0 0.0
    %2730 = vmatpush1.msra.mxu0 0.0
    %2731 = vmatprep.subr.mxu0 0.0
    %2732 = vmatpush1.msra.mxu0 0.0
    %2733 = vmatprep.subr.mxu0 0.0
    %2734 = vmatpush1.msra.mxu0 0.0
    %2735 = vmatprep.subr.mxu0 0.0
    %2736 = vmatpush1.msra.mxu0 0.0
    %2737 = vmatprep.subr.mxu0 0.0
    %2738 = vmatpush1.msra.mxu0 %v163
    %2739 = vmatprep.subr.mxu0 0.0
    %2740 = vmatpush1.msra.mxu0 %v162
    %2741 = vmatprep.subr.mxu0 0.0
    %2742 = vmatpush1.msra.mxu0 %v161
    %2743 = vmatprep.subr.mxu0 0.0
    %2744 = vmatpush1.msra.mxu0 %v160
    %2745 = vmatprep.subr.mxu0 0.0
    %2746 = vmatpush1.msra.mxu0 %v159
    %2747 = vmatprep.subr.mxu0 0.0
    %2748 = vmatpush1.msra.mxu0 %v158
    %2749 = vmatprep.subr.mxu0 0.0
    %2750 = vmatpush1.msra.mxu0 %v157
    %2751 = vmatprep.subr.mxu0 0.0
    %2752 = vmatpush1.msra.mxu0 %v156
    %2753 = vmatprep.subr.mxu0 0.0
    %2754 = vmatpush2.msra.mxu0 0.0
    %2755 = vmatprep.subr.mxu0 0.0
    %2756 = vmatpush2.msra.mxu0 0.0
    %2757 = vmatprep.subr.mxu0 0.0
    %2758 = vmatpush2.msra.mxu0 0.0
    %2759 = vmatprep.subr.mxu0 0.0
    %2760 = vmatpush2.msra.mxu0 0.0
    %2761 = vmatprep.subr.mxu0 0.0
    %2762 = vmatpush2.msra.mxu0 0.0
    %2763 = vmatprep.subr.mxu0 0.0
    %2764 = vmatpush2.msra.mxu0 0.0
    %2765 = vmatprep.subr.mxu0 0.0
    %2766 = vmatpush2.msra.mxu0 0.0
    %2767 = vmatprep.subr.mxu0 0.0
    %2768 = vmatpush2.msra.mxu0 0.0
    %2769 = vmatprep.subr.mxu0 0.0
    %2770 = vmatpush2.msra.mxu0 0.0
    %2771 = vmatprep.subr.mxu0 0.0
    %2772 = vmatpush2.msra.mxu0 0.0
    %2773 = vmatprep.subr.mxu0 0.0
    %2774 = vmatpush2.msra.mxu0 0.0
    %2775 = vmatprep.subr.mxu0 0.0
    %2776 = vmatpush2.msra.mxu0 0.0
    %2777 = vmatprep.subr.mxu0 0.0
    %2778 = vmatpush2.msra.mxu0 0.0
    %2779 = vmatprep.subr.mxu0 0.0
    %2780 = vmatpush2.msra.mxu0 0.0
    %2781 = vmatprep.subr.mxu0 0.0
    %2782 = vmatpush2.msra.mxu0 0.0
    %2783 = vmatprep.subr.mxu0 0.0
    %2784 = vmatpush2.msra.mxu0 0.0
    %2785 = vmatprep.mubr.f32.mxu0 0.0
    %2786 = vmatmul.mubr.f32.gmra.mxu0 %v2716
    %v2787 = vpop.f32.mrf.mxu0
    %v2788 = vadd.f32 %v2712, %v2787
    %v2789 = vpop.f32.mrf.mxu0
    %2790 = vmatprep.mubr.f32.mxu0 0.0
    %2791 = vmatmul.mubr.f32.gmra.mxu0 %v2719
    %v2792 = vpop.f32.mrf.mxu0
    %v2793 = vadd.f32 %v2712, %v2792
    %v2794 = vpop.f32.mrf.mxu0
    %2795 = vdwg.mxu0
    %v2796 = vadd.f32 %v2788, %v2617
    %v2797 = vadd.f32 %v2793, %v2618
    %v2798 = vsel %vm179, %v2796, 0.0
    %2799 = vadd.xlane.f32.xlu0 %v2798
    %v2800 = vpop.xlane.xlu0 %2799
    %v2801 = vsel %vm179, %v2797, 0.0
    %2802 = vadd.xlane.f32.xlu0 %v2801
    %v2803 = vpop.xlane.xlu0 %2802
    %v2804 = vmul.f32 %v2800, %v2582
    %v2805 = vmul.f32 %v2803, %v2582
    %v2806 = vsub.f32 %v2796, %v2804
    %v2807 = vsub.f32 %v2797, %v2805
    %v2808 = vmul.f32 %v2806, %v2806
    %v2809 = vmul.f32 %v2807, %v2807
    %v2810 = vsel %vm179, %v2808, 0.0
    %2811 = vadd.xlane.f32.xlu0 %v2810
    %v2812 = vpop.xlane.xlu0 %2811
    %v2813 = vsel %vm179, %v2809, 0.0
    %2814 = vadd.xlane.f32.xlu0 %v2813
    %v2815 = vpop.xlane.xlu0 %2814
    %v2816 = vmul.f32 %v2812, %v2582
    %v2817 = vmul.f32 %v2815, %v2582
    %v2818 = vadd.f32 %v2816, 1e-05
    %v2819 = vadd.f32 %v2817, 1e-05
    %v2820 = vrsqrt.pop %v2818
    %v2821 = vrsqrt.pop %v2819
    %v2822 = vmul.f32 %v2806, %v2820
    %v2823 = vmul.f32 %v2807, %v2821
    %v2825 = vlaneseq
    %v2826 = vshrl.u32 %v2825, 7
    %v2827 = vsub.s32 0, %v2826
    %v2828 = vrot.slane %v165, %v2827
    %v2830 = vmul.f32 %v2822, %v2828
    %v2831 = vmul.f32 %v2823, %v2828
    %v2833 = vlaneseq
    %v2834 = vshrl.u32 %v2833, 7
    %v2835 = vsub.s32 0, %v2834
    %v2836 = vrot.slane %v166, %v2835
    %v2838 = vadd.f32 %v2830, %v2836
    %v2839 = vadd.f32 %v2831, %v2836
    %2840 = vst.msk [vmem:[#allocation11] sm:$0xff] %vm179, %v2838
    %2841 = vst.msk [vmem:[#allocation11 + $0x8] sm:$0xff] %vm179, %v2839
    // Predicated region
    $region98: #{tpu_custom_call.1} parent=1 // pred_check
      _
    $region99: #{tpu_custom_call.1} parent=1 // pred_check_branch
      %2843 = sbr.rel (0) target = $region101
    $region100: #{tpu_custom_call.1} parent=1 // pred_region
      %s2845 = ssub.s32 256, 256
      %2846 = vsyncadd [#allocation4], %s2845
      %s2847 = sshll.u32 [#allocation11], 4
      %s2848 = int_to_ptr.vmem [resolvable:$true] %s2847
      %2853 = dma.vmem_to_hbm [thread:$0]  %s2848, 256, %s19, [#allocation4], 128, 128, 8
    $region101: #{tpu_custom_call.1} parent=1 // pred_fallthru
      _
    // Predicated region
    $region102: #{tpu_custom_call.1} parent=1 // pred_check
      _
    $region103: #{tpu_custom_call.1} parent=1 // pred_check_branch
      %2855 = sbr.rel (0) target = $region105
    $region104: #{tpu_custom_call.1} parent=1 // pred_region
      %2856 = dma.done [#allocation4], 256
    $region105: #{tpu_custom_call.1} parent=1 // pred_fallthru
      _
    %2857 = vsyncpa [#allocation3], 1
    %2858 = vsyncpa [#allocation6], 1
    %2859 = vsyncpa [#allocation9], 1
    %2860 = vsyncpa [#allocation4], 1

</llo_original>
